<compile_context>
chip_gen: v7x
topology: tpu7x:2x2x1
jax: 0.10.0
libtpu: 0.0.40
codegen_flags: <defaults>
</compile_context>

<pallas_src>
import functools

import jax
import jax.numpy as jnp
from jax.experimental import pallas as pl
from jax.experimental.pallas import tpu as pltpu


def _round_up(x, m):
    return (x + m - 1) // m * m


# ---------------------------------------------------------------------------
# Fused Pallas kernel: conv1+bn1+relu -> conv2+bn2 -> (+ 1x1 residual+bn) -> relu
# ---------------------------------------------------------------------------

def _building_block_kernel(x_ref, w1r_ref, w2_ref, aff_ref, mask_ref, o_ref, y1_ref,
                           *, B, H, W, Mi, HALO):
    """One grid step processes B images stacked along the row dimension.

    x_ref   : (CH, Cin)      bf16  per-step slab: HALO zero rows, then B chunks of Mi rows
                                   (Mp padded-grid rows + zero tail), then HALO zero rows.
    w1r_ref : (9*Cin, 2*Cp)  bf16  conv1 taps stacked on rows; cols [Cp,2Cp) hold the 1x1
                                   residual projection on the centre-tap rows only.
    w2_ref  : (9*Cp, Cp)     bf16  conv2 taps stacked on rows.
    aff_ref : (8, Cp)        f32   rows: s1, b1, s2, b2, sr, br, 0, 0 (conv bias + BN folded).
    mask_ref: (Lb, 1)        f32   1.0 on interior padded-grid rows, 0.0 on borders/gaps.
    o_ref   : (B*H*W, Cp)    bf16  interior-only output rows (lane-dense).
    y1_ref  : (CH, Cp)       bf16  VMEM scratch: conv1 output, never written to HBM.
    """
    Wp = W + 2
    Lb = B * Mi
    Cp = o_ref.shape[-1]

    @pl.when(pl.program_id(0) == 0)
    def _init():
        # Halo rows of the scratch are only ever read for discarded rows, but zero the
        # scratch once anyway (it persists across grid steps).
        y1_ref[...] = jnp.zeros_like(y1_ref)

    # ---- conv1 (3x3, s1, p1) + folded 1x1 residual: ONE dot over concatenated taps ----
    taps = []
    for t in range(9):
        kh, kw = divmod(t, 3)
        start = HALO + (kh - 1) * Wp + (kw - 1)
        taps.append(x_ref[start:start + Lb, :])
    patch1 = jnp.concatenate(taps, axis=-1)                       # (Lb, 9*Cin) bf16
    out1 = jnp.dot(patch1, w1r_ref[...],
                   preferred_element_type=jnp.float32)            # (Lb, 2*Cp) f32

    mask = mask_ref[...]                                          # (Lb, 1)
    y1 = jnp.maximum(out1[:, :Cp] * aff_ref[0:1, :] + aff_ref[1:2, :], 0.0) * mask
    res = out1[:, Cp:] * aff_ref[4:5, :] + aff_ref[5:6, :]        # kept live, added after conv2

    # Stage y1 in VMEM only; border/gap rows are already zero via `mask`.
    y1_ref[HALO:HALO + Lb, :] = y1.astype(jnp.bfloat16)

    # ---- conv2 (3x3, s1, p1): one dot over concatenated taps of the resident y1 ----
    taps2 = []
    for t in range(9):
        kh, kw = divmod(t, 3)
        start = HALO + (kh - 1) * Wp + (kw - 1)
        taps2.append(y1_ref[start:start + Lb, :])
    patch2 = jnp.concatenate(taps2, axis=-1)                      # (Lb, 9*Cp) bf16
    y2 = jnp.dot(patch2, w2_ref[...],
                 preferred_element_type=jnp.float32)              # (Lb, Cp) f32

    final = jnp.maximum(y2 * aff_ref[2:3, :] + aff_ref[3:4, :] + res, 0.0)
    final = final.astype(o_ref.dtype)                             # bf16

    # ---- interior-only, lane-dense stores (border/gap rows never leave VMEM) ----
    for b in range(B):
        for h in range(H):
            src = b * Mi + (h + 1) * Wp + 1
            dst = (b * H + h) * W
            o_ref[dst:dst + W, :] = final[src:src + W, :]


# ---------------------------------------------------------------------------
# Parameter packing helpers (BN folding, weight layout, lane padding)
# ---------------------------------------------------------------------------

def _fold_bn(conv_bias, gamma, beta, mean, var, eps=1e-5):
    """Fold conv bias + BatchNorm(eval, running stats) into per-channel (scale, shift)."""
    scale = gamma / jnp.sqrt(var + eps)
    shift = (conv_bias - mean) * scale + beta
    return scale, shift


def _pack_conv1_residual(w1_oihw, wr_oihw, Cp):
    """conv1 (Cout,Cin,3,3) + residual (Cout,Cin,1,1) -> (9*Cin, 2*Cp) bf16.

    Rows [t*Cin,(t+1)*Cin) hold tap t = kh*3+kw; cols [0,Cp) = conv1, cols [Cp,2Cp) hold
    the 1x1 projection on the centre-tap rows only (zeros elsewhere)."""
    cout, cin = w1_oihw.shape[0], w1_oihw.shape[1]
    w1 = jnp.transpose(w1_oihw, (2, 3, 1, 0)).reshape(9 * cin, cout)
    w1 = jnp.pad(w1, ((0, 0), (0, Cp - cout)))
    wr = jnp.transpose(wr_oihw.reshape(cout, cin), (1, 0))
    wr = jnp.pad(wr, ((0, 0), (0, Cp - cout)))
    wr_full = jnp.zeros((9 * cin, Cp), w1.dtype).at[4 * cin:5 * cin, :].set(wr)
    return jnp.concatenate([w1, wr_full], axis=-1).astype(jnp.bfloat16)


def _pack_conv2(w_oihw, Cp):
    """conv2 (Cout,Cin,3,3) -> (9*Cp, Cp) bf16, taps stacked on rows, channels padded."""
    cout, cin = w_oihw.shape[0], w_oihw.shape[1]
    w = jnp.transpose(w_oihw, (2, 3, 1, 0))                       # (3,3,cin,cout)
    w = jnp.pad(w, ((0, 0), (0, 0), (0, Cp - cin), (0, Cp - cout)))
    return w.reshape(9 * Cp, Cp).astype(jnp.bfloat16)


def _pick_images_per_step(N, Mi, Cp, Cin):
    """Largest divisor of N keeping >= 2 grid steps (megacore) and a modest VMEM footprint."""
    if N <= 1:
        return 1
    # Rough per-image VMEM bytes (conv2 patch dominates) — keep well under v7x's 64 MiB/TC.
    per_img = Mi * (9 * Cp * 2 + 4 * Cp * 4 + 2 * Cp * 2 + 9 * Cin * 2)
    cap = max(1, min(8, N // 2, (12 * 1024 * 1024) // max(per_img, 1)))
    for d in range(min(cap, N), 0, -1):
        if N % d == 0:
            return d
    return 1


# ---------------------------------------------------------------------------
# Forward pass
# ---------------------------------------------------------------------------

def building_block_forward(x_nchw, params, images_per_step=None):
    """Forward of BuildingBlock (downsample=False).  Input/output NCHW float32."""
    N, Cin, H, W = x_nchw.shape
    Cout = params["conv1_w"].shape[0]
    Hp, Wp = H + 2, W + 2
    Mp = Hp * Wp
    HALO = _round_up(Wp + 1, 16)       # >= max |tap shift|; keeps y1 store sublane-aligned
    Mi = _round_up(Mp, 16)             # per-image row stride inside a step slab
    Cp = _round_up(Cout, 128)          # lane-dense output channels

    B = images_per_step or _pick_images_per_step(N, Mi, Cp, Cin)
    assert N % B == 0, (N, B)
    n_steps = N // B
    Lb = B * Mi
    CH = Lb + 2 * HALO                 # per-step rows incl. halo (multiple of 8)

    # bf16 FIRST (halves every wrapper pass); NHWC; spatial zero pad; per-image stride
    # padding; per-step halo rows.
    x = jnp.transpose(x_nchw.astype(jnp.bfloat16), (0, 2, 3, 1))
    x = jnp.pad(x, ((0, 0), (1, 1), (1, 1), (0, 0))).reshape(N, Mp, Cin)
    x = jnp.pad(x, ((0, 0), (0, Mi - Mp), (0, 0))).reshape(n_steps, Lb, Cin)
    x_flat = jnp.pad(x, ((0, 0), (HALO, HALO), (0, 0))).reshape(n_steps * CH, Cin)

    # Weights and folded BN affine, zero-padded to Cp lanes.
    w1r = _pack_conv1_residual(params["conv1_w"], params["res_w"], Cp)
    w2 = _pack_conv2(params["conv2_w"], Cp)
    s1, b1 = _fold_bn(params["conv1_b"], *params["bn1"])
    s2, b2 = _fold_bn(params["conv2_b"], *params["bn2"])
    sr, br = _fold_bn(params["res_b"], *params["res_bn"])
    aff = jnp.zeros((8, Cp), jnp.float32)
    aff = aff.at[0, :Cout].set(s1).at[1, :Cout].set(b1)
    aff = aff.at[2, :Cout].set(s2).at[3, :Cout].set(b2)
    aff = aff.at[4, :Cout].set(sr).at[5, :Cout].set(br)

    # Interior mask over the stacked per-image slabs (0 on padded-grid borders and gaps).
    p = jnp.arange(Lb)
    r = p % Mi
    hh, ww = r // Wp, r % Wp
    mask = ((r < Mp) & (hh >= 1) & (hh <= H) & (ww >= 1) & (ww <= W))
    mask = mask.astype(jnp.float32)[:, None]

    kernel = functools.partial(_building_block_kernel, B=B, H=H, W=W, Mi=Mi, HALO=HALO)

    out_flat = pl.pallas_call(
        kernel,
        out_shape=jax.ShapeDtypeStruct((N * H * W, Cp), jnp.bfloat16),
        grid_spec=pltpu.PrefetchScalarGridSpec(
            num_scalar_prefetch=0,
            grid=(n_steps,),
            in_specs=[
                pl.BlockSpec((CH, Cin), lambda g: (g, 0)),
                pl.BlockSpec((9 * Cin, 2 * Cp), lambda g: (0, 0)),
                pl.BlockSpec((9 * Cp, Cp), lambda g: (0, 0)),
                pl.BlockSpec((8, Cp), lambda g: (0, 0)),
                pl.BlockSpec((Lb, 1), lambda g: (0, 0)),
            ],
            out_specs=pl.BlockSpec((B * H * W, Cp), lambda g: (g, 0)),
            scratch_shapes=[pltpu.VMEM((CH, Cp), jnp.bfloat16)],
        ),
        compiler_params=pltpu.CompilerParams(
            dimension_semantics=("parallel",),
            vmem_limit_bytes=32 * 1024 * 1024),
    )(x_flat, w1r, w2, aff, mask)

    out = out_flat.reshape(N, H, W, Cp)[..., :Cout].astype(jnp.float32)
    return jnp.transpose(out, (0, 3, 1, 2))


# ---------------------------------------------------------------------------
# Synthetic parameters (deterministic) matching BuildingBlock(__init__, downsample=False)
# ---------------------------------------------------------------------------

def init_building_block_params(key, in_channels, out_channels):
    ks = jax.random.split(key, 8)

    def bn_params(k, c):
        k1, k2, k3 = jax.random.split(k, 3)
        gamma = 1.0 + 0.1 * jax.random.normal(k1, (c,), jnp.float32)
        beta = 0.1 * jax.random.normal(k2, (c,), jnp.float32)
        mean = 0.05 * jax.random.normal(k3, (c,), jnp.float32)
        var = jnp.ones((c,), jnp.float32) * 1.2
        return gamma, beta, mean, var

    p = {}
    p["conv1_w"] = 0.1 * jax.random.normal(ks[0], (out_channels, in_channels, 3, 3), jnp.float32)
    p["conv1_b"] = 0.05 * jax.random.normal(ks[1], (out_channels,), jnp.float32)
    p["bn1"] = bn_params(ks[2], out_channels)

    p["conv2_w"] = 0.1 * jax.random.normal(ks[3], (out_channels, out_channels, 3, 3), jnp.float32)
    p["conv2_b"] = 0.05 * jax.random.normal(ks[4], (out_channels,), jnp.float32)
    p["bn2"] = bn_params(ks[5], out_channels)

    p["res_w"] = 0.1 * jax.random.normal(ks[6], (out_channels, in_channels, 1, 1), jnp.float32)
    p["res_b"] = 0.05 * jax.random.normal(ks[7], (out_channels,), jnp.float32)
    p["res_bn"] = bn_params(jax.random.fold_in(key, 99), out_channels)
    return p


# ---------------------------------------------------------------------------
# Pure-JAX f32 reference (for the correctness self-check)
# ---------------------------------------------------------------------------

def _reference_forward(x_nchw, params):
    def conv(x_nhwc, w_oihw, b, stride=1, pad=0):
        w_hwio = jnp.transpose(w_oihw, (2, 3, 1, 0))
        y = jax.lax.conv_general_dilated(
            x_nhwc, w_hwio, (stride, stride), [(pad, pad), (pad, pad)],
            dimension_numbers=("NHWC", "HWIO", "NHWC"))
        return y + b

    def bn(x, g, bt, m, v, eps=1e-5):
        return (x - m) / jnp.sqrt(v + eps) * g + bt

    x = jnp.transpose(x_nchw, (0, 2, 3, 1)).astype(jnp.float32)
    y = jax.nn.relu(bn(conv(x, params["conv1_w"], params["conv1_b"], 1, 1), *params["bn1"]))
    y = bn(conv(y, params["conv2_w"], params["conv2_b"], 1, 1), *params["bn2"])
    r = bn(conv(x, params["res_w"], params["res_b"], 1, 0), *params["res_bn"])
    out = jax.nn.relu(y + r)
    return jnp.transpose(out, (0, 3, 1, 2))


if __name__ == "__main__":
    key = jax.random.PRNGKey(0)
    k_x, k_p = jax.random.split(key)

    N, Cin, H, W = 2, 4, 16, 16
    Cout = 8
    x = jax.random.normal(k_x, (N, Cin, H, W), jnp.float32)
    params = init_building_block_params(k_p, Cin, Cout)

    fwd = jax.jit(building_block_forward)
    out = jax.block_until_ready(fwd(x, params))
    ref = jax.block_until_ready(_reference_forward(x, params))

    assert out.shape == (N, Cout, H, W), out.shape
    # bf16 MXU operands / intermediates / output (f32 accumulation) vs pure-f32 reference.
    err = float(jnp.max(jnp.abs(out - ref)))
    assert jnp.allclose(out, ref, atol=5e-2, rtol=5e-2), err

    print("KERNEL_OK")
</pallas_src>

<mosaic_0001>
module attributes {stable_mosaic.version = 11 : i64} {
  func.func @_building_block_kernel(%arg0: i32, %arg1: memref<400x4xbf16, #tpu.memory_space<vmem>>, %arg2: memref<36x256xbf16, #tpu.memory_space<vmem>>, %arg3: memref<1152x128xbf16, #tpu.memory_space<vmem>>, %arg4: memref<8x128xf32, #tpu.memory_space<vmem>>, %arg5: memref<336x1xf32, #tpu.memory_space<vmem>>, %arg6: memref<256x128xbf16, #tpu.memory_space<vmem>>, %arg7: memref<400x128xbf16, #tpu.memory_space<vmem>>) attributes {dimension_semantics = [#tpu.dimension_semantics<parallel>], iteration_bounds = array<i64: 2>, scalar_prefetch = 0 : i64, scratch_operands = 1 : i64, tpu.core_type = #tpu.core_type<tc>, window_params = [{transform_indices = @transform_0, window_bounds = array<i64: 400, 4>}, {pipeline_mode = #tpu.pipeline_mode<synchronous>, transform_indices = @transform_1, window_bounds = array<i64: 36, 256>}, {pipeline_mode = #tpu.pipeline_mode<synchronous>, transform_indices = @transform_2, window_bounds = array<i64: 1152, 128>}, {pipeline_mode = #tpu.pipeline_mode<synchronous>, transform_indices = @transform_3, window_bounds = array<i64: 8, 128>}, {pipeline_mode = #tpu.pipeline_mode<synchronous>, transform_indices = @transform_4, window_bounds = array<i64: 336, 1>}, {transform_indices = @transform_5, window_bounds = array<i64: 256, 128>}]} {
    %c0_i32 = arith.constant 0 : i32
    %0 = arith.cmpi eq, %arg0, %c0_i32 : i32
    %1 = arith.extui %0 : i1 to i32
    %c0_i32_0 = arith.constant 0 : i32
    %2 = arith.cmpi ne, %1, %c0_i32_0 : i32
    scf.if %2 {
      %cst_63 = arith.constant 0.000000e+00 : bf16
      %90 = vector.broadcast %cst_63 : bf16 to vector<400x128xbf16>
      %c0_64 = arith.constant 0 : index
      %c0_65 = arith.constant 0 : index
      %91 = vector.load %arg7[%c0_64, %c0_65] : memref<400x128xbf16, #tpu.memory_space<vmem>>, vector<400x128xbf16>
      tpu.vector_store %arg7[%c0_64, %c0_65], %90 {strides = array<i32>} : memref<400x128xbf16, #tpu.memory_space<vmem>>, vector<400x128xbf16>,
    } else {
    }
    %c13 = arith.constant 13 : index
    %c0 = arith.constant 0 : index
    %3 = vector.load %arg1[%c13, %c0] : memref<400x4xbf16, #tpu.memory_space<vmem>>, vector<336x4xbf16>
    %c14 = arith.constant 14 : index
    %c0_1 = arith.constant 0 : index
    %4 = vector.load %arg1[%c14, %c0_1] : memref<400x4xbf16, #tpu.memory_space<vmem>>, vector<336x4xbf16>
    %c15 = arith.constant 15 : index
    %c0_2 = arith.constant 0 : index
    %5 = vector.load %arg1[%c15, %c0_2] : memref<400x4xbf16, #tpu.memory_space<vmem>>, vector<336x4xbf16>
    %c31 = arith.constant 31 : index
    %c0_3 = arith.constant 0 : index
    %6 = vector.load %arg1[%c31, %c0_3] : memref<400x4xbf16, #tpu.memory_space<vmem>>, vector<336x4xbf16>
    %c32 = arith.constant 32 : index
    %c0_4 = arith.constant 0 : index
    %7 = vector.load %arg1[%c32, %c0_4] : memref<400x4xbf16, #tpu.memory_space<vmem>>, vector<336x4xbf16>
    %c33 = arith.constant 33 : index
    %c0_5 = arith.constant 0 : index
    %8 = vector.load %arg1[%c33, %c0_5] : memref<400x4xbf16, #tpu.memory_space<vmem>>, vector<336x4xbf16>
    %c49 = arith.constant 49 : index
    %c0_6 = arith.constant 0 : index
    %9 = vector.load %arg1[%c49, %c0_6] : memref<400x4xbf16, #tpu.memory_space<vmem>>, vector<336x4xbf16>
    %c50 = arith.constant 50 : index
    %c0_7 = arith.constant 0 : index
    %10 = vector.load %arg1[%c50, %c0_7] : memref<400x4xbf16, #tpu.memory_space<vmem>>, vector<336x4xbf16>
    %c51 = arith.constant 51 : index
    %c0_8 = arith.constant 0 : index
    %11 = vector.load %arg1[%c51, %c0_8] : memref<400x4xbf16, #tpu.memory_space<vmem>>, vector<336x4xbf16>
    %12 = tpu.concatenate %3, %4, %5, %6, %7, %8, %9, %10, %11 in 1 : vector<336x4xbf16>, vector<336x4xbf16>, vector<336x4xbf16>, vector<336x4xbf16>, vector<336x4xbf16>, vector<336x4xbf16>, vector<336x4xbf16>, vector<336x4xbf16>, vector<336x4xbf16> -> vector<336x36xbf16>
    %c0_9 = arith.constant 0 : index
    %c0_10 = arith.constant 0 : index
    %13 = vector.load %arg2[%c0_9, %c0_10] : memref<36x256xbf16, #tpu.memory_space<vmem>>, vector<36x256xbf16>
    %cst = arith.constant dense<0.000000e+00> : vector<336x256xf32>
    %14 = tpu.matmul %12, %13, %cst {dimension_numbers = #tpu.dot_dimension_numbers<[1], [0], [0], [1], [0, 0, 1, 1], [], []>} : vector<336x36xbf16>, vector<36x256xbf16>, vector<336x256xf32> -> vector<336x256xf32>
    %c0_11 = arith.constant 0 : index
    %c0_12 = arith.constant 0 : index
    %15 = vector.load %arg5[%c0_11, %c0_12] : memref<336x1xf32, #tpu.memory_space<vmem>>, vector<336x1xf32>
    %16 = vector.extract_strided_slice %14 {offsets = [0, 0], sizes = [336, 128], strides = [1, 1]} : vector<336x256xf32> to vector<336x128xf32>
    %c0_13 = arith.constant 0 : index
    %c0_14 = arith.constant 0 : index
    %17 = vector.load %arg4[%c0_13, %c0_14] : memref<8x128xf32, #tpu.memory_space<vmem>>, vector<1x128xf32>
    %18 = vector.broadcast %17 : vector<1x128xf32> to vector<336x128xf32>
    %19 = arith.mulf %16, %18 : vector<336x128xf32>
    %c1 = arith.constant 1 : index
    %c0_15 = arith.constant 0 : index
    %20 = vector.load %arg4[%c1, %c0_15] : memref<8x128xf32, #tpu.memory_space<vmem>>, vector<1x128xf32>
    %21 = vector.broadcast %20 : vector<1x128xf32> to vector<336x128xf32>
    %22 = arith.addf %19, %21 : vector<336x128xf32>
    %cst_16 = arith.constant 0.000000e+00 : f32
    %23 = vector.broadcast %cst_16 : f32 to vector<336x128xf32>
    %24 = arith.maximumf %22, %23 : vector<336x128xf32>
    %25 = vector.broadcast %15 : vector<336x1xf32> to vector<336x128xf32>
    %26 = arith.mulf %24, %25 : vector<336x128xf32>
    %27 = vector.extract_strided_slice %14 {offsets = [0, 128], sizes = [336, 128], strides = [1, 1]} : vector<336x256xf32> to vector<336x128xf32>
    %c4 = arith.constant 4 : index
    %c0_17 = arith.constant 0 : index
    %28 = vector.load %arg4[%c4, %c0_17] : memref<8x128xf32, #tpu.memory_space<vmem>>, vector<1x128xf32>
    %29 = vector.broadcast %28 : vector<1x128xf32> to vector<336x128xf32>
    %30 = arith.mulf %27, %29 : vector<336x128xf32>
    %c5 = arith.constant 5 : index
    %c0_18 = arith.constant 0 : index
    %31 = vector.load %arg4[%c5, %c0_18] : memref<8x128xf32, #tpu.memory_space<vmem>>, vector<1x128xf32>
    %32 = vector.broadcast %31 : vector<1x128xf32> to vector<336x128xf32>
    %33 = arith.addf %30, %32 : vector<336x128xf32>
    %34 = arith.truncf %26 : vector<336x128xf32> to vector<336x128xbf16>
    %c32_19 = arith.constant 32 : index
    %c0_20 = arith.constant 0 : index
    %35 = vector.load %arg7[%c32_19, %c0_20] : memref<400x128xbf16, #tpu.memory_space<vmem>>, vector<336x128xbf16>
    tpu.vector_store %arg7[%c32_19, %c0_20], %34 {strides = array<i32>} : memref<400x128xbf16, #tpu.memory_space<vmem>>, vector<336x128xbf16>,
    %c13_21 = arith.constant 13 : index
    %c0_22 = arith.constant 0 : index
    %36 = vector.load %arg7[%c13_21, %c0_22] : memref<400x128xbf16, #tpu.memory_space<vmem>>, vector<336x128xbf16>
    %c14_23 = arith.constant 14 : index
    %c0_24 = arith.constant 0 : index
    %37 = vector.load %arg7[%c14_23, %c0_24] : memref<400x128xbf16, #tpu.memory_space<vmem>>, vector<336x128xbf16>
    %c15_25 = arith.constant 15 : index
    %c0_26 = arith.constant 0 : index
    %38 = vector.load %arg7[%c15_25, %c0_26] : memref<400x128xbf16, #tpu.memory_space<vmem>>, vector<336x128xbf16>
    %c31_27 = arith.constant 31 : index
    %c0_28 = arith.constant 0 : index
    %39 = vector.load %arg7[%c31_27, %c0_28] : memref<400x128xbf16, #tpu.memory_space<vmem>>, vector<336x128xbf16>
    %c32_29 = arith.constant 32 : index
    %c0_30 = arith.constant 0 : index
    %40 = vector.load %arg7[%c32_29, %c0_30] : memref<400x128xbf16, #tpu.memory_space<vmem>>, vector<336x128xbf16>
    %c33_31 = arith.constant 33 : index
    %c0_32 = arith.constant 0 : index
    %41 = vector.load %arg7[%c33_31, %c0_32] : memref<400x128xbf16, #tpu.memory_space<vmem>>, vector<336x128xbf16>
    %c49_33 = arith.constant 49 : index
    %c0_34 = arith.constant 0 : index
    %42 = vector.load %arg7[%c49_33, %c0_34] : memref<400x128xbf16, #tpu.memory_space<vmem>>, vector<336x128xbf16>
    %c50_35 = arith.constant 50 : index
    %c0_36 = arith.constant 0 : index
    %43 = vector.load %arg7[%c50_35, %c0_36] : memref<400x128xbf16, #tpu.memory_space<vmem>>, vector<336x128xbf16>
    %c51_37 = arith.constant 51 : index
    %c0_38 = arith.constant 0 : index
    %44 = vector.load %arg7[%c51_37, %c0_38] : memref<400x128xbf16, #tpu.memory_space<vmem>>, vector<336x128xbf16>
    %45 = tpu.concatenate %36, %37, %38, %39, %40, %41, %42, %43, %44 in 1 : vector<336x128xbf16>, vector<336x128xbf16>, vector<336x128xbf16>, vector<336x128xbf16>, vector<336x128xbf16>, vector<336x128xbf16>, vector<336x128xbf16>, vector<336x128xbf16>, vector<336x128xbf16> -> vector<336x1152xbf16>
    %c0_39 = arith.constant 0 : index
    %c0_40 = arith.constant 0 : index
    %46 = vector.load %arg3[%c0_39, %c0_40] : memref<1152x128xbf16, #tpu.memory_space<vmem>>, vector<1152x128xbf16>
    %cst_41 = arith.constant dense<0.000000e+00> : vector<336x128xf32>
    %47 = tpu.matmul %45, %46, %cst_41 {dimension_numbers = #tpu.dot_dimension_numbers<[1], [0], [0], [1], [0, 0, 1, 1], [], []>} : vector<336x1152xbf16>, vector<1152x128xbf16>, vector<336x128xf32> -> vector<336x128xf32>
    %c2 = arith.constant 2 : index
    %c0_42 = arith.constant 0 : index
    %48 = vector.load %arg4[%c2, %c0_42] : memref<8x128xf32, #tpu.memory_space<vmem>>, vector<1x128xf32>
    %49 = vector.broadcast %48 : vector<1x128xf32> to vector<336x128xf32>
    %50 = arith.mulf %47, %49 : vector<336x128xf32>
    %c3 = arith.constant 3 : index
    %c0_43 = arith.constant 0 : index
    %51 = vector.load %arg4[%c3, %c0_43] : memref<8x128xf32, #tpu.memory_space<vmem>>, vector<1x128xf32>
    %52 = vector.broadcast %51 : vector<1x128xf32> to vector<336x128xf32>
    %53 = arith.addf %50, %52 : vector<336x128xf32>
    %54 = arith.addf %53, %33 : vector<336x128xf32>
    %cst_44 = arith.constant 0.000000e+00 : f32
    %55 = vector.broadcast %cst_44 : f32 to vector<336x128xf32>
    %56 = arith.maximumf %54, %55 : vector<336x128xf32>
    %57 = arith.truncf %56 : vector<336x128xf32> to vector<336x128xbf16>
    %58 = vector.extract_strided_slice %57 {offsets = [19, 0], sizes = [16, 128], strides = [1, 1]} : vector<336x128xbf16> to vector<16x128xbf16>
    %c0_45 = arith.constant 0 : index
    %c0_46 = arith.constant 0 : index
    %59 = vector.load %arg6[%c0_45, %c0_46] : memref<256x128xbf16, #tpu.memory_space<vmem>>, vector<16x128xbf16>
    tpu.vector_store %arg6[%c0_45, %c0_46], %58 {strides = array<i32>} : memref<256x128xbf16, #tpu.memory_space<vmem>>, vector<16x128xbf16>,
    %60 = vector.extract_strided_slice %57 {offsets = [37, 0], sizes = [16, 128], strides = [1, 1]} : vector<336x128xbf16> to vector<16x128xbf16>
    %c16 = arith.constant 16 : index
    %c0_47 = arith.constant 0 : index
    %61 = vector.load %arg6[%c16, %c0_47] : memref<256x128xbf16, #tpu.memory_space<vmem>>, vector<16x128xbf16>
    tpu.vector_store %arg6[%c16, %c0_47], %60 {strides = array<i32>} : memref<256x128xbf16, #tpu.memory_space<vmem>>, vector<16x128xbf16>,
    %62 = vector.extract_strided_slice %57 {offsets = [55, 0], sizes = [16, 128], strides = [1, 1]} : vector<336x128xbf16> to vector<16x128xbf16>
    %c32_48 = arith.constant 32 : index
    %c0_49 = arith.constant 0 : index
    %63 = vector.load %arg6[%c32_48, %c0_49] : memref<256x128xbf16, #tpu.memory_space<vmem>>, vector<16x128xbf16>
    tpu.vector_store %arg6[%c32_48, %c0_49], %62 {strides = array<i32>} : memref<256x128xbf16, #tpu.memory_space<vmem>>, vector<16x128xbf16>,
    %64 = vector.extract_strided_slice %57 {offsets = [73, 0], sizes = [16, 128], strides = [1, 1]} : vector<336x128xbf16> to vector<16x128xbf16>
    %c48 = arith.constant 48 : index
    %c0_50 = arith.constant 0 : index
    %65 = vector.load %arg6[%c48, %c0_50] : memref<256x128xbf16, #tpu.memory_space<vmem>>, vector<16x128xbf16>
    tpu.vector_store %arg6[%c48, %c0_50], %64 {strides = array<i32>} : memref<256x128xbf16, #tpu.memory_space<vmem>>, vector<16x128xbf16>,
    %66 = vector.extract_strided_slice %57 {offsets = [91, 0], sizes = [16, 128], strides = [1, 1]} : vector<336x128xbf16> to vector<16x128xbf16>
    %c64 = arith.constant 64 : index
    %c0_51 = arith.constant 0 : index
    %67 = vector.load %arg6[%c64, %c0_51] : memref<256x128xbf16, #tpu.memory_space<vmem>>, vector<16x128xbf16>
    tpu.vector_store %arg6[%c64, %c0_51], %66 {strides = array<i32>} : memref<256x128xbf16, #tpu.memory_space<vmem>>, vector<16x128xbf16>,
    %68 = vector.extract_strided_slice %57 {offsets = [109, 0], sizes = [16, 128], strides = [1, 1]} : vector<336x128xbf16> to vector<16x128xbf16>
    %c80 = arith.constant 80 : index
    %c0_52 = arith.constant 0 : index
    %69 = vector.load %arg6[%c80, %c0_52] : memref<256x128xbf16, #tpu.memory_space<vmem>>, vector<16x128xbf16>
    tpu.vector_store %arg6[%c80, %c0_52], %68 {strides = array<i32>} : memref<256x128xbf16, #tpu.memory_space<vmem>>, vector<16x128xbf16>,
    %70 = vector.extract_strided_slice %57 {offsets = [127, 0], sizes = [16, 128], strides = [1, 1]} : vector<336x128xbf16> to vector<16x128xbf16>
    %c96 = arith.constant 96 : index
    %c0_53 = arith.constant 0 : index
    %71 = vector.load %arg6[%c96, %c0_53] : memref<256x128xbf16, #tpu.memory_space<vmem>>, vector<16x128xbf16>
    tpu.vector_store %arg6[%c96, %c0_53], %70 {strides = array<i32>} : memref<256x128xbf16, #tpu.memory_space<vmem>>, vector<16x128xbf16>,
    %72 = vector.extract_strided_slice %57 {offsets = [145, 0], sizes = [16, 128], strides = [1, 1]} : vector<336x128xbf16> to vector<16x128xbf16>
    %c112 = arith.constant 112 : index
    %c0_54 = arith.constant 0 : index
    %73 = vector.load %arg6[%c112, %c0_54] : memref<256x128xbf16, #tpu.memory_space<vmem>>, vector<16x128xbf16>
    tpu.vector_store %arg6[%c112, %c0_54], %72 {strides = array<i32>} : memref<256x128xbf16, #tpu.memory_space<vmem>>, vector<16x128xbf16>,
    %74 = vector.extract_strided_slice %57 {offsets = [163, 0], sizes = [16, 128], strides = [1, 1]} : vector<336x128xbf16> to vector<16x128xbf16>
    %c128 = arith.constant 128 : index
    %c0_55 = arith.constant 0 : index
    %75 = vector.load %arg6[%c128, %c0_55] : memref<256x128xbf16, #tpu.memory_space<vmem>>, vector<16x128xbf16>
    tpu.vector_store %arg6[%c128, %c0_55], %74 {strides = array<i32>} : memref<256x128xbf16, #tpu.memory_space<vmem>>, vector<16x128xbf16>,
    %76 = vector.extract_strided_slice %57 {offsets = [181, 0], sizes = [16, 128], strides = [1, 1]} : vector<336x128xbf16> to vector<16x128xbf16>
    %c144 = arith.constant 144 : index
    %c0_56 = arith.constant 0 : index
    %77 = vector.load %arg6[%c144, %c0_56] : memref<256x128xbf16, #tpu.memory_space<vmem>>, vector<16x128xbf16>
    tpu.vector_store %arg6[%c144, %c0_56], %76 {strides = array<i32>} : memref<256x128xbf16, #tpu.memory_space<vmem>>, vector<16x128xbf16>,
    %78 = vector.extract_strided_slice %57 {offsets = [199, 0], sizes = [16, 128], strides = [1, 1]} : vector<336x128xbf16> to vector<16x128xbf16>
    %c160 = arith.constant 160 : index
    %c0_57 = arith.constant 0 : index
    %79 = vector.load %arg6[%c160, %c0_57] : memref<256x128xbf16, #tpu.memory_space<vmem>>, vector<16x128xbf16>
    tpu.vector_store %arg6[%c160, %c0_57], %78 {strides = array<i32>} : memref<256x128xbf16, #tpu.memory_space<vmem>>, vector<16x128xbf16>,
    %80 = vector.extract_strided_slice %57 {offsets = [217, 0], sizes = [16, 128], strides = [1, 1]} : vector<336x128xbf16> to vector<16x128xbf16>
    %c176 = arith.constant 176 : index
    %c0_58 = arith.constant 0 : index
    %81 = vector.load %arg6[%c176, %c0_58] : memref<256x128xbf16, #tpu.memory_space<vmem>>, vector<16x128xbf16>
    tpu.vector_store %arg6[%c176, %c0_58], %80 {strides = array<i32>} : memref<256x128xbf16, #tpu.memory_space<vmem>>, vector<16x128xbf16>,
    %82 = vector.extract_strided_slice %57 {offsets = [235, 0], sizes = [16, 128], strides = [1, 1]} : vector<336x128xbf16> to vector<16x128xbf16>
    %c192 = arith.constant 192 : index
    %c0_59 = arith.constant 0 : index
    %83 = vector.load %arg6[%c192, %c0_59] : memref<256x128xbf16, #tpu.memory_space<vmem>>, vector<16x128xbf16>
    tpu.vector_store %arg6[%c192, %c0_59], %82 {strides = array<i32>} : memref<256x128xbf16, #tpu.memory_space<vmem>>, vector<16x128xbf16>,
    %84 = vector.extract_strided_slice %57 {offsets = [253, 0], sizes = [16, 128], strides = [1, 1]} : vector<336x128xbf16> to vector<16x128xbf16>
    %c208 = arith.constant 208 : index
    %c0_60 = arith.constant 0 : index
    %85 = vector.load %arg6[%c208, %c0_60] : memref<256x128xbf16, #tpu.memory_space<vmem>>, vector<16x128xbf16>
    tpu.vector_store %arg6[%c208, %c0_60], %84 {strides = array<i32>} : memref<256x128xbf16, #tpu.memory_space<vmem>>, vector<16x128xbf16>,
    %86 = vector.extract_strided_slice %57 {offsets = [271, 0], sizes = [16, 128], strides = [1, 1]} : vector<336x128xbf16> to vector<16x128xbf16>
    %c224 = arith.constant 224 : index
    %c0_61 = arith.constant 0 : index
    %87 = vector.load %arg6[%c224, %c0_61] : memref<256x128xbf16, #tpu.memory_space<vmem>>, vector<16x128xbf16>
    tpu.vector_store %arg6[%c224, %c0_61], %86 {strides = array<i32>} : memref<256x128xbf16, #tpu.memory_space<vmem>>, vector<16x128xbf16>,
    %88 = vector.extract_strided_slice %57 {offsets = [289, 0], sizes = [16, 128], strides = [1, 1]} : vector<336x128xbf16> to vector<16x128xbf16>
    %c240 = arith.constant 240 : index
    %c0_62 = arith.constant 0 : index
    %89 = vector.load %arg6[%c240, %c0_62] : memref<256x128xbf16, #tpu.memory_space<vmem>>, vector<16x128xbf16>
    tpu.vector_store %arg6[%c240, %c0_62], %88 {strides = array<i32>} : memref<256x128xbf16, #tpu.memory_space<vmem>>, vector<16x128xbf16>,
    return
  }
  func.func @transform_0(%arg0: i32) -> (i32, i32) {
    %c0_i32 = arith.constant 0 : i32
    %c0_i32_0 = arith.constant 0 : i32
    return %arg0, %c0_i32 : i32, i32
  }
  func.func @transform_1(%arg0: i32) -> (i32, i32) {
    %c0_i32 = arith.constant 0 : i32
    %c0_i32_0 = arith.constant 0 : i32
    %c0_i32_1 = arith.constant 0 : i32
    return %c0_i32, %c0_i32_0 : i32, i32
  }
  func.func @transform_2(%arg0: i32) -> (i32, i32) {
    %c0_i32 = arith.constant 0 : i32
    %c0_i32_0 = arith.constant 0 : i32
    %c0_i32_1 = arith.constant 0 : i32
    return %c0_i32, %c0_i32_0 : i32, i32
  }
  func.func @transform_3(%arg0: i32) -> (i32, i32) {
    %c0_i32 = arith.constant 0 : i32
    %c0_i32_0 = arith.constant 0 : i32
    %c0_i32_1 = arith.constant 0 : i32
    return %c0_i32, %c0_i32_0 : i32, i32
  }
  func.func @transform_4(%arg0: i32) -> (i32, i32) {
    %c0_i32 = arith.constant 0 : i32
    %c0_i32_0 = arith.constant 0 : i32
    %c0_i32_1 = arith.constant 0 : i32
    return %c0_i32, %c0_i32_0 : i32, i32
  }
  func.func @transform_5(%arg0: i32) -> (i32, i32) {
    %c0_i32 = arith.constant 0 : i32
    %c0_i32_0 = arith.constant 0 : i32
    return %arg0, %c0_i32 : i32, i32
  }
}

</mosaic_0001>

<llo_original>
// kernel: building_block_forward.1
$region0: #{building_block_forward.1}
  #allocation0 [shape = 'u32[]', space=smem, size = 0x4, offset = 0x4, fixed_abs, tag = 'smem constant byte address 0x4 - core index']
  #allocation1 [shape = 'u32[144,128]{1,0:T(1,128)}', space=vmem, size = 0x12000, scoped, tag = 'internal scratch']
  #allocation2 [shape = 'bf16[400,128]{1,0:T(16,128)(2,1)}', space=vmem, size = 0x19000, scoped, tag = 'scratch operand']
  %s0 = inlined_call_operand.vmem [shape: bf16[800,4], index: 0, kind: input, shape index: {}]
  %s1 = inlined_call_operand.vmem [shape: bf16[36,256], index: 1, kind: input, shape index: {}]
  %s2 = inlined_call_operand.vmem [shape: bf16[1152,128], index: 2, kind: input, shape index: {}]
  %s3 = inlined_call_operand.vmem [shape: f32[8,128], index: 3, kind: input, shape index: {}]
  %s4 = inlined_call_operand.vmem [shape: f32[336,1], index: 4, kind: input, shape index: {}]
  %s5 = inlined_call_operand.vmem [shape: bf16[512,128], index: 5, kind: output, shape index: {}]
  %s6 = sld [smem:[#allocation0]]
  $region57: #{building_block_forward.1} parent=0
    _
  %s8 = ssub.s32 1, %s6
  %s9 = scalar_select 0, %s8, %s6
  loop: start=0, step=1, limit=4
  $region2: #{building_block_forward.1} parent=0 // loop_pre_header
    _
  $region3: #{building_block_forward.1} parent=0 // loop_header
    %s11 = sphi 0, %s15
    %p12 = scmp.ge.s32.totalorder %s11, 4
    %s21 = sphi 0, %s23
    %s24 = sphi 0, %s21
    %s25 = sphi 0, %s24
    %s41 = sphi 0, %s25
    %s45 = sphi 0, %s45
    %s47 = sphi 0, %s45
    %s48 = sphi 0, %s47
    %s62 = sphi 0, %s48
    %s66 = sphi 0, %s66
    %s68 = sphi 0, %s66
    %s69 = sphi 0, %s68
    %s83 = sphi 0, %s69
    %s87 = sphi 0, %s87
    %s89 = sphi 0, %s87
    %s90 = sphi 0, %s89
    %s104 = sphi 0, %s90
    %s108 = sphi 0, %s108
    %s110 = sphi 0, %s108
    %s111 = sphi 0, %s110
    %s125 = sphi 0, %s111
    %s131 = sphi 0, %s133
    %s134 = sphi 0, %s131
    %s135 = sphi 0, %s134
    %s151 = sphi 0, %s135
  $region4: #{building_block_forward.1} parent=0 // loop_header_branch
    %14 = sbr.rel (%p12) target = $region8
  $region5: #{building_block_forward.1} parent=0 // loop_body
    %s16 = ssub.s32 %s11, 1
    %s17 = ssub.s32 %s11, 2
    %s18 = sadd.s32 %s11, 1
    %s19 = ssub.s32 %s11, %s18
    %p20 = scmp.eq.s32.totalorder %s19, 0
    %s22 = sadd.s32 %s21, 1
    %s23 = scalar_select %p20, %s21, %s22
    %p26 = pneg %p20
    %p27 = scmp.eq.s32.totalorder %s11, 1
    %p28 = por %p26, %p27
    %p29 = scmp.ne.s32.totalorder %s21, %s24
    %p30 = scmp.eq.s32.totalorder %s11, 0
    %p31 = por %p29, %p30
    %p32 = scmp.ne.s32.totalorder %s21, %s24
    %p33 = scmp.eq.s32.totalorder %s16, 1
    %p34 = por %p32, %p33
    %p35 = scmp.ne.s32.totalorder %s24, %s25
    %p36 = scmp.eq.s32.totalorder %s16, 0
    %p37 = por %p35, %p36
    %p38 = scmp.ne.s32.totalorder %s24, %s25
    %p39 = scmp.eq.s32.totalorder %s17, 1
    %p40 = por %p38, %p39
    %p42 = scmp.ne.s32.totalorder %s25, %s41
    %p43 = scmp.eq.s32.totalorder %s17, 0
    %p44 = por %p42, %p43
    %s46 = sadd.s32 %s45, 1
    %p49 = scmp.eq.s32.totalorder %s11, 1
    %p50 = scmp.ne.s32.totalorder %s45, %s47
    %p51 = scmp.eq.s32.totalorder %s11, 0
    %p52 = por %p50, %p51
    %p53 = scmp.ne.s32.totalorder %s45, %s47
    %p54 = scmp.eq.s32.totalorder %s16, 1
    %p55 = por %p53, %p54
    %p56 = scmp.ne.s32.totalorder %s47, %s48
    %p57 = scmp.eq.s32.totalorder %s16, 0
    %p58 = por %p56, %p57
    %p59 = scmp.ne.s32.totalorder %s47, %s48
    %p60 = scmp.eq.s32.totalorder %s17, 1
    %p61 = por %p59, %p60
    %p63 = scmp.ne.s32.totalorder %s48, %s62
    %p64 = scmp.eq.s32.totalorder %s17, 0
    %p65 = por %p63, %p64
    %s67 = sadd.s32 %s66, 1
    %p70 = scmp.eq.s32.totalorder %s11, 1
    %p71 = scmp.ne.s32.totalorder %s66, %s68
    %p72 = scmp.eq.s32.totalorder %s11, 0
    %p73 = por %p71, %p72
    %p74 = scmp.ne.s32.totalorder %s66, %s68
    %p75 = scmp.eq.s32.totalorder %s16, 1
    %p76 = por %p74, %p75
    %p77 = scmp.ne.s32.totalorder %s68, %s69
    %p78 = scmp.eq.s32.totalorder %s16, 0
    %p79 = por %p77, %p78
    %p80 = scmp.ne.s32.totalorder %s68, %s69
    %p81 = scmp.eq.s32.totalorder %s17, 1
    %p82 = por %p80, %p81
    %p84 = scmp.ne.s32.totalorder %s69, %s83
    %p85 = scmp.eq.s32.totalorder %s17, 0
    %p86 = por %p84, %p85
    %s88 = sadd.s32 %s87, 1
    %p91 = scmp.eq.s32.totalorder %s11, 1
    %p92 = scmp.ne.s32.totalorder %s87, %s89
    %p93 = scmp.eq.s32.totalorder %s11, 0
    %p94 = por %p92, %p93
    %p95 = scmp.ne.s32.totalorder %s87, %s89
    %p96 = scmp.eq.s32.totalorder %s16, 1
    %p97 = por %p95, %p96
    %p98 = scmp.ne.s32.totalorder %s89, %s90
    %p99 = scmp.eq.s32.totalorder %s16, 0
    %p100 = por %p98, %p99
    %p101 = scmp.ne.s32.totalorder %s89, %s90
    %p102 = scmp.eq.s32.totalorder %s17, 1
    %p103 = por %p101, %p102
    %p105 = scmp.ne.s32.totalorder %s90, %s104
    %p106 = scmp.eq.s32.totalorder %s17, 0
    %p107 = por %p105, %p106
    %s109 = sadd.s32 %s108, 1
    %p112 = scmp.eq.s32.totalorder %s11, 1
    %p113 = scmp.ne.s32.totalorder %s108, %s110
    %p114 = scmp.eq.s32.totalorder %s11, 0
    %p115 = por %p113, %p114
    %p116 = scmp.ne.s32.totalorder %s108, %s110
    %p117 = scmp.eq.s32.totalorder %s16, 1
    %p118 = por %p116, %p117
    %p119 = scmp.ne.s32.totalorder %s110, %s111
    %p120 = scmp.eq.s32.totalorder %s16, 0
    %p121 = por %p119, %p120
    %p122 = scmp.ne.s32.totalorder %s110, %s111
    %p123 = scmp.eq.s32.totalorder %s17, 1
    %p124 = por %p122, %p123
    %p126 = scmp.ne.s32.totalorder %s111, %s125
    %p127 = scmp.eq.s32.totalorder %s17, 0
    %p128 = por %p126, %p127
    %s129 = ssub.s32 %s11, %s18
    %p130 = scmp.eq.s32.totalorder %s129, 0
    %s132 = sadd.s32 %s131, 1
    %s133 = scalar_select %p130, %s131, %s132
    %p136 = pneg %p130
    %p137 = scmp.eq.s32.totalorder %s11, 1
    %p138 = por %p136, %p137
    %p139 = scmp.ne.s32.totalorder %s131, %s134
    %p140 = scmp.eq.s32.totalorder %s11, 0
    %p141 = por %p139, %p140
    %p142 = scmp.ne.s32.totalorder %s131, %s134
    %p143 = scmp.eq.s32.totalorder %s16, 1
    %p144 = por %p142, %p143
    %p145 = scmp.ne.s32.totalorder %s134, %s135
    %p146 = scmp.eq.s32.totalorder %s16, 0
    %p147 = por %p145, %p146
    %p148 = scmp.ne.s32.totalorder %s134, %s135
    %p149 = scmp.eq.s32.totalorder %s17, 1
    %p150 = por %p148, %p149
    %p152 = scmp.ne.s32.totalorder %s135, %s151
    %p153 = scmp.eq.s32.totalorder %s17, 0
    %p154 = por %p152, %p153
    %p155 = scmp.le.s32.totalorder 1, %s11
    %p156 = scmp.lt.s32.totalorder %s11, 3
    %p157 = pnand %p155, %p156
    %p158 = pneg %p157
    // Predicated region
    $region9: #{building_block_forward.1} parent=5 // pred_check
      _
    $region10: #{building_block_forward.1} parent=5 // pred_check_branch
      %160 = sbr.rel (%p157) target = $region12
    $region11: #{building_block_forward.1} parent=5 // pred_region
      %s161 = ssub.s32 %s11, 1
      // Predicated region
      $region13: #{building_block_forward.1} parent=11 // pred_check
        %p162 = pneg %p58
      $region14: #{building_block_forward.1} parent=11 // pred_check_branch
        %164 = sbr.rel (%p162) target = $region16
      $region15: #{building_block_forward.1} parent=11 // pred_region
        _
      $region16: #{building_block_forward.1} parent=11 // pred_fallthru
        _
      // Predicated region
      $region17: #{building_block_forward.1} parent=11 // pred_check
        %p165 = pneg %p79
      $region18: #{building_block_forward.1} parent=11 // pred_check_branch
        %167 = sbr.rel (%p165) target = $region20
      $region19: #{building_block_forward.1} parent=11 // pred_region
        _
      $region20: #{building_block_forward.1} parent=11 // pred_fallthru
        _
      // Predicated region
      $region21: #{building_block_forward.1} parent=11 // pred_check
        %p168 = pneg %p100
      $region22: #{building_block_forward.1} parent=11 // pred_check_branch
        %170 = sbr.rel (%p168) target = $region24
      $region23: #{building_block_forward.1} parent=11 // pred_region
        _
      $region24: #{building_block_forward.1} parent=11 // pred_fallthru
        _
      // Predicated region
      $region25: #{building_block_forward.1} parent=11 // pred_check
        %p171 = pneg %p121
      $region26: #{building_block_forward.1} parent=11 // pred_check_branch
        %173 = sbr.rel (%p171) target = $region28
      $region27: #{building_block_forward.1} parent=11 // pred_region
        _
      $region28: #{building_block_forward.1} parent=11 // pred_fallthru
        _
    $region12: #{building_block_forward.1} parent=5 // pred_fallthru
      _
    %p174 = scmp.lt.s32.totalorder %s11, 2
    // Predicated region
    $region29: #{building_block_forward.1} parent=5 // pred_check
      %p175 = pneg %p174
    $region30: #{building_block_forward.1} parent=5 // pred_check_branch
      %177 = sbr.rel (%p175) target = $region32
    $region31: #{building_block_forward.1} parent=5 // pred_region
      // Predicated region
      $region33: #{building_block_forward.1} parent=31 // pred_check
        %p178 = pneg %p31
      $region34: #{building_block_forward.1} parent=31 // pred_check_branch
        %180 = sbr.rel (%p178) target = $region36
      $region35: #{building_block_forward.1} parent=31 // pred_region
        %s181 = smul.u32 50, %s11
        %p182 = scmp.lt.s32.totalorder %s181, 99
        %s183 = scalar_select %p182, %s181, 99
        %s184 = smul.addr %s183, 4
        %s185 = scalar_lea.vmem %s0, %s184
        %s186 = smul.u32 50, %s11
      $region36: #{building_block_forward.1} parent=31 // pred_fallthru
        _
    $region32: #{building_block_forward.1} parent=5 // pred_fallthru
      _
    %p187 = scmp.le.s32.totalorder 1, %s11
    %p188 = scmp.lt.s32.totalorder %s11, 3
    %p189 = pnand %p187, %p188
    %p190 = pneg %p189
    // Predicated region
    $region37: #{building_block_forward.1} parent=5 // pred_check
      _
    $region38: #{building_block_forward.1} parent=5 // pred_check_branch
      %192 = sbr.rel (%p189) target = $region40
    $region39: #{building_block_forward.1} parent=5 // pred_region
      %s193 = ssub.s32 %s11, 1
      %s194 = smul.u32 50, %s16
      %p195 = scmp.lt.s32.totalorder %s194, 99
      %s196 = scalar_select %p195, %s194, 99
      %s197 = smul.addr %s196, 4
      %s198 = scalar_lea.vmem %s0, %s197
      %p199 = pneg %p37
      %p200 = pneg %p34
      %p201 = pneg %p58
      %p202 = pneg %p55
      %p203 = pneg %p79
      %p204 = pneg %p76
      %p205 = pneg %p100
      %p206 = pneg %p97
      %p207 = pneg %p121
      %p208 = pneg %p118
      %p209 = pneg %p147
      %p210 = pneg %p144
      %s211 = smul.u32 32, %s16
      %p212 = scmp.lt.s32.totalorder %s211, 63
      %s213 = scalar_select %p212, %s211, 63
      %s214 = smul.addr %s213, 4
      %s215 = scalar_lea.vmem %s5, %s214
      %s216 = smul.u32 50, %s16
      %p217 = scmp.lt.s32.totalorder %s216, 99
      %s218 = scalar_select %p217, %s216, 99
      %s219 = smul.addr %s218, 4
      %s220 = scalar_lea.vmem %s0, %s219
      %s221 = smul.u32 50, %s16
      %s222 = smul.u32 32, %s16
      %p223 = scmp.lt.s32.totalorder %s222, 63
      %s224 = scalar_select %p223, %s222, 63
      %s225 = smul.addr %s224, 4
      %s226 = scalar_lea.vmem %s5, %s225
      %s227 = smul.u32 32, %s16
      %p229 = scmp.eq.s32.totalorder %s16, 0
      // Predicated region
      $region41: #{building_block_forward.1} parent=39 // pred_check
        %p230 = pneg %p229
      $region42: #{building_block_forward.1} parent=39 // pred_check_branch
        %232 = sbr.rel (%p230) target = $region44
      $region43: #{building_block_forward.1} parent=39 // pred_region
        %233 = vst [vmem:[#allocation2] sm:$0xff] 0
        %234 = vst [vmem:[#allocation2 + $0x8] sm:$0xff] 0
        %235 = vst [vmem:[#allocation2 + $0x10] sm:$0xff] 0
        %236 = vst [vmem:[#allocation2 + $0x18] sm:$0xff] 0
        %237 = vst [vmem:[#allocation2 + $0x20] sm:$0xff] 0
        %238 = vst [vmem:[#allocation2 + $0x28] sm:$0xff] 0
        %239 = vst [vmem:[#allocation2 + $0x30] sm:$0xff] 0
        %240 = vst [vmem:[#allocation2 + $0x38] sm:$0xff] 0
        %241 = vst [vmem:[#allocation2 + $0x40] sm:$0xff] 0
        %242 = vst [vmem:[#allocation2 + $0x48] sm:$0xff] 0
        %243 = vst [vmem:[#allocation2 + $0x50] sm:$0xff] 0
        %244 = vst [vmem:[#allocation2 + $0x58] sm:$0xff] 0
        %245 = vst [vmem:[#allocation2 + $0x60] sm:$0xff] 0
        %246 = vst [vmem:[#allocation2 + $0x68] sm:$0xff] 0
        %247 = vst [vmem:[#allocation2 + $0x70] sm:$0xff] 0
        %248 = vst [vmem:[#allocation2 + $0x78] sm:$0xff] 0
        %249 = vst [vmem:[#allocation2 + $0x80] sm:$0xff] 0
        %250 = vst [vmem:[#allocation2 + $0x88] sm:$0xff] 0
        %251 = vst [vmem:[#allocation2 + $0x90] sm:$0xff] 0
        %252 = vst [vmem:[#allocation2 + $0x98] sm:$0xff] 0
        %253 = vst [vmem:[#allocation2 + $0xa0] sm:$0xff] 0
        %254 = vst [vmem:[#allocation2 + $0xa8] sm:$0xff] 0
        %255 = vst [vmem:[#allocation2 + $0xb0] sm:$0xff] 0
        %256 = vst [vmem:[#allocation2 + $0xb8] sm:$0xff] 0
        %257 = vst [vmem:[#allocation2 + $0xc0] sm:$0xff] 0
      $region44: #{building_block_forward.1} parent=39 // pred_fallthru
        _
      %v258 = vld [vmem:[%s220 + $0x4] sm:$0xc]
      %v259 = vld [vmem:[%s220 + $0x8] sm:$0xf]
      %v260 = vld [vmem:[%s220 + $0xc] sm:$0xf]
      %v261 = vld [vmem:[%s220 + $0x10] sm:$0xf]
      %v262 = vld [vmem:[%s220 + $0x14] sm:$0xf]
      %v263 = vld [vmem:[%s220 + $0x18] sm:$0xf]
      %v264 = vld [vmem:[%s220 + $0x1c] sm:$0xf]
      %v265 = vld [vmem:[%s220 + $0x20] sm:$0xf]
      %v266 = vld [vmem:[%s220 + $0x24] sm:$0xf]
      %v267 = vld [vmem:[%s220 + $0x28] sm:$0xf]
      %v268 = vld [vmem:[%s220 + $0x2c] sm:$0xf]
      %v269 = vld [vmem:[%s220 + $0x30] sm:$0xf]
      %v270 = vld [vmem:[%s220 + $0x34] sm:$0xf]
      %v271 = vld [vmem:[%s220 + $0x38] sm:$0xf]
      %v272 = vld [vmem:[%s220 + $0x3c] sm:$0xf]
      %v273 = vld [vmem:[%s220 + $0x40] sm:$0xf]
      %v274 = vld [vmem:[%s220 + $0x44] sm:$0xf]
      %v275 = vld [vmem:[%s220 + $0x48] sm:$0xf]
      %v276 = vld [vmem:[%s220 + $0x4c] sm:$0xf]
      %v277 = vld [vmem:[%s220 + $0x50] sm:$0xf]
      %v278 = vld [vmem:[%s220 + $0x54] sm:$0xf]
      %v279 = vld [vmem:[%s220 + $0x58] sm:$0xf]
      %v280 = vld [vmem:[%s220 + $0x5c] sm:$0xf]
      %v281 = vld [vmem:[%s220 + $0x60] sm:$0xf]
      %v282 = vld [vmem:[%s220 + $0x64] sm:$0xf]
      %v283 = vld [vmem:[%s220 + $0x68] sm:$0xf]
      %v284 = vld [vmem:[%s220 + $0x6c] sm:$0xf]
      %v285 = vld [vmem:[%s220 + $0x70] sm:$0xf]
      %v286 = vld [vmem:[%s220 + $0x74] sm:$0xf]
      %v287 = vld [vmem:[%s220 + $0x78] sm:$0xf]
      %v288 = vld [vmem:[%s220 + $0x7c] sm:$0xf]
      %v289 = vld [vmem:[%s220 + $0x80] sm:$0xf]
      %v290 = vld [vmem:[%s220 + $0x84] sm:$0xf]
      %v291 = vld [vmem:[%s220 + $0x88] sm:$0xf]
      %v292 = vld [vmem:[%s220 + $0x8c] sm:$0xf]
      %v293 = vld [vmem:[%s220 + $0x90] sm:$0xf]
      %v294 = vld [vmem:[%s220 + $0x94] sm:$0xf]
      %v295 = vld [vmem:[%s220 + $0x98] sm:$0xf]
      %v296 = vld [vmem:[%s220 + $0x9c] sm:$0xf]
      %v297 = vld [vmem:[%s220 + $0xa0] sm:$0xf]
      %v298 = vld [vmem:[%s220 + $0xa4] sm:$0xf]
      %v299 = vld [vmem:[%s220 + $0xa8] sm:$0xf]
      %v300 = vld [vmem:[%s220 + $0xac] sm:$0x7]
      %v301 = vld [vmem:[%s220 + $0x4] sm:$0x8]
      %v302 = vld [vmem:[%s220 + $0xac] sm:$0xf]
      %v303 = vld [vmem:[%s220 + $0xc] sm:$0x8]
      %v304 = vld [vmem:[%s220 + $0xb0] sm:$0xf]
      %v305 = vld [vmem:[%s220 + $0xb4] sm:$0xf]
      %v306 = vld [vmem:[%s220 + $0xb8] sm:$0x1]
      %v307 = vld [vmem:[%s220 + $0xb8] sm:$0xf]
      %v308 = vld [vmem:[%s220 + $0xbc] sm:$0xf]
      %v309 = vld [vmem:[%s220 + $0xc0] sm:$0x1]
      %v310 = vld [vmem:[%s220 + $0x18] sm:$0xe]
      %v311 = vld [vmem:[%s220 + $0xc0] sm:$0x3]
      %v355 = vunpack.c.l.b16 %v258
      %v356 = vunpack.c.l.b16 %v259
      %v357 = vunpack.c.l.b16 %v260
      %v358 = vunpack.c.l.b16 %v261
      %v359 = vunpack.c.l.b16 %v262
      %v360 = vunpack.c.l.b16 %v263
      %v361 = vunpack.c.l.b16 %v264
      %v362 = vunpack.c.l.b16 %v265
      %v363 = vunpack.c.l.b16 %v266
      %v364 = vunpack.c.l.b16 %v267
      %v365 = vunpack.c.l.b16 %v268
      %v366 = vunpack.c.l.b16 %v269
      %v367 = vunpack.c.l.b16 %v270
      %v368 = vunpack.c.l.b16 %v271
      %v369 = vunpack.c.l.b16 %v272
      %v370 = vunpack.c.l.b16 %v273
      %v371 = vunpack.c.l.b16 %v274
      %v372 = vunpack.c.l.b16 %v275
      %v373 = vunpack.c.l.b16 %v276
      %v374 = vunpack.c.l.b16 %v277
      %v375 = vunpack.c.l.b16 %v278
      %v376 = vunpack.c.l.b16 %v279
      %v377 = vunpack.c.l.b16 %v280
      %v378 = vunpack.c.l.b16 %v281
      %v379 = vunpack.c.l.b16 %v282
      %v380 = vunpack.c.l.b16 %v283
      %v381 = vunpack.c.l.b16 %v284
      %v382 = vunpack.c.l.b16 %v285
      %v383 = vunpack.c.l.b16 %v286
      %v384 = vunpack.c.l.b16 %v287
      %v385 = vunpack.c.l.b16 %v288
      %v386 = vunpack.c.l.b16 %v289
      %v387 = vunpack.c.l.b16 %v290
      %v388 = vunpack.c.l.b16 %v291
      %v389 = vunpack.c.l.b16 %v292
      %v390 = vunpack.c.l.b16 %v293
      %v391 = vunpack.c.l.b16 %v294
      %v392 = vunpack.c.l.b16 %v295
      %v393 = vunpack.c.l.b16 %v296
      %v394 = vunpack.c.l.b16 %v297
      %v395 = vunpack.c.l.b16 %v298
      %v396 = vunpack.c.l.b16 %v299
      %v397 = vunpack.c.l.b16 %v300
      %v398 = vpack.c.b16 %v356, %v355
      %v399 = vpack.c.b16 %v358, %v357
      %v400 = vpack.c.b16 %v360, %v359
      %v401 = vpack.c.b16 %v362, %v361
      %v402 = vpack.c.b16 %v364, %v363
      %v403 = vpack.c.b16 %v366, %v365
      %v404 = vpack.c.b16 %v368, %v367
      %v405 = vpack.c.b16 %v370, %v369
      %v406 = vpack.c.b16 %v372, %v371
      %v407 = vpack.c.b16 %v374, %v373
      %v408 = vpack.c.b16 %v376, %v375
      %v409 = vpack.c.b16 %v378, %v377
      %v410 = vpack.c.b16 %v380, %v379
      %v411 = vpack.c.b16 %v382, %v381
      %v412 = vpack.c.b16 %v384, %v383
      %v413 = vpack.c.b16 %v386, %v385
      %v414 = vpack.c.b16 %v388, %v387
      %v415 = vpack.c.b16 %v390, %v389
      %v416 = vpack.c.b16 %v392, %v391
      %v417 = vpack.c.b16 %v394, %v393
      %v418 = vpack.c.b16 %v396, %v395
      %v419 = vpack.c.b16 %v397, %v397
      %v421 = vunpack.c.l.b16 %v301
      %v422 = vpack.c.b16 %v356, %v421
      %vm423 = vsmask.f32 7424
      %v425 = vshrl.u32 %v422, 16
      %v427 = vshll.u32 %v422, 16
      %v429 = vrot.slane %v427, 1
      %v430 = vor.u32 %v425, %v429
      %v432 = vshll.u32 %v399, 16
      %v434 = vrot.slane %v432, 1
      %v435 = vsel %vm423, %v430, %v434
      %v436 = vshrl.u32 %v399, 16
      %v438 = vor.u32 %v436, %v434
      %v440 = vshll.u32 %v400, 16
      %v442 = vrot.slane %v440, 1
      %v443 = vsel %vm423, %v438, %v442
      %v444 = vshrl.u32 %v400, 16
      %v446 = vor.u32 %v444, %v442
      %v448 = vshll.u32 %v401, 16
      %v450 = vrot.slane %v448, 1
      %v451 = vsel %vm423, %v446, %v450
      %v452 = vshrl.u32 %v401, 16
      %v454 = vor.u32 %v452, %v450
      %v456 = vshll.u32 %v402, 16
      %v458 = vrot.slane %v456, 1
      %v459 = vsel %vm423, %v454, %v458
      %v460 = vshrl.u32 %v402, 16
      %v462 = vor.u32 %v460, %v458
      %v464 = vshll.u32 %v403, 16
      %v466 = vrot.slane %v464, 1
      %v467 = vsel %vm423, %v462, %v466
      %v468 = vshrl.u32 %v403, 16
      %v470 = vor.u32 %v468, %v466
      %v472 = vshll.u32 %v404, 16
      %v474 = vrot.slane %v472, 1
      %v475 = vsel %vm423, %v470, %v474
      %v476 = vshrl.u32 %v404, 16
      %v478 = vor.u32 %v476, %v474
      %v480 = vshll.u32 %v405, 16
      %v482 = vrot.slane %v480, 1
      %v483 = vsel %vm423, %v478, %v482
      %v484 = vshrl.u32 %v405, 16
      %v486 = vor.u32 %v484, %v482
      %v488 = vshll.u32 %v406, 16
      %v490 = vrot.slane %v488, 1
      %v491 = vsel %vm423, %v486, %v490
      %v492 = vshrl.u32 %v406, 16
      %v494 = vor.u32 %v492, %v490
      %v496 = vshll.u32 %v407, 16
      %v498 = vrot.slane %v496, 1
      %v499 = vsel %vm423, %v494, %v498
      %v500 = vshrl.u32 %v407, 16
      %v502 = vor.u32 %v500, %v498
      %v504 = vshll.u32 %v408, 16
      %v506 = vrot.slane %v504, 1
      %v507 = vsel %vm423, %v502, %v506
      %v508 = vshrl.u32 %v408, 16
      %v510 = vor.u32 %v508, %v506
      %v512 = vshll.u32 %v409, 16
      %v514 = vrot.slane %v512, 1
      %v515 = vsel %vm423, %v510, %v514
      %v516 = vshrl.u32 %v409, 16
      %v518 = vor.u32 %v516, %v514
      %v520 = vshll.u32 %v410, 16
      %v522 = vrot.slane %v520, 1
      %v523 = vsel %vm423, %v518, %v522
      %v524 = vshrl.u32 %v410, 16
      %v526 = vor.u32 %v524, %v522
      %v528 = vshll.u32 %v411, 16
      %v530 = vrot.slane %v528, 1
      %v531 = vsel %vm423, %v526, %v530
      %v532 = vshrl.u32 %v411, 16
      %v534 = vor.u32 %v532, %v530
      %v536 = vshll.u32 %v412, 16
      %v538 = vrot.slane %v536, 1
      %v539 = vsel %vm423, %v534, %v538
      %v540 = vshrl.u32 %v412, 16
      %v542 = vor.u32 %v540, %v538
      %v544 = vshll.u32 %v413, 16
      %v546 = vrot.slane %v544, 1
      %v547 = vsel %vm423, %v542, %v546
      %v548 = vshrl.u32 %v413, 16
      %v550 = vor.u32 %v548, %v546
      %v552 = vshll.u32 %v414, 16
      %v554 = vrot.slane %v552, 1
      %v555 = vsel %vm423, %v550, %v554
      %v556 = vshrl.u32 %v414, 16
      %v558 = vor.u32 %v556, %v554
      %v560 = vshll.u32 %v415, 16
      %v562 = vrot.slane %v560, 1
      %v563 = vsel %vm423, %v558, %v562
      %v564 = vshrl.u32 %v415, 16
      %v566 = vor.u32 %v564, %v562
      %v568 = vshll.u32 %v416, 16
      %v570 = vrot.slane %v568, 1
      %v571 = vsel %vm423, %v566, %v570
      %v572 = vshrl.u32 %v416, 16
      %v574 = vor.u32 %v572, %v570
      %v576 = vshll.u32 %v417, 16
      %v578 = vrot.slane %v576, 1
      %v579 = vsel %vm423, %v574, %v578
      %v580 = vshrl.u32 %v417, 16
      %v582 = vor.u32 %v580, %v578
      %v584 = vshll.u32 %v418, 16
      %v586 = vrot.slane %v584, 1
      %v587 = vsel %vm423, %v582, %v586
      %v588 = vshrl.u32 %v418, 16
      %v590 = vor.u32 %v588, %v586
      %v592 = vshll.u32 %v419, 16
      %v594 = vrot.slane %v592, 1
      %v595 = vsel %vm423, %v590, %v594
      %v596 = vshrl.u32 %v419, 16
      %v598 = vor.u32 %v596, %v594
      %599 = vrot.lane.b32.xlu0 %v435, 4
      %v600 = vpop.permute.xlu0 %599
      %601 = vrot.lane.b32.xlu0 %v443, 4
      %v602 = vpop.permute.xlu0 %601
      %603 = vrot.lane.b32.xlu0 %v451, 4
      %v604 = vpop.permute.xlu0 %603
      %605 = vrot.lane.b32.xlu0 %v459, 4
      %v606 = vpop.permute.xlu0 %605
      %607 = vrot.lane.b32.xlu0 %v467, 4
      %v608 = vpop.permute.xlu0 %607
      %609 = vrot.lane.b32.xlu0 %v475, 4
      %v610 = vpop.permute.xlu0 %609
      %611 = vrot.lane.b32.xlu0 %v483, 4
      %v612 = vpop.permute.xlu0 %611
      %613 = vrot.lane.b32.xlu0 %v491, 4
      %v614 = vpop.permute.xlu0 %613
      %615 = vrot.lane.b32.xlu0 %v499, 4
      %v616 = vpop.permute.xlu0 %615
      %617 = vrot.lane.b32.xlu0 %v507, 4
      %v618 = vpop.permute.xlu0 %617
      %619 = vrot.lane.b32.xlu0 %v515, 4
      %v620 = vpop.permute.xlu0 %619
      %621 = vrot.lane.b32.xlu0 %v523, 4
      %v622 = vpop.permute.xlu0 %621
      %623 = vrot.lane.b32.xlu0 %v531, 4
      %v624 = vpop.permute.xlu0 %623
      %625 = vrot.lane.b32.xlu0 %v539, 4
      %v626 = vpop.permute.xlu0 %625
      %627 = vrot.lane.b32.xlu0 %v547, 4
      %v628 = vpop.permute.xlu0 %627
      %629 = vrot.lane.b32.xlu0 %v555, 4
      %v630 = vpop.permute.xlu0 %629
      %631 = vrot.lane.b32.xlu0 %v563, 4
      %v632 = vpop.permute.xlu0 %631
      %633 = vrot.lane.b32.xlu0 %v571, 4
      %v634 = vpop.permute.xlu0 %633
      %635 = vrot.lane.b32.xlu0 %v579, 4
      %v636 = vpop.permute.xlu0 %635
      %637 = vrot.lane.b32.xlu0 %v587, 4
      %v638 = vpop.permute.xlu0 %637
      %639 = vrot.lane.b32.xlu0 %v595, 4
      %v640 = vpop.permute.xlu0 %639
      %641 = vrot.lane.b32.xlu0 %v598, 4
      %v642 = vpop.permute.xlu0 %641
      %v644 = vunpack.c.l.b16 %v302
      %v645 = vpack.c.b16 %v644, %v644
      %vm646 = vcmask 1046528
      %v647 = vrot.slane %v422, 1
      %v648 = vrot.slane %v399, 1
      %v649 = vsel %vm646, %v647, %v648
      %v650 = vrot.slane %v400, 1
      %v651 = vsel %vm646, %v648, %v650
      %v652 = vrot.slane %v401, 1
      %v653 = vsel %vm646, %v650, %v652
      %v654 = vrot.slane %v402, 1
      %v655 = vsel %vm646, %v652, %v654
      %v656 = vrot.slane %v403, 1
      %v657 = vsel %vm646, %v654, %v656
      %v658 = vrot.slane %v404, 1
      %v659 = vsel %vm646, %v656, %v658
      %v660 = vrot.slane %v405, 1
      %v661 = vsel %vm646, %v658, %v660
      %v662 = vrot.slane %v406, 1
      %v663 = vsel %vm646, %v660, %v662
      %v664 = vrot.slane %v407, 1
      %v665 = vsel %vm646, %v662, %v664
      %v666 = vrot.slane %v408, 1
      %v667 = vsel %vm646, %v664, %v666
      %v668 = vrot.slane %v409, 1
      %v669 = vsel %vm646, %v666, %v668
      %v670 = vrot.slane %v410, 1
      %v671 = vsel %vm646, %v668, %v670
      %v672 = vrot.slane %v411, 1
      %v673 = vsel %vm646, %v670, %v672
      %v674 = vrot.slane %v412, 1
      %v675 = vsel %vm646, %v672, %v674
      %v676 = vrot.slane %v413, 1
      %v677 = vsel %vm646, %v674, %v676
      %v678 = vrot.slane %v414, 1
      %v679 = vsel %vm646, %v676, %v678
      %v680 = vrot.slane %v415, 1
      %v681 = vsel %vm646, %v678, %v680
      %v682 = vrot.slane %v416, 1
      %v683 = vsel %vm646, %v680, %v682
      %v684 = vrot.slane %v417, 1
      %v685 = vsel %vm646, %v682, %v684
      %v686 = vrot.slane %v418, 1
      %v687 = vsel %vm646, %v684, %v686
      %v688 = vrot.slane %v645, 1
      %v689 = vsel %vm646, %v686, %v688
      %690 = vrot.lane.b32.xlu0 %v649, 8
      %v691 = vpop.permute.xlu0 %690
      %692 = vrot.lane.b32.xlu0 %v651, 8
      %v693 = vpop.permute.xlu0 %692
      %694 = vrot.lane.b32.xlu0 %v653, 8
      %v695 = vpop.permute.xlu0 %694
      %696 = vrot.lane.b32.xlu0 %v655, 8
      %v697 = vpop.permute.xlu0 %696
      %698 = vrot.lane.b32.xlu0 %v657, 8
      %v699 = vpop.permute.xlu0 %698
      %700 = vrot.lane.b32.xlu0 %v659, 8
      %v701 = vpop.permute.xlu0 %700
      %702 = vrot.lane.b32.xlu0 %v661, 8
      %v703 = vpop.permute.xlu0 %702
      %704 = vrot.lane.b32.xlu0 %v663, 8
      %v705 = vpop.permute.xlu0 %704
      %706 = vrot.lane.b32.xlu0 %v665, 8
      %v707 = vpop.permute.xlu0 %706
      %708 = vrot.lane.b32.xlu0 %v667, 8
      %v709 = vpop.permute.xlu0 %708
      %710 = vrot.lane.b32.xlu0 %v669, 8
      %v711 = vpop.permute.xlu0 %710
      %712 = vrot.lane.b32.xlu0 %v671, 8
      %v713 = vpop.permute.xlu0 %712
      %714 = vrot.lane.b32.xlu0 %v673, 8
      %v715 = vpop.permute.xlu0 %714
      %716 = vrot.lane.b32.xlu0 %v675, 8
      %v717 = vpop.permute.xlu0 %716
      %718 = vrot.lane.b32.xlu0 %v677, 8
      %v719 = vpop.permute.xlu0 %718
      %720 = vrot.lane.b32.xlu0 %v679, 8
      %v721 = vpop.permute.xlu0 %720
      %722 = vrot.lane.b32.xlu0 %v681, 8
      %v723 = vpop.permute.xlu0 %722
      %724 = vrot.lane.b32.xlu0 %v683, 8
      %v725 = vpop.permute.xlu0 %724
      %726 = vrot.lane.b32.xlu0 %v685, 8
      %v727 = vpop.permute.xlu0 %726
      %728 = vrot.lane.b32.xlu0 %v687, 8
      %v729 = vpop.permute.xlu0 %728
      %730 = vrot.lane.b32.xlu0 %v689, 8
      %v731 = vpop.permute.xlu0 %730
      %732 = vrot.lane.b32.xlu0 %v688, 8
      %v733 = vpop.permute.xlu0 %732
      %v737 = vunpack.c.l.b16 %v303
      %v738 = vunpack.c.l.b16 %v304
      %v739 = vunpack.c.l.b16 %v305
      %v740 = vpack.c.b16 %v358, %v737
      %v741 = vpack.c.b16 %v738, %v644
      %v742 = vpack.c.b16 %v739, %v739
      %v743 = vrot.slane %v740, 1
      %v744 = vsel %vm646, %v743, %v650
      %v745 = vrot.slane %v741, 1
      %v746 = vsel %vm646, %v686, %v745
      %v747 = vrot.slane %v742, 1
      %v748 = vsel %vm646, %v745, %v747
      %749 = vrot.lane.b32.xlu0 %v744, 12
      %v750 = vpop.permute.xlu0 %749
      %751 = vrot.lane.b32.xlu0 %v653, 12
      %v752 = vpop.permute.xlu0 %751
      %753 = vrot.lane.b32.xlu0 %v655, 12
      %v754 = vpop.permute.xlu0 %753
      %755 = vrot.lane.b32.xlu0 %v657, 12
      %v756 = vpop.permute.xlu0 %755
      %757 = vrot.lane.b32.xlu0 %v659, 12
      %v758 = vpop.permute.xlu0 %757
      %759 = vrot.lane.b32.xlu0 %v661, 12
      %v760 = vpop.permute.xlu0 %759
      %761 = vrot.lane.b32.xlu0 %v663, 12
      %v762 = vpop.permute.xlu0 %761
      %763 = vrot.lane.b32.xlu0 %v665, 12
      %v764 = vpop.permute.xlu0 %763
      %765 = vrot.lane.b32.xlu0 %v667, 12
      %v766 = vpop.permute.xlu0 %765
      %767 = vrot.lane.b32.xlu0 %v669, 12
      %v768 = vpop.permute.xlu0 %767
      %769 = vrot.lane.b32.xlu0 %v671, 12
      %v770 = vpop.permute.xlu0 %769
      %771 = vrot.lane.b32.xlu0 %v673, 12
      %v772 = vpop.permute.xlu0 %771
      %773 = vrot.lane.b32.xlu0 %v675, 12
      %v774 = vpop.permute.xlu0 %773
      %775 = vrot.lane.b32.xlu0 %v677, 12
      %v776 = vpop.permute.xlu0 %775
      %777 = vrot.lane.b32.xlu0 %v679, 12
      %v778 = vpop.permute.xlu0 %777
      %779 = vrot.lane.b32.xlu0 %v681, 12
      %v780 = vpop.permute.xlu0 %779
      %781 = vrot.lane.b32.xlu0 %v683, 12
      %v782 = vpop.permute.xlu0 %781
      %783 = vrot.lane.b32.xlu0 %v685, 12
      %v784 = vpop.permute.xlu0 %783
      %785 = vrot.lane.b32.xlu0 %v687, 12
      %v786 = vpop.permute.xlu0 %785
      %787 = vrot.lane.b32.xlu0 %v746, 12
      %v788 = vpop.permute.xlu0 %787
      %789 = vrot.lane.b32.xlu0 %v748, 12
      %v790 = vpop.permute.xlu0 %789
      %791 = vrot.lane.b32.xlu0 %v747, 12
      %v792 = vpop.permute.xlu0 %791
      %v793 = vpack.c.b16 %v359, %v358
      %v794 = vpack.c.b16 %v361, %v360
      %v795 = vpack.c.b16 %v363, %v362
      %v796 = vpack.c.b16 %v365, %v364
      %v797 = vpack.c.b16 %v367, %v366
      %v798 = vpack.c.b16 %v369, %v368
      %v799 = vpack.c.b16 %v371, %v370
      %v800 = vpack.c.b16 %v373, %v372
      %v801 = vpack.c.b16 %v375, %v374
      %v802 = vpack.c.b16 %v377, %v376
      %v803 = vpack.c.b16 %v379, %v378
      %v804 = vpack.c.b16 %v381, %v380
      %v805 = vpack.c.b16 %v383, %v382
      %v806 = vpack.c.b16 %v385, %v384
      %v807 = vpack.c.b16 %v387, %v386
      %v808 = vpack.c.b16 %v389, %v388
      %v809 = vpack.c.b16 %v391, %v390
      %v810 = vpack.c.b16 %v393, %v392
      %v811 = vpack.c.b16 %v395, %v394
      %v812 = vpack.c.b16 %v644, %v396
      %v813 = vpack.c.b16 %v739, %v738
      %vm814 = vsmask.f32 2304
      %v816 = vshrl.u32 %v793, 16
      %v818 = vrot.slane %v816, 5
      %v819 = vshll.u32 %v793, 16
      %v821 = vrot.slane %v819, 6
      %v822 = vor.u32 %v818, %v821
      %v824 = vshrl.u32 %v794, 16
      %v826 = vrot.slane %v824, 5
      %v827 = vshll.u32 %v794, 16
      %v829 = vrot.slane %v827, 6
      %v830 = vor.u32 %v826, %v829
      %v831 = vsel %vm814, %v822, %v830
      %v833 = vshrl.u32 %v795, 16
      %v835 = vrot.slane %v833, 5
      %v836 = vshll.u32 %v795, 16
      %v838 = vrot.slane %v836, 6
      %v839 = vor.u32 %v835, %v838
      %v840 = vsel %vm814, %v830, %v839
      %v842 = vshrl.u32 %v796, 16
      %v844 = vrot.slane %v842, 5
      %v845 = vshll.u32 %v796, 16
      %v847 = vrot.slane %v845, 6
      %v848 = vor.u32 %v844, %v847
      %v849 = vsel %vm814, %v839, %v848
      %v851 = vshrl.u32 %v797, 16
      %v853 = vrot.slane %v851, 5
      %v854 = vshll.u32 %v797, 16
      %v856 = vrot.slane %v854, 6
      %v857 = vor.u32 %v853, %v856
      %v858 = vsel %vm814, %v848, %v857
      %v860 = vshrl.u32 %v798, 16
      %v862 = vrot.slane %v860, 5
      %v863 = vshll.u32 %v798, 16
      %v865 = vrot.slane %v863, 6
      %v866 = vor.u32 %v862, %v865
      %v867 = vsel %vm814, %v857, %v866
      %v869 = vshrl.u32 %v799, 16
      %v871 = vrot.slane %v869, 5
      %v872 = vshll.u32 %v799, 16
      %v874 = vrot.slane %v872, 6
      %v875 = vor.u32 %v871, %v874
      %v876 = vsel %vm814, %v866, %v875
      %v878 = vshrl.u32 %v800, 16
      %v880 = vrot.slane %v878, 5
      %v881 = vshll.u32 %v800, 16
      %v883 = vrot.slane %v881, 6
      %v884 = vor.u32 %v880, %v883
      %v885 = vsel %vm814, %v875, %v884
      %v887 = vshrl.u32 %v801, 16
      %v889 = vrot.slane %v887, 5
      %v890 = vshll.u32 %v801, 16
      %v892 = vrot.slane %v890, 6
      %v893 = vor.u32 %v889, %v892
      %v894 = vsel %vm814, %v884, %v893
      %v896 = vshrl.u32 %v802, 16
      %v898 = vrot.slane %v896, 5
      %v899 = vshll.u32 %v802, 16
      %v901 = vrot.slane %v899, 6
      %v902 = vor.u32 %v898, %v901
      %v903 = vsel %vm814, %v893, %v902
      %v905 = vshrl.u32 %v803, 16
      %v907 = vrot.slane %v905, 5
      %v908 = vshll.u32 %v803, 16
      %v910 = vrot.slane %v908, 6
      %v911 = vor.u32 %v907, %v910
      %v912 = vsel %vm814, %v902, %v911
      %v914 = vshrl.u32 %v804, 16
      %v916 = vrot.slane %v914, 5
      %v917 = vshll.u32 %v804, 16
      %v919 = vrot.slane %v917, 6
      %v920 = vor.u32 %v916, %v919
      %v921 = vsel %vm814, %v911, %v920
      %v923 = vshrl.u32 %v805, 16
      %v925 = vrot.slane %v923, 5
      %v926 = vshll.u32 %v805, 16
      %v928 = vrot.slane %v926, 6
      %v929 = vor.u32 %v925, %v928
      %v930 = vsel %vm814, %v920, %v929
      %v932 = vshrl.u32 %v806, 16
      %v934 = vrot.slane %v932, 5
      %v935 = vshll.u32 %v806, 16
      %v937 = vrot.slane %v935, 6
      %v938 = vor.u32 %v934, %v937
      %v939 = vsel %vm814, %v929, %v938
      %v941 = vshrl.u32 %v807, 16
      %v943 = vrot.slane %v941, 5
      %v944 = vshll.u32 %v807, 16
      %v946 = vrot.slane %v944, 6
      %v947 = vor.u32 %v943, %v946
      %v948 = vsel %vm814, %v938, %v947
      %v950 = vshrl.u32 %v808, 16
      %v952 = vrot.slane %v950, 5
      %v953 = vshll.u32 %v808, 16
      %v955 = vrot.slane %v953, 6
      %v956 = vor.u32 %v952, %v955
      %v957 = vsel %vm814, %v947, %v956
      %v959 = vshrl.u32 %v809, 16
      %v961 = vrot.slane %v959, 5
      %v962 = vshll.u32 %v809, 16
      %v964 = vrot.slane %v962, 6
      %v965 = vor.u32 %v961, %v964
      %v966 = vsel %vm814, %v956, %v965
      %v968 = vshrl.u32 %v810, 16
      %v970 = vrot.slane %v968, 5
      %v971 = vshll.u32 %v810, 16
      %v973 = vrot.slane %v971, 6
      %v974 = vor.u32 %v970, %v973
      %v975 = vsel %vm814, %v965, %v974
      %v977 = vshrl.u32 %v811, 16
      %v979 = vrot.slane %v977, 5
      %v980 = vshll.u32 %v811, 16
      %v982 = vrot.slane %v980, 6
      %v983 = vor.u32 %v979, %v982
      %v984 = vsel %vm814, %v974, %v983
      %v986 = vshrl.u32 %v812, 16
      %v988 = vrot.slane %v986, 5
      %v989 = vshll.u32 %v812, 16
      %v991 = vrot.slane %v989, 6
      %v992 = vor.u32 %v988, %v991
      %v993 = vsel %vm814, %v983, %v992
      %v995 = vshrl.u32 %v813, 16
      %v997 = vrot.slane %v995, 5
      %v998 = vshll.u32 %v813, 16
      %v1000 = vrot.slane %v998, 6
      %v1001 = vor.u32 %v997, %v1000
      %v1002 = vsel %vm814, %v992, %v1001
      %1003 = vrot.lane.b32.xlu0 %v822, 16
      %v1004 = vpop.permute.xlu0 %1003
      %1005 = vrot.lane.b32.xlu0 %v831, 16
      %v1006 = vpop.permute.xlu0 %1005
      %1007 = vrot.lane.b32.xlu0 %v840, 16
      %v1008 = vpop.permute.xlu0 %1007
      %1009 = vrot.lane.b32.xlu0 %v849, 16
      %v1010 = vpop.permute.xlu0 %1009
      %1011 = vrot.lane.b32.xlu0 %v858, 16
      %v1012 = vpop.permute.xlu0 %1011
      %1013 = vrot.lane.b32.xlu0 %v867, 16
      %v1014 = vpop.permute.xlu0 %1013
      %1015 = vrot.lane.b32.xlu0 %v876, 16
      %v1016 = vpop.permute.xlu0 %1015
      %1017 = vrot.lane.b32.xlu0 %v885, 16
      %v1018 = vpop.permute.xlu0 %1017
      %1019 = vrot.lane.b32.xlu0 %v894, 16
      %v1020 = vpop.permute.xlu0 %1019
      %1021 = vrot.lane.b32.xlu0 %v903, 16
      %v1022 = vpop.permute.xlu0 %1021
      %1023 = vrot.lane.b32.xlu0 %v912, 16
      %v1024 = vpop.permute.xlu0 %1023
      %1025 = vrot.lane.b32.xlu0 %v921, 16
      %v1026 = vpop.permute.xlu0 %1025
      %1027 = vrot.lane.b32.xlu0 %v930, 16
      %v1028 = vpop.permute.xlu0 %1027
      %1029 = vrot.lane.b32.xlu0 %v939, 16
      %v1030 = vpop.permute.xlu0 %1029
      %1031 = vrot.lane.b32.xlu0 %v948, 16
      %v1032 = vpop.permute.xlu0 %1031
      %1033 = vrot.lane.b32.xlu0 %v957, 16
      %v1034 = vpop.permute.xlu0 %1033
      %1035 = vrot.lane.b32.xlu0 %v966, 16
      %v1036 = vpop.permute.xlu0 %1035
      %1037 = vrot.lane.b32.xlu0 %v975, 16
      %v1038 = vpop.permute.xlu0 %1037
      %1039 = vrot.lane.b32.xlu0 %v984, 16
      %v1040 = vpop.permute.xlu0 %1039
      %1041 = vrot.lane.b32.xlu0 %v993, 16
      %v1042 = vpop.permute.xlu0 %1041
      %1043 = vrot.lane.b32.xlu0 %v1002, 16
      %v1044 = vpop.permute.xlu0 %1043
      %1045 = vrot.lane.b32.xlu0 %v1001, 16
      %v1046 = vpop.permute.xlu0 %1045
      %v1048 = vunpack.c.l.b16 %v306
      %v1049 = vpack.c.b16 %v1048, %v1048
      %vm1050 = vcmask 1041408
      %v1051 = vrot.slane %v793, 6
      %v1052 = vrot.slane %v794, 6
      %v1053 = vsel %vm1050, %v1051, %v1052
      %v1054 = vrot.slane %v795, 6
      %v1055 = vsel %vm1050, %v1052, %v1054
      %v1056 = vrot.slane %v796, 6
      %v1057 = vsel %vm1050, %v1054, %v1056
      %v1058 = vrot.slane %v797, 6
      %v1059 = vsel %vm1050, %v1056, %v1058
      %v1060 = vrot.slane %v798, 6
      %v1061 = vsel %vm1050, %v1058, %v1060
      %v1062 = vrot.slane %v799, 6
      %v1063 = vsel %vm1050, %v1060, %v1062
      %v1064 = vrot.slane %v800, 6
      %v1065 = vsel %vm1050, %v1062, %v1064
      %v1066 = vrot.slane %v801, 6
      %v1067 = vsel %vm1050, %v1064, %v1066
      %v1068 = vrot.slane %v802, 6
      %v1069 = vsel %vm1050, %v1066, %v1068
      %v1070 = vrot.slane %v803, 6
      %v1071 = vsel %vm1050, %v1068, %v1070
      %v1072 = vrot.slane %v804, 6
      %v1073 = vsel %vm1050, %v1070, %v1072
      %v1074 = vrot.slane %v805, 6
      %v1075 = vsel %vm1050, %v1072, %v1074
      %v1076 = vrot.slane %v806, 6
      %v1077 = vsel %vm1050, %v1074, %v1076
      %v1078 = vrot.slane %v807, 6
      %v1079 = vsel %vm1050, %v1076, %v1078
      %v1080 = vrot.slane %v808, 6
      %v1081 = vsel %vm1050, %v1078, %v1080
      %v1082 = vrot.slane %v809, 6
      %v1083 = vsel %vm1050, %v1080, %v1082
      %v1084 = vrot.slane %v810, 6
      %v1085 = vsel %vm1050, %v1082, %v1084
      %v1086 = vrot.slane %v811, 6
      %v1087 = vsel %vm1050, %v1084, %v1086
      %v1088 = vrot.slane %v812, 6
      %v1089 = vsel %vm1050, %v1086, %v1088
      %v1090 = vrot.slane %v813, 6
      %v1091 = vsel %vm1050, %v1088, %v1090
      %v1092 = vrot.slane %v1049, 6
      %v1093 = vsel %vm1050, %v1090, %v1092
      %1094 = vrot.lane.b32.xlu0 %v1051, 20
      %v1095 = vpop.permute.xlu0 %1094
      %1096 = vrot.lane.b32.xlu0 %v1053, 20
      %v1097 = vpop.permute.xlu0 %1096
      %1098 = vrot.lane.b32.xlu0 %v1055, 20
      %v1099 = vpop.permute.xlu0 %1098
      %1100 = vrot.lane.b32.xlu0 %v1057, 20
      %v1101 = vpop.permute.xlu0 %1100
      %1102 = vrot.lane.b32.xlu0 %v1059, 20
      %v1103 = vpop.permute.xlu0 %1102
      %1104 = vrot.lane.b32.xlu0 %v1061, 20
      %v1105 = vpop.permute.xlu0 %1104
      %1106 = vrot.lane.b32.xlu0 %v1063, 20
      %v1107 = vpop.permute.xlu0 %1106
      %1108 = vrot.lane.b32.xlu0 %v1065, 20
      %v1109 = vpop.permute.xlu0 %1108
      %1110 = vrot.lane.b32.xlu0 %v1067, 20
      %v1111 = vpop.permute.xlu0 %1110
      %1112 = vrot.lane.b32.xlu0 %v1069, 20
      %v1113 = vpop.permute.xlu0 %1112
      %1114 = vrot.lane.b32.xlu0 %v1071, 20
      %v1115 = vpop.permute.xlu0 %1114
      %1116 = vrot.lane.b32.xlu0 %v1073, 20
      %v1117 = vpop.permute.xlu0 %1116
      %1118 = vrot.lane.b32.xlu0 %v1075, 20
      %v1119 = vpop.permute.xlu0 %1118
      %1120 = vrot.lane.b32.xlu0 %v1077, 20
      %v1121 = vpop.permute.xlu0 %1120
      %1122 = vrot.lane.b32.xlu0 %v1079, 20
      %v1123 = vpop.permute.xlu0 %1122
      %1124 = vrot.lane.b32.xlu0 %v1081, 20
      %v1125 = vpop.permute.xlu0 %1124
      %1126 = vrot.lane.b32.xlu0 %v1083, 20
      %v1127 = vpop.permute.xlu0 %1126
      %1128 = vrot.lane.b32.xlu0 %v1085, 20
      %v1129 = vpop.permute.xlu0 %1128
      %1130 = vrot.lane.b32.xlu0 %v1087, 20
      %v1131 = vpop.permute.xlu0 %1130
      %1132 = vrot.lane.b32.xlu0 %v1089, 20
      %v1133 = vpop.permute.xlu0 %1132
      %1134 = vrot.lane.b32.xlu0 %v1091, 20
      %v1135 = vpop.permute.xlu0 %1134
      %1136 = vrot.lane.b32.xlu0 %v1093, 20
      %v1137 = vpop.permute.xlu0 %1136
      %v1141 = vunpack.c.l.b16 %v307
      %v1142 = vunpack.c.l.b16 %v308
      %v1143 = vunpack.c.l.b16 %v309
      %v1144 = vpack.c.b16 %v1142, %v1141
      %v1145 = vpack.c.b16 %v1143, %v1143
      %v1146 = vrot.slane %v1144, 6
      %v1147 = vsel %vm1050, %v1090, %v1146
      %v1148 = vrot.slane %v1145, 6
      %v1149 = vsel %vm1050, %v1146, %v1148
      %1150 = vrot.lane.b32.xlu0 %v1052, 24
      %v1151 = vpop.permute.xlu0 %1150
      %1152 = vrot.lane.b32.xlu0 %v1055, 24
      %v1153 = vpop.permute.xlu0 %1152
      %1154 = vrot.lane.b32.xlu0 %v1057, 24
      %v1155 = vpop.permute.xlu0 %1154
      %1156 = vrot.lane.b32.xlu0 %v1059, 24
      %v1157 = vpop.permute.xlu0 %1156
      %1158 = vrot.lane.b32.xlu0 %v1061, 24
      %v1159 = vpop.permute.xlu0 %1158
      %1160 = vrot.lane.b32.xlu0 %v1063, 24
      %v1161 = vpop.permute.xlu0 %1160
      %1162 = vrot.lane.b32.xlu0 %v1065, 24
      %v1163 = vpop.permute.xlu0 %1162
      %1164 = vrot.lane.b32.xlu0 %v1067, 24
      %v1165 = vpop.permute.xlu0 %1164
      %1166 = vrot.lane.b32.xlu0 %v1069, 24
      %v1167 = vpop.permute.xlu0 %1166
      %1168 = vrot.lane.b32.xlu0 %v1071, 24
      %v1169 = vpop.permute.xlu0 %1168
      %1170 = vrot.lane.b32.xlu0 %v1073, 24
      %v1171 = vpop.permute.xlu0 %1170
      %1172 = vrot.lane.b32.xlu0 %v1075, 24
      %v1173 = vpop.permute.xlu0 %1172
      %1174 = vrot.lane.b32.xlu0 %v1077, 24
      %v1175 = vpop.permute.xlu0 %1174
      %1176 = vrot.lane.b32.xlu0 %v1079, 24
      %v1177 = vpop.permute.xlu0 %1176
      %1178 = vrot.lane.b32.xlu0 %v1081, 24
      %v1179 = vpop.permute.xlu0 %1178
      %1180 = vrot.lane.b32.xlu0 %v1083, 24
      %v1181 = vpop.permute.xlu0 %1180
      %1182 = vrot.lane.b32.xlu0 %v1085, 24
      %v1183 = vpop.permute.xlu0 %1182
      %1184 = vrot.lane.b32.xlu0 %v1087, 24
      %v1185 = vpop.permute.xlu0 %1184
      %1186 = vrot.lane.b32.xlu0 %v1089, 24
      %v1187 = vpop.permute.xlu0 %1186
      %1188 = vrot.lane.b32.xlu0 %v1091, 24
      %v1189 = vpop.permute.xlu0 %1188
      %1190 = vrot.lane.b32.xlu0 %v1147, 24
      %v1191 = vpop.permute.xlu0 %1190
      %1192 = vrot.lane.b32.xlu0 %v1149, 24
      %v1193 = vpop.permute.xlu0 %1192
      %v1195 = vunpack.c.l.b16 %v310
      %v1196 = vpack.c.b16 %v361, %v1195
      %vm1197 = vsmask.f32 1280
      %v1199 = vshrl.u32 %v1196, 16
      %v1201 = vrot.slane %v1199, 6
      %v1202 = vshll.u32 %v1196, 16
      %v1204 = vrot.slane %v1202, 7
      %v1205 = vor.u32 %v1201, %v1204
      %v1206 = vrot.slane %v833, 6
      %v1207 = vrot.slane %v836, 7
      %v1208 = vor.u32 %v1206, %v1207
      %v1209 = vsel %vm1197, %v1205, %v1208
      %v1210 = vrot.slane %v842, 6
      %v1211 = vrot.slane %v845, 7
      %v1212 = vor.u32 %v1210, %v1211
      %v1213 = vsel %vm1197, %v1208, %v1212
      %v1214 = vrot.slane %v851, 6
      %v1215 = vrot.slane %v854, 7
      %v1216 = vor.u32 %v1214, %v1215
      %v1217 = vsel %vm1197, %v1212, %v1216
      %v1218 = vrot.slane %v860, 6
      %v1219 = vrot.slane %v863, 7
      %v1220 = vor.u32 %v1218, %v1219
      %v1221 = vsel %vm1197, %v1216, %v1220
      %v1222 = vrot.slane %v869, 6
      %v1223 = vrot.slane %v872, 7
      %v1224 = vor.u32 %v1222, %v1223
      %v1225 = vsel %vm1197, %v1220, %v1224
      %v1226 = vrot.slane %v878, 6
      %v1227 = vrot.slane %v881, 7
      %v1228 = vor.u32 %v1226, %v1227
      %v1229 = vsel %vm1197, %v1224, %v1228
      %v1230 = vrot.slane %v887, 6
      %v1231 = vrot.slane %v890, 7
      %v1232 = vor.u32 %v1230, %v1231
      %v1233 = vsel %vm1197, %v1228, %v1232
      %v1234 = vrot.slane %v896, 6
      %v1235 = vrot.slane %v899, 7
      %v1236 = vor.u32 %v1234, %v1235
      %v1237 = vsel %vm1197, %v1232, %v1236
      %v1238 = vrot.slane %v905, 6
      %v1239 = vrot.slane %v908, 7
      %v1240 = vor.u32 %v1238, %v1239
      %v1241 = vsel %vm1197, %v1236, %v1240
      %v1242 = vrot.slane %v914, 6
      %v1243 = vrot.slane %v917, 7
      %v1244 = vor.u32 %v1242, %v1243
      %v1245 = vsel %vm1197, %v1240, %v1244
      %v1246 = vrot.slane %v923, 6
      %v1247 = vrot.slane %v926, 7
      %v1248 = vor.u32 %v1246, %v1247
      %v1249 = vsel %vm1197, %v1244, %v1248
      %v1250 = vrot.slane %v932, 6
      %v1251 = vrot.slane %v935, 7
      %v1252 = vor.u32 %v1250, %v1251
      %v1253 = vsel %vm1197, %v1248, %v1252
      %v1254 = vrot.slane %v941, 6
      %v1255 = vrot.slane %v944, 7
      %v1256 = vor.u32 %v1254, %v1255
      %v1257 = vsel %vm1197, %v1252, %v1256
      %v1258 = vrot.slane %v950, 6
      %v1259 = vrot.slane %v953, 7
      %v1260 = vor.u32 %v1258, %v1259
      %v1261 = vsel %vm1197, %v1256, %v1260
      %v1262 = vrot.slane %v959, 6
      %v1263 = vrot.slane %v962, 7
      %v1264 = vor.u32 %v1262, %v1263
      %v1265 = vsel %vm1197, %v1260, %v1264
      %v1266 = vrot.slane %v968, 6
      %v1267 = vrot.slane %v971, 7
      %v1268 = vor.u32 %v1266, %v1267
      %v1269 = vsel %vm1197, %v1264, %v1268
      %v1270 = vrot.slane %v977, 6
      %v1271 = vrot.slane %v980, 7
      %v1272 = vor.u32 %v1270, %v1271
      %v1273 = vsel %vm1197, %v1268, %v1272
      %v1274 = vrot.slane %v986, 6
      %v1275 = vrot.slane %v989, 7
      %v1276 = vor.u32 %v1274, %v1275
      %v1277 = vsel %vm1197, %v1272, %v1276
      %v1278 = vrot.slane %v995, 6
      %v1279 = vrot.slane %v998, 7
      %v1280 = vor.u32 %v1278, %v1279
      %v1281 = vsel %vm1197, %v1276, %v1280
      %v1283 = vshrl.u32 %v1144, 16
      %v1285 = vrot.slane %v1283, 6
      %v1286 = vshll.u32 %v1144, 16
      %v1288 = vrot.slane %v1286, 7
      %v1289 = vor.u32 %v1285, %v1288
      %v1290 = vsel %vm1197, %v1280, %v1289
      %v1292 = vshrl.u32 %v1145, 16
      %v1294 = vrot.slane %v1292, 6
      %v1295 = vshll.u32 %v1145, 16
      %v1297 = vrot.slane %v1295, 7
      %v1298 = vor.u32 %v1294, %v1297
      %v1299 = vsel %vm1197, %v1289, %v1298
      %1300 = vrot.lane.b32.xlu0 %v1205, 28
      %v1301 = vpop.permute.xlu0 %1300
      %1302 = vrot.lane.b32.xlu0 %v1209, 28
      %v1303 = vpop.permute.xlu0 %1302
      %1304 = vrot.lane.b32.xlu0 %v1213, 28
      %v1305 = vpop.permute.xlu0 %1304
      %1306 = vrot.lane.b32.xlu0 %v1217, 28
      %v1307 = vpop.permute.xlu0 %1306
      %1308 = vrot.lane.b32.xlu0 %v1221, 28
      %v1309 = vpop.permute.xlu0 %1308
      %1310 = vrot.lane.b32.xlu0 %v1225, 28
      %v1311 = vpop.permute.xlu0 %1310
      %1312 = vrot.lane.b32.xlu0 %v1229, 28
      %v1313 = vpop.permute.xlu0 %1312
      %1314 = vrot.lane.b32.xlu0 %v1233, 28
      %v1315 = vpop.permute.xlu0 %1314
      %1316 = vrot.lane.b32.xlu0 %v1237, 28
      %v1317 = vpop.permute.xlu0 %1316
      %1318 = vrot.lane.b32.xlu0 %v1241, 28
      %v1319 = vpop.permute.xlu0 %1318
      %1320 = vrot.lane.b32.xlu0 %v1245, 28
      %v1321 = vpop.permute.xlu0 %1320
      %1322 = vrot.lane.b32.xlu0 %v1249, 28
      %v1323 = vpop.permute.xlu0 %1322
      %1324 = vrot.lane.b32.xlu0 %v1253, 28
      %v1325 = vpop.permute.xlu0 %1324
      %1326 = vrot.lane.b32.xlu0 %v1257, 28
      %v1327 = vpop.permute.xlu0 %1326
      %1328 = vrot.lane.b32.xlu0 %v1261, 28
      %v1329 = vpop.permute.xlu0 %1328
      %1330 = vrot.lane.b32.xlu0 %v1265, 28
      %v1331 = vpop.permute.xlu0 %1330
      %1332 = vrot.lane.b32.xlu0 %v1269, 28
      %v1333 = vpop.permute.xlu0 %1332
      %1334 = vrot.lane.b32.xlu0 %v1273, 28
      %v1335 = vpop.permute.xlu0 %1334
      %1336 = vrot.lane.b32.xlu0 %v1277, 28
      %v1337 = vpop.permute.xlu0 %1336
      %1338 = vrot.lane.b32.xlu0 %v1281, 28
      %v1339 = vpop.permute.xlu0 %1338
      %1340 = vrot.lane.b32.xlu0 %v1290, 28
      %v1341 = vpop.permute.xlu0 %1340
      %1342 = vrot.lane.b32.xlu0 %v1299, 28
      %v1343 = vpop.permute.xlu0 %1342
      %v1345 = vunpack.c.l.b16 %v311
      %v1346 = vpack.c.b16 %v1345, %v1345
      %vm1347 = vcmask 1040384
      %v1348 = vrot.slane %v1196, 7
      %v1349 = vrot.slane %v795, 7
      %v1350 = vsel %vm1347, %v1348, %v1349
      %v1351 = vrot.slane %v796, 7
      %v1352 = vsel %vm1347, %v1349, %v1351
      %v1353 = vrot.slane %v797, 7
      %v1354 = vsel %vm1347, %v1351, %v1353
      %v1355 = vrot.slane %v798, 7
      %v1356 = vsel %vm1347, %v1353, %v1355
      %v1357 = vrot.slane %v799, 7
      %v1358 = vsel %vm1347, %v1355, %v1357
      %v1359 = vrot.slane %v800, 7
      %v1360 = vsel %vm1347, %v1357, %v1359
      %v1361 = vrot.slane %v801, 7
      %v1362 = vsel %vm1347, %v1359, %v1361
      %v1363 = vrot.slane %v802, 7
      %v1364 = vsel %vm1347, %v1361, %v1363
      %v1365 = vrot.slane %v803, 7
      %v1366 = vsel %vm1347, %v1363, %v1365
      %v1367 = vrot.slane %v804, 7
      %v1368 = vsel %vm1347, %v1365, %v1367
      %v1369 = vrot.slane %v805, 7
      %v1370 = vsel %vm1347, %v1367, %v1369
      %v1371 = vrot.slane %v806, 7
      %v1372 = vsel %vm1347, %v1369, %v1371
      %v1373 = vrot.slane %v807, 7
      %v1374 = vsel %vm1347, %v1371, %v1373
      %v1375 = vrot.slane %v808, 7
      %v1376 = vsel %vm1347, %v1373, %v1375
      %v1377 = vrot.slane %v809, 7
      %v1378 = vsel %vm1347, %v1375, %v1377
      %v1379 = vrot.slane %v810, 7
      %v1380 = vsel %vm1347, %v1377, %v1379
      %v1381 = vrot.slane %v811, 7
      %v1382 = vsel %vm1347, %v1379, %v1381
      %v1383 = vrot.slane %v812, 7
      %v1384 = vsel %vm1347, %v1381, %v1383
      %v1385 = vrot.slane %v813, 7
      %v1386 = vsel %vm1347, %v1383, %v1385
      %v1387 = vrot.slane %v1144, 7
      %v1388 = vsel %vm1347, %v1385, %v1387
      %v1389 = vrot.slane %v1346, 7
      %v1390 = vsel %vm1347, %v1387, %v1389
      %1391 = vrot.lane.b32.xlu0 %v1348, 32
      %v1392 = vpop.permute.xlu0 %1391
      %1393 = vrot.lane.b32.xlu0 %v1350, 32
      %v1394 = vpop.permute.xlu0 %1393
      %1395 = vrot.lane.b32.xlu0 %v1352, 32
      %v1396 = vpop.permute.xlu0 %1395
      %1397 = vrot.lane.b32.xlu0 %v1354, 32
      %v1398 = vpop.permute.xlu0 %1397
      %1399 = vrot.lane.b32.xlu0 %v1356, 32
      %v1400 = vpop.permute.xlu0 %1399
      %1401 = vrot.lane.b32.xlu0 %v1358, 32
      %v1402 = vpop.permute.xlu0 %1401
      %1403 = vrot.lane.b32.xlu0 %v1360, 32
      %v1404 = vpop.permute.xlu0 %1403
      %1405 = vrot.lane.b32.xlu0 %v1362, 32
      %v1406 = vpop.permute.xlu0 %1405
      %1407 = vrot.lane.b32.xlu0 %v1364, 32
      %v1408 = vpop.permute.xlu0 %1407
      %1409 = vrot.lane.b32.xlu0 %v1366, 32
      %v1410 = vpop.permute.xlu0 %1409
      %1411 = vrot.lane.b32.xlu0 %v1368, 32
      %v1412 = vpop.permute.xlu0 %1411
      %1413 = vrot.lane.b32.xlu0 %v1370, 32
      %v1414 = vpop.permute.xlu0 %1413
      %1415 = vrot.lane.b32.xlu0 %v1372, 32
      %v1416 = vpop.permute.xlu0 %1415
      %1417 = vrot.lane.b32.xlu0 %v1374, 32
      %v1418 = vpop.permute.xlu0 %1417
      %1419 = vrot.lane.b32.xlu0 %v1376, 32
      %v1420 = vpop.permute.xlu0 %1419
      %1421 = vrot.lane.b32.xlu0 %v1378, 32
      %v1422 = vpop.permute.xlu0 %1421
      %1423 = vrot.lane.b32.xlu0 %v1380, 32
      %v1424 = vpop.permute.xlu0 %1423
      %1425 = vrot.lane.b32.xlu0 %v1382, 32
      %v1426 = vpop.permute.xlu0 %1425
      %1427 = vrot.lane.b32.xlu0 %v1384, 32
      %v1428 = vpop.permute.xlu0 %1427
      %1429 = vrot.lane.b32.xlu0 %v1386, 32
      %v1430 = vpop.permute.xlu0 %1429
      %1431 = vrot.lane.b32.xlu0 %v1388, 32
      %v1432 = vpop.permute.xlu0 %1431
      %1433 = vrot.lane.b32.xlu0 %v1390, 32
      %v1434 = vpop.permute.xlu0 %1433
      %vm1435 = vcmask 31744
      %v1438 = vsel %vm1435, %v398, %v600
      %v1440 = vsel %vm1435, %v399, %v602
      %v1442 = vsel %vm1435, %v400, %v604
      %v1444 = vsel %vm1435, %v401, %v606
      %v1446 = vsel %vm1435, %v402, %v608
      %v1448 = vsel %vm1435, %v403, %v610
      %v1450 = vsel %vm1435, %v404, %v612
      %v1452 = vsel %vm1435, %v405, %v614
      %v1454 = vsel %vm1435, %v406, %v616
      %v1456 = vsel %vm1435, %v407, %v618
      %v1458 = vsel %vm1435, %v408, %v620
      %v1460 = vsel %vm1435, %v409, %v622
      %v1462 = vsel %vm1435, %v410, %v624
      %v1464 = vsel %vm1435, %v411, %v626
      %v1466 = vsel %vm1435, %v412, %v628
      %v1468 = vsel %vm1435, %v413, %v630
      %v1470 = vsel %vm1435, %v414, %v632
      %v1472 = vsel %vm1435, %v415, %v634
      %v1474 = vsel %vm1435, %v416, %v636
      %v1476 = vsel %vm1435, %v417, %v638
      %v1478 = vsel %vm1435, %v418, %v640
      %v1480 = vsel %vm1435, %v419, %v642
      %vm1481 = vcmask 64512
      %v1483 = vsel %vm1481, %v1438, %v691
      %v1485 = vsel %vm1481, %v1440, %v693
      %v1487 = vsel %vm1481, %v1442, %v695
      %v1489 = vsel %vm1481, %v1444, %v697
      %v1491 = vsel %vm1481, %v1446, %v699
      %v1493 = vsel %vm1481, %v1448, %v701
      %v1495 = vsel %vm1481, %v1450, %v703
      %v1497 = vsel %vm1481, %v1452, %v705
      %v1499 = vsel %vm1481, %v1454, %v707
      %v1501 = vsel %vm1481, %v1456, %v709
      %v1503 = vsel %vm1481, %v1458, %v711
      %v1505 = vsel %vm1481, %v1460, %v713
      %v1507 = vsel %vm1481, %v1462, %v715
      %v1509 = vsel %vm1481, %v1464, %v717
      %v1511 = vsel %vm1481, %v1466, %v719
      %v1513 = vsel %vm1481, %v1468, %v721
      %v1515 = vsel %vm1481, %v1470, %v723
      %v1517 = vsel %vm1481, %v1472, %v725
      %v1519 = vsel %vm1481, %v1474, %v727
      %v1521 = vsel %vm1481, %v1476, %v729
      %v1523 = vsel %vm1481, %v1478, %v731
      %v1525 = vsel %vm1481, %v1480, %v733
      %vm1526 = vcmask 97280
      %v1528 = vsel %vm1526, %v1483, %v750
      %v1530 = vsel %vm1526, %v1485, %v752
      %v1532 = vsel %vm1526, %v1487, %v754
      %v1534 = vsel %vm1526, %v1489, %v756
      %v1536 = vsel %vm1526, %v1491, %v758
      %v1538 = vsel %vm1526, %v1493, %v760
      %v1540 = vsel %vm1526, %v1495, %v762
      %v1542 = vsel %vm1526, %v1497, %v764
      %v1544 = vsel %vm1526, %v1499, %v766
      %v1546 = vsel %vm1526, %v1501, %v768
      %v1548 = vsel %vm1526, %v1503, %v770
      %v1550 = vsel %vm1526, %v1505, %v772
      %v1552 = vsel %vm1526, %v1507, %v774
      %v1554 = vsel %vm1526, %v1509, %v776
      %v1556 = vsel %vm1526, %v1511, %v778
      %v1558 = vsel %vm1526, %v1513, %v780
      %v1560 = vsel %vm1526, %v1515, %v782
      %v1562 = vsel %vm1526, %v1517, %v784
      %v1564 = vsel %vm1526, %v1519, %v786
      %v1566 = vsel %vm1526, %v1521, %v788
      %v1568 = vsel %vm1526, %v1523, %v790
      %v1570 = vsel %vm1526, %v1525, %v792
      %vm1571 = vcmask 130048
      %v1573 = vsel %vm1571, %v1528, %v1004
      %v1575 = vsel %vm1571, %v1530, %v1006
      %v1577 = vsel %vm1571, %v1532, %v1008
      %v1579 = vsel %vm1571, %v1534, %v1010
      %v1581 = vsel %vm1571, %v1536, %v1012
      %v1583 = vsel %vm1571, %v1538, %v1014
      %v1585 = vsel %vm1571, %v1540, %v1016
      %v1587 = vsel %vm1571, %v1542, %v1018
      %v1589 = vsel %vm1571, %v1544, %v1020
      %v1591 = vsel %vm1571, %v1546, %v1022
      %v1593 = vsel %vm1571, %v1548, %v1024
      %v1595 = vsel %vm1571, %v1550, %v1026
      %v1597 = vsel %vm1571, %v1552, %v1028
      %v1599 = vsel %vm1571, %v1554, %v1030
      %v1601 = vsel %vm1571, %v1556, %v1032
      %v1603 = vsel %vm1571, %v1558, %v1034
      %v1605 = vsel %vm1571, %v1560, %v1036
      %v1607 = vsel %vm1571, %v1562, %v1038
      %v1609 = vsel %vm1571, %v1564, %v1040
      %v1611 = vsel %vm1571, %v1566, %v1042
      %v1613 = vsel %vm1571, %v1568, %v1044
      %v1615 = vsel %vm1571, %v1570, %v1046
      %vm1616 = vcmask 162816
      %v1618 = vsel %vm1616, %v1573, %v1095
      %v1620 = vsel %vm1616, %v1575, %v1097
      %v1622 = vsel %vm1616, %v1577, %v1099
      %v1624 = vsel %vm1616, %v1579, %v1101
      %v1626 = vsel %vm1616, %v1581, %v1103
      %v1628 = vsel %vm1616, %v1583, %v1105
      %v1630 = vsel %vm1616, %v1585, %v1107
      %v1632 = vsel %vm1616, %v1587, %v1109
      %v1634 = vsel %vm1616, %v1589, %v1111
      %v1636 = vsel %vm1616, %v1591, %v1113
      %v1638 = vsel %vm1616, %v1593, %v1115
      %v1640 = vsel %vm1616, %v1595, %v1117
      %v1642 = vsel %vm1616, %v1597, %v1119
      %v1644 = vsel %vm1616, %v1599, %v1121
      %v1646 = vsel %vm1616, %v1601, %v1123
      %v1648 = vsel %vm1616, %v1603, %v1125
      %v1650 = vsel %vm1616, %v1605, %v1127
      %v1652 = vsel %vm1616, %v1607, %v1129
      %v1654 = vsel %vm1616, %v1609, %v1131
      %v1656 = vsel %vm1616, %v1611, %v1133
      %v1658 = vsel %vm1616, %v1613, %v1135
      %v1660 = vsel %vm1616, %v1615, %v1137
      %vm1661 = vcmask 195584
      %v1663 = vsel %vm1661, %v1618, %v1151
      %v1665 = vsel %vm1661, %v1620, %v1153
      %v1667 = vsel %vm1661, %v1622, %v1155
      %v1669 = vsel %vm1661, %v1624, %v1157
      %v1671 = vsel %vm1661, %v1626, %v1159
      %v1673 = vsel %vm1661, %v1628, %v1161
      %v1675 = vsel %vm1661, %v1630, %v1163
      %v1677 = vsel %vm1661, %v1632, %v1165
      %v1679 = vsel %vm1661, %v1634, %v1167
      %v1681 = vsel %vm1661, %v1636, %v1169
      %v1683 = vsel %vm1661, %v1638, %v1171
      %v1685 = vsel %vm1661, %v1640, %v1173
      %v1687 = vsel %vm1661, %v1642, %v1175
      %v1689 = vsel %vm1661, %v1644, %v1177
      %v1691 = vsel %vm1661, %v1646, %v1179
      %v1693 = vsel %vm1661, %v1648, %v1181
      %v1695 = vsel %vm1661, %v1650, %v1183
      %v1697 = vsel %vm1661, %v1652, %v1185
      %v1699 = vsel %vm1661, %v1654, %v1187
      %v1701 = vsel %vm1661, %v1656, %v1189
      %v1703 = vsel %vm1661, %v1658, %v1191
      %v1705 = vsel %vm1661, %v1660, %v1193
      %vm1706 = vcmask 228352
      %v1708 = vsel %vm1706, %v1663, %v1301
      %v1710 = vsel %vm1706, %v1665, %v1303
      %v1712 = vsel %vm1706, %v1667, %v1305
      %v1714 = vsel %vm1706, %v1669, %v1307
      %v1716 = vsel %vm1706, %v1671, %v1309
      %v1718 = vsel %vm1706, %v1673, %v1311
      %v1720 = vsel %vm1706, %v1675, %v1313
      %v1722 = vsel %vm1706, %v1677, %v1315
      %v1724 = vsel %vm1706, %v1679, %v1317
      %v1726 = vsel %vm1706, %v1681, %v1319
      %v1728 = vsel %vm1706, %v1683, %v1321
      %v1730 = vsel %vm1706, %v1685, %v1323
      %v1732 = vsel %vm1706, %v1687, %v1325
      %v1734 = vsel %vm1706, %v1689, %v1327
      %v1736 = vsel %vm1706, %v1691, %v1329
      %v1738 = vsel %vm1706, %v1693, %v1331
      %v1740 = vsel %vm1706, %v1695, %v1333
      %v1742 = vsel %vm1706, %v1697, %v1335
      %v1744 = vsel %vm1706, %v1699, %v1337
      %v1746 = vsel %vm1706, %v1701, %v1339
      %v1748 = vsel %vm1706, %v1703, %v1341
      %v1750 = vsel %vm1706, %v1705, %v1343
      %vm1751 = vcmask 261120
      %v1753 = vsel %vm1751, %v1708, %v1392
      %v1755 = vsel %vm1751, %v1710, %v1394
      %v1757 = vsel %vm1751, %v1712, %v1396
      %v1759 = vsel %vm1751, %v1714, %v1398
      %v1761 = vsel %vm1751, %v1716, %v1400
      %v1763 = vsel %vm1751, %v1718, %v1402
      %v1765 = vsel %vm1751, %v1720, %v1404
      %v1767 = vsel %vm1751, %v1722, %v1406
      %v1769 = vsel %vm1751, %v1724, %v1408
      %v1771 = vsel %vm1751, %v1726, %v1410
      %v1773 = vsel %vm1751, %v1728, %v1412
      %v1775 = vsel %vm1751, %v1730, %v1414
      %v1777 = vsel %vm1751, %v1732, %v1416
      %v1779 = vsel %vm1751, %v1734, %v1418
      %v1781 = vsel %vm1751, %v1736, %v1420
      %v1783 = vsel %vm1751, %v1738, %v1422
      %v1785 = vsel %vm1751, %v1740, %v1424
      %v1787 = vsel %vm1751, %v1742, %v1426
      %v1789 = vsel %vm1751, %v1744, %v1428
      %v1791 = vsel %vm1751, %v1746, %v1430
      %v1793 = vsel %vm1751, %v1748, %v1432
      %v1795 = vsel %vm1751, %v1750, %v1434
      %v1796 = vld [vmem:[%s1] sm:$0xff]
      %v1797 = vld [vmem:[%s1 + $0x8] sm:$0xff]
      %v1798 = vld [vmem:[%s1 + $0x10] sm:$0xff]
      %v1799 = vld [vmem:[%s1 + $0x18] sm:$0xff]
      %v1800 = vld [vmem:[%s1 + $0x20] sm:$0x33]
      %vm1801 = vsmask.f32 5376
      %v1802 = vshrl.u32 %v1753, 16
      %v1804 = vrot.slane %v1802, 2
      %v1805 = vshll.u32 %v1753, 16
      %v1807 = vrot.slane %v1805, 3
      %v1808 = vor.u32 %v1804, %v1807
      %v1809 = vshrl.u32 %v1755, 16
      %v1811 = vrot.slane %v1809, 2
      %v1812 = vshll.u32 %v1755, 16
      %v1814 = vrot.slane %v1812, 3
      %v1815 = vor.u32 %v1811, %v1814
      %v1816 = vsel %vm1801, %v1808, %v1815
      %v1817 = vshrl.u32 %v1757, 16
      %v1819 = vrot.slane %v1817, 2
      %v1820 = vshll.u32 %v1757, 16
      %v1822 = vrot.slane %v1820, 3
      %v1823 = vor.u32 %v1819, %v1822
      %v1824 = vsel %vm1801, %v1815, %v1823
      %v1825 = vshrl.u32 %v1759, 16
      %v1827 = vrot.slane %v1825, 2
      %v1828 = vshll.u32 %v1759, 16
      %v1830 = vrot.slane %v1828, 3
      %v1831 = vor.u32 %v1827, %v1830
      %v1832 = vsel %vm1801, %v1823, %v1831
      %v1833 = vshrl.u32 %v1761, 16
      %v1835 = vrot.slane %v1833, 2
      %v1836 = vshll.u32 %v1761, 16
      %v1838 = vrot.slane %v1836, 3
      %v1839 = vor.u32 %v1835, %v1838
      %v1840 = vsel %vm1801, %v1831, %v1839
      %v1841 = vshrl.u32 %v1763, 16
      %v1843 = vrot.slane %v1841, 2
      %v1844 = vshll.u32 %v1763, 16
      %v1846 = vrot.slane %v1844, 3
      %v1847 = vor.u32 %v1843, %v1846
      %v1848 = vsel %vm1801, %v1839, %v1847
      %v1849 = vshrl.u32 %v1765, 16
      %v1851 = vrot.slane %v1849, 2
      %v1852 = vshll.u32 %v1765, 16
      %v1854 = vrot.slane %v1852, 3
      %v1855 = vor.u32 %v1851, %v1854
      %v1856 = vsel %vm1801, %v1847, %v1855
      %v1857 = vshrl.u32 %v1767, 16
      %v1859 = vrot.slane %v1857, 2
      %v1860 = vshll.u32 %v1767, 16
      %v1862 = vrot.slane %v1860, 3
      %v1863 = vor.u32 %v1859, %v1862
      %v1864 = vsel %vm1801, %v1855, %v1863
      %v1865 = vshrl.u32 %v1769, 16
      %v1867 = vrot.slane %v1865, 2
      %v1868 = vshll.u32 %v1769, 16
      %v1870 = vrot.slane %v1868, 3
      %v1871 = vor.u32 %v1867, %v1870
      %v1872 = vsel %vm1801, %v1863, %v1871
      %v1873 = vshrl.u32 %v1771, 16
      %v1875 = vrot.slane %v1873, 2
      %v1876 = vshll.u32 %v1771, 16
      %v1878 = vrot.slane %v1876, 3
      %v1879 = vor.u32 %v1875, %v1878
      %v1880 = vsel %vm1801, %v1871, %v1879
      %v1881 = vshrl.u32 %v1773, 16
      %v1883 = vrot.slane %v1881, 2
      %v1884 = vshll.u32 %v1773, 16
      %v1886 = vrot.slane %v1884, 3
      %v1887 = vor.u32 %v1883, %v1886
      %v1888 = vsel %vm1801, %v1879, %v1887
      %v1889 = vshrl.u32 %v1775, 16
      %v1891 = vrot.slane %v1889, 2
      %v1892 = vshll.u32 %v1775, 16
      %v1894 = vrot.slane %v1892, 3
      %v1895 = vor.u32 %v1891, %v1894
      %v1896 = vsel %vm1801, %v1887, %v1895
      %v1897 = vshrl.u32 %v1777, 16
      %v1899 = vrot.slane %v1897, 2
      %v1900 = vshll.u32 %v1777, 16
      %v1902 = vrot.slane %v1900, 3
      %v1903 = vor.u32 %v1899, %v1902
      %v1904 = vsel %vm1801, %v1895, %v1903
      %v1905 = vshrl.u32 %v1779, 16
      %v1907 = vrot.slane %v1905, 2
      %v1908 = vshll.u32 %v1779, 16
      %v1910 = vrot.slane %v1908, 3
      %v1911 = vor.u32 %v1907, %v1910
      %v1912 = vsel %vm1801, %v1903, %v1911
      %v1913 = vshrl.u32 %v1781, 16
      %v1915 = vrot.slane %v1913, 2
      %v1916 = vshll.u32 %v1781, 16
      %v1918 = vrot.slane %v1916, 3
      %v1919 = vor.u32 %v1915, %v1918
      %v1920 = vsel %vm1801, %v1911, %v1919
      %v1921 = vshrl.u32 %v1783, 16
      %v1923 = vrot.slane %v1921, 2
      %v1924 = vshll.u32 %v1783, 16
      %v1926 = vrot.slane %v1924, 3
      %v1927 = vor.u32 %v1923, %v1926
      %v1928 = vsel %vm1801, %v1919, %v1927
      %v1929 = vshrl.u32 %v1785, 16
      %v1931 = vrot.slane %v1929, 2
      %v1932 = vshll.u32 %v1785, 16
      %v1934 = vrot.slane %v1932, 3
      %v1935 = vor.u32 %v1931, %v1934
      %v1936 = vsel %vm1801, %v1927, %v1935
      %v1937 = vshrl.u32 %v1787, 16
      %v1939 = vrot.slane %v1937, 2
      %v1940 = vshll.u32 %v1787, 16
      %v1942 = vrot.slane %v1940, 3
      %v1943 = vor.u32 %v1939, %v1942
      %v1944 = vsel %vm1801, %v1935, %v1943
      %v1945 = vshrl.u32 %v1789, 16
      %v1947 = vrot.slane %v1945, 2
      %v1948 = vshll.u32 %v1789, 16
      %v1950 = vrot.slane %v1948, 3
      %v1951 = vor.u32 %v1947, %v1950
      %v1952 = vsel %vm1801, %v1943, %v1951
      %v1953 = vshrl.u32 %v1791, 16
      %v1955 = vrot.slane %v1953, 2
      %v1956 = vshll.u32 %v1791, 16
      %v1958 = vrot.slane %v1956, 3
      %v1959 = vor.u32 %v1955, %v1958
      %v1960 = vsel %vm1801, %v1951, %v1959
      %v1961 = vshrl.u32 %v1793, 16
      %v1963 = vrot.slane %v1961, 2
      %v1964 = vshll.u32 %v1793, 16
      %v1966 = vrot.slane %v1964, 3
      %v1967 = vor.u32 %v1963, %v1966
      %v1968 = vsel %vm1801, %v1959, %v1967
      %v1969 = vshrl.u32 %v1795, 16
      %v1971 = vrot.slane %v1969, 2
      %v1972 = vshll.u32 %v1795, 16
      %v1974 = vrot.slane %v1972, 3
      %v1975 = vor.u32 %v1971, %v1974
      %v1976 = vsel %vm1801, %v1967, %v1975
      %v1982 = vunpack.c.l.b16 %v1796
      %v1983 = vunpack.c.h.b16 %v1796
      %v1984 = vunpack.c.l.b16 %v1797
      %v1985 = vunpack.c.h.b16 %v1797
      %v1986 = vunpack.c.l.b16 %v1798
      %v1987 = vunpack.c.h.b16 %v1798
      %v1988 = vunpack.c.l.b16 %v1799
      %v1989 = vunpack.c.h.b16 %v1799
      %v1990 = vunpack.c.l.b16 %v1800
      %v1991 = vunpack.c.h.b16 %v1800
      %v1992 = vpack.c.b16 %v1984, %v1982
      %v1993 = vpack.c.b16 %v1985, %v1983
      %v1994 = vpack.c.b16 %v1988, %v1986
      %v1995 = vpack.c.b16 %v1989, %v1987
      %v1996 = vpack.c.b16 %v1990, %v1990
      %v1997 = vpack.c.b16 %v1991, %v1991
      %vm2002 = vcmask 293888
      %v2004 = vsel %vm2002, %v1816, 0
      %v2007 = vsel %vm2002, %v1824, 0
      %v2010 = vsel %vm2002, %v1832, 0
      %v2013 = vsel %vm2002, %v1840, 0
      %v2016 = vsel %vm2002, %v1848, 0
      %v2019 = vsel %vm2002, %v1856, 0
      %v2022 = vsel %vm2002, %v1864, 0
      %v2025 = vsel %vm2002, %v1872, 0
      %v2028 = vsel %vm2002, %v1880, 0
      %v2031 = vsel %vm2002, %v1888, 0
      %v2034 = vsel %vm2002, %v1896, 0
      %v2037 = vsel %vm2002, %v1904, 0
      %v2040 = vsel %vm2002, %v1912, 0
      %v2043 = vsel %vm2002, %v1920, 0
      %v2046 = vsel %vm2002, %v1928, 0
      %v2049 = vsel %vm2002, %v1936, 0
      %v2052 = vsel %vm2002, %v1944, 0
      %v2055 = vsel %vm2002, %v1952, 0
      %v2058 = vsel %vm2002, %v1960, 0
      %v2061 = vsel %vm2002, %v1968, 0
      %v2064 = vsel %vm2002, %v1976, 0
      %vm2066 = vcmask 1041408
      %v2068 = vsel %vm2066, %v1996, 0
      %v2071 = vsel %vm2066, %v1997, 0
      %2073 = vmatprep.subr.bf16.mxu0 %v1993
      %2074 = vmatpush1.bf16.msra.mxu0 %v1992
      %2075 = vmatprep.subr.bf16.mxu0 %v1995
      %2076 = vmatpush1.bf16.msra.mxu0 %v1994
      %2077 = vmatprep.subr.bf16.mxu0 %v2071
      %2078 = vmatpush1.bf16.msra.mxu0 %v2068
      %2079 = vmatprep.subr.bf16.mxu0 0
      %2080 = vmatpush1.bf16.msra.mxu0 0
      %2081 = vmatprep.subr.bf16.mxu0 0
      %2082 = vmatpush1.bf16.msra.mxu0 0
      %2083 = vmatprep.subr.bf16.mxu0 0
      %2084 = vmatpush1.bf16.msra.mxu0 0
      %2085 = vmatprep.subr.bf16.mxu0 0
      %2086 = vmatpush1.bf16.msra.mxu0 0
      %2087 = vmatprep.subr.bf16.mxu0 0
      %2088 = vmatpush1.bf16.msra.mxu0 0
      %2089 = vmatprep.subr.bf16.mxu0 0
      %2090 = vmatpush1.bf16.msra.mxu0 0
      %2091 = vmatprep.subr.bf16.mxu0 0
      %2092 = vmatpush1.bf16.msra.mxu0 0
      %2093 = vmatprep.subr.bf16.mxu0 0
      %2094 = vmatpush1.bf16.msra.mxu0 0
      %2095 = vmatprep.subr.bf16.mxu0 0
      %2096 = vmatpush1.bf16.msra.mxu0 0
      %2097 = vmatprep.subr.bf16.mxu0 0
      %2098 = vmatpush1.bf16.msra.mxu0 0
      %2099 = vmatprep.subr.bf16.mxu0 0
      %2100 = vmatpush1.bf16.msra.mxu0 0
      %2101 = vmatprep.subr.bf16.mxu0 0
      %2102 = vmatpush1.bf16.msra.mxu0 0
      %2103 = vmatprep.subr.bf16.mxu0 0
      %2104 = vmatpush1.bf16.msra.mxu0 0
      %2105 = vmatprep.mubr.bf16.mxu0 0
      %2106 = vmatmul.mubr.bf16.gmra.mrb[0].mxu0 %v2004
      %v2107 = vpop.f32.mrb[0].mxu0
      %v2108 = vadd.f32 0.0, %v2107
      %v2109 = vpop.f32.mrb[0].mxu0
      %v2110 = vpop.f32.mrb[0].mxu0
      %v2111 = vadd.f32 0.0, %v2110
      %v2112 = vpop.f32.mrb[0].mxu0
      %2113 = vmatprep.mubr.bf16.mxu0 0
      %2114 = vmatmul.mubr.bf16.gmra.mrb[0].mxu0 %v2007
      %v2115 = vpop.f32.mrb[0].mxu0
      %v2116 = vadd.f32 0.0, %v2115
      %v2117 = vpop.f32.mrb[0].mxu0
      %v2118 = vadd.f32 0.0, %v2117
      %v2119 = vpop.f32.mrb[0].mxu0
      %v2120 = vadd.f32 0.0, %v2119
      %v2121 = vpop.f32.mrb[0].mxu0
      %v2122 = vadd.f32 0.0, %v2121
      %2123 = vmatprep.mubr.bf16.mxu0 0
      %2124 = vmatmul.mubr.bf16.gmra.mrb[0].mxu0 %v2010
      %v2125 = vpop.f32.mrb[0].mxu0
      %v2126 = vadd.f32 0.0, %v2125
      %v2127 = vpop.f32.mrb[0].mxu0
      %v2128 = vadd.f32 0.0, %v2127
      %v2129 = vpop.f32.mrb[0].mxu0
      %v2130 = vadd.f32 0.0, %v2129
      %v2131 = vpop.f32.mrb[0].mxu0
      %v2132 = vadd.f32 0.0, %v2131
      %2133 = vmatprep.mubr.bf16.mxu0 0
      %2134 = vmatmul.mubr.bf16.gmra.mrb[0].mxu0 %v2013
      %v2135 = vpop.f32.mrb[0].mxu0
      %v2136 = vadd.f32 0.0, %v2135
      %v2137 = vpop.f32.mrb[0].mxu0
      %v2138 = vadd.f32 0.0, %v2137
      %v2139 = vpop.f32.mrb[0].mxu0
      %v2140 = vadd.f32 0.0, %v2139
      %v2141 = vpop.f32.mrb[0].mxu0
      %v2142 = vadd.f32 0.0, %v2141
      %2143 = vmatprep.mubr.bf16.mxu0 0
      %2144 = vmatmul.mubr.bf16.gmra.mrb[0].mxu0 %v2016
      %v2145 = vpop.f32.mrb[0].mxu0
      %v2146 = vadd.f32 0.0, %v2145
      %v2147 = vpop.f32.mrb[0].mxu0
      %v2148 = vadd.f32 0.0, %v2147
      %v2149 = vpop.f32.mrb[0].mxu0
      %v2150 = vadd.f32 0.0, %v2149
      %v2151 = vpop.f32.mrb[0].mxu0
      %v2152 = vadd.f32 0.0, %v2151
      %2153 = vmatprep.mubr.bf16.mxu0 0
      %2154 = vmatmul.mubr.bf16.gmra.mrb[0].mxu0 %v2019
      %v2155 = vpop.f32.mrb[0].mxu0
      %v2156 = vadd.f32 0.0, %v2155
      %v2157 = vpop.f32.mrb[0].mxu0
      %v2158 = vadd.f32 0.0, %v2157
      %v2159 = vpop.f32.mrb[0].mxu0
      %v2160 = vadd.f32 0.0, %v2159
      %v2161 = vpop.f32.mrb[0].mxu0
      %v2162 = vadd.f32 0.0, %v2161
      %2163 = vmatprep.mubr.bf16.mxu0 0
      %2164 = vmatmul.mubr.bf16.gmra.mrb[0].mxu0 %v2022
      %v2165 = vpop.f32.mrb[0].mxu0
      %v2166 = vadd.f32 0.0, %v2165
      %v2167 = vpop.f32.mrb[0].mxu0
      %v2168 = vadd.f32 0.0, %v2167
      %v2169 = vpop.f32.mrb[0].mxu0
      %v2170 = vadd.f32 0.0, %v2169
      %v2171 = vpop.f32.mrb[0].mxu0
      %v2172 = vadd.f32 0.0, %v2171
      %2173 = vmatprep.mubr.bf16.mxu0 0
      %2174 = vmatmul.mubr.bf16.gmra.mrb[0].mxu0 %v2025
      %v2175 = vpop.f32.mrb[0].mxu0
      %v2176 = vadd.f32 0.0, %v2175
      %v2177 = vpop.f32.mrb[0].mxu0
      %v2178 = vadd.f32 0.0, %v2177
      %v2179 = vpop.f32.mrb[0].mxu0
      %v2180 = vadd.f32 0.0, %v2179
      %v2181 = vpop.f32.mrb[0].mxu0
      %v2182 = vadd.f32 0.0, %v2181
      %2183 = vmatprep.mubr.bf16.mxu0 0
      %2184 = vmatmul.mubr.bf16.gmra.mrb[0].mxu0 %v2028
      %v2185 = vpop.f32.mrb[0].mxu0
      %v2186 = vadd.f32 0.0, %v2185
      %v2187 = vpop.f32.mrb[0].mxu0
      %v2188 = vadd.f32 0.0, %v2187
      %v2189 = vpop.f32.mrb[0].mxu0
      %v2190 = vadd.f32 0.0, %v2189
      %v2191 = vpop.f32.mrb[0].mxu0
      %v2192 = vadd.f32 0.0, %v2191
      %2193 = vmatprep.mubr.bf16.mxu0 0
      %2194 = vmatmul.mubr.bf16.gmra.mrb[0].mxu0 %v2031
      %v2195 = vpop.f32.mrb[0].mxu0
      %v2196 = vadd.f32 0.0, %v2195
      %v2197 = vpop.f32.mrb[0].mxu0
      %v2198 = vadd.f32 0.0, %v2197
      %v2199 = vpop.f32.mrb[0].mxu0
      %v2200 = vadd.f32 0.0, %v2199
      %v2201 = vpop.f32.mrb[0].mxu0
      %v2202 = vadd.f32 0.0, %v2201
      %2203 = vmatprep.mubr.bf16.mxu0 0
      %2204 = vmatmul.mubr.bf16.gmra.mrb[0].mxu0 %v2034
      %v2205 = vpop.f32.mrb[0].mxu0
      %v2206 = vadd.f32 0.0, %v2205
      %v2207 = vpop.f32.mrb[0].mxu0
      %v2208 = vadd.f32 0.0, %v2207
      %v2209 = vpop.f32.mrb[0].mxu0
      %v2210 = vadd.f32 0.0, %v2209
      %v2211 = vpop.f32.mrb[0].mxu0
      %v2212 = vadd.f32 0.0, %v2211
      %2213 = vmatprep.mubr.bf16.mxu0 0
      %2214 = vmatmul.mubr.bf16.gmra.mrb[0].mxu0 %v2037
      %v2215 = vpop.f32.mrb[0].mxu0
      %v2216 = vadd.f32 0.0, %v2215
      %v2217 = vpop.f32.mrb[0].mxu0
      %v2218 = vadd.f32 0.0, %v2217
      %v2219 = vpop.f32.mrb[0].mxu0
      %v2220 = vadd.f32 0.0, %v2219
      %v2221 = vpop.f32.mrb[0].mxu0
      %v2222 = vadd.f32 0.0, %v2221
      %2223 = vmatprep.mubr.bf16.mxu0 0
      %2224 = vmatmul.mubr.bf16.gmra.mrb[0].mxu0 %v2040
      %v2225 = vpop.f32.mrb[0].mxu0
      %v2226 = vadd.f32 0.0, %v2225
      %v2227 = vpop.f32.mrb[0].mxu0
      %v2228 = vadd.f32 0.0, %v2227
      %v2229 = vpop.f32.mrb[0].mxu0
      %v2230 = vadd.f32 0.0, %v2229
      %v2231 = vpop.f32.mrb[0].mxu0
      %v2232 = vadd.f32 0.0, %v2231
      %2233 = vmatprep.mubr.bf16.mxu0 0
      %2234 = vmatmul.mubr.bf16.gmra.mrb[0].mxu0 %v2043
      %v2235 = vpop.f32.mrb[0].mxu0
      %v2236 = vadd.f32 0.0, %v2235
      %v2237 = vpop.f32.mrb[0].mxu0
      %v2238 = vadd.f32 0.0, %v2237
      %v2239 = vpop.f32.mrb[0].mxu0
      %v2240 = vadd.f32 0.0, %v2239
      %v2241 = vpop.f32.mrb[0].mxu0
      %v2242 = vadd.f32 0.0, %v2241
      %2243 = vmatprep.mubr.bf16.mxu0 0
      %2244 = vmatmul.mubr.bf16.gmra.mrb[0].mxu0 %v2046
      %v2245 = vpop.f32.mrb[0].mxu0
      %v2246 = vadd.f32 0.0, %v2245
      %v2247 = vpop.f32.mrb[0].mxu0
      %v2248 = vadd.f32 0.0, %v2247
      %v2249 = vpop.f32.mrb[0].mxu0
      %v2250 = vadd.f32 0.0, %v2249
      %v2251 = vpop.f32.mrb[0].mxu0
      %v2252 = vadd.f32 0.0, %v2251
      %2253 = vmatprep.mubr.bf16.mxu0 0
      %2254 = vmatmul.mubr.bf16.gmra.mrb[0].mxu0 %v2049
      %v2255 = vpop.f32.mrb[0].mxu0
      %v2256 = vadd.f32 0.0, %v2255
      %v2257 = vpop.f32.mrb[0].mxu0
      %v2258 = vadd.f32 0.0, %v2257
      %v2259 = vpop.f32.mrb[0].mxu0
      %v2260 = vadd.f32 0.0, %v2259
      %v2261 = vpop.f32.mrb[0].mxu0
      %v2262 = vadd.f32 0.0, %v2261
      %2263 = vmatprep.mubr.bf16.mxu0 0
      %2264 = vmatmul.mubr.bf16.gmra.mrb[0].mxu0 %v2052
      %v2265 = vpop.f32.mrb[0].mxu0
      %v2266 = vadd.f32 0.0, %v2265
      %v2267 = vpop.f32.mrb[0].mxu0
      %v2268 = vadd.f32 0.0, %v2267
      %v2269 = vpop.f32.mrb[0].mxu0
      %v2270 = vadd.f32 0.0, %v2269
      %v2271 = vpop.f32.mrb[0].mxu0
      %v2272 = vadd.f32 0.0, %v2271
      %2273 = vmatprep.mubr.bf16.mxu0 0
      %2274 = vmatmul.mubr.bf16.gmra.mrb[0].mxu0 %v2055
      %v2275 = vpop.f32.mrb[0].mxu0
      %v2276 = vadd.f32 0.0, %v2275
      %v2277 = vpop.f32.mrb[0].mxu0
      %v2278 = vadd.f32 0.0, %v2277
      %v2279 = vpop.f32.mrb[0].mxu0
      %v2280 = vadd.f32 0.0, %v2279
      %v2281 = vpop.f32.mrb[0].mxu0
      %v2282 = vadd.f32 0.0, %v2281
      %2283 = vmatprep.mubr.bf16.mxu0 0
      %2284 = vmatmul.mubr.bf16.gmra.mrb[0].mxu0 %v2058
      %v2285 = vpop.f32.mrb[0].mxu0
      %v2286 = vadd.f32 0.0, %v2285
      %v2287 = vpop.f32.mrb[0].mxu0
      %v2288 = vadd.f32 0.0, %v2287
      %v2289 = vpop.f32.mrb[0].mxu0
      %v2290 = vadd.f32 0.0, %v2289
      %v2291 = vpop.f32.mrb[0].mxu0
      %v2292 = vadd.f32 0.0, %v2291
      %2293 = vmatprep.mubr.bf16.mxu0 0
      %2294 = vmatmul.mubr.bf16.gmra.mrb[0].mxu0 %v2061
      %v2295 = vpop.f32.mrb[0].mxu0
      %v2296 = vadd.f32 0.0, %v2295
      %v2297 = vpop.f32.mrb[0].mxu0
      %v2298 = vadd.f32 0.0, %v2297
      %v2299 = vpop.f32.mrb[0].mxu0
      %v2300 = vadd.f32 0.0, %v2299
      %v2301 = vpop.f32.mrb[0].mxu0
      %v2302 = vadd.f32 0.0, %v2301
      %2303 = vmatprep.mubr.bf16.mxu0 0
      %2304 = vmatmul.mubr.bf16.gmra.mrb[0].mxu0 %v2064
      %v2305 = vpop.f32.mrb[0].mxu0
      %v2306 = vadd.f32 0.0, %v2305
      %v2307 = vpop.f32.mrb[0].mxu0
      %v2308 = vpop.f32.mrb[0].mxu0
      %v2309 = vadd.f32 0.0, %v2308
      %v2310 = vpop.f32.mrb[0].mxu0
      %2311 = vdwg.mxu0
      %v2312 = vld [vmem:[%s4] sm:$0xff]
      %v2313 = vld [vmem:[%s4 + $0x8] sm:$0xff]
      %v2314 = vld [vmem:[%s4 + $0x10] sm:$0xff]
      %v2315 = vld [vmem:[%s4 + $0x18] sm:$0xff]
      %v2316 = vld [vmem:[%s4 + $0x20] sm:$0xff]
      %v2317 = vld [vmem:[%s4 + $0x28] sm:$0xff]
      %v2318 = vld [vmem:[%s4 + $0x30] sm:$0xff]
      %v2319 = vld [vmem:[%s4 + $0x38] sm:$0xff]
      %v2320 = vld [vmem:[%s4 + $0x40] sm:$0xff]
      %v2321 = vld [vmem:[%s4 + $0x48] sm:$0xff]
      %v2322 = vld [vmem:[%s4 + $0x50] sm:$0xff]
      %v2323 = vld [vmem:[%s4 + $0x58] sm:$0xff]
      %v2324 = vld [vmem:[%s4 + $0x60] sm:$0xff]
      %v2325 = vld [vmem:[%s4 + $0x68] sm:$0xff]
      %v2326 = vld [vmem:[%s4 + $0x70] sm:$0xff]
      %v2327 = vld [vmem:[%s4 + $0x78] sm:$0xff]
      %v2328 = vld [vmem:[%s4 + $0x80] sm:$0xff]
      %v2329 = vld [vmem:[%s4 + $0x88] sm:$0xff]
      %v2330 = vld [vmem:[%s4 + $0x90] sm:$0xff]
      %v2331 = vld [vmem:[%s4 + $0x98] sm:$0xff]
      %v2332 = vld [vmem:[%s4 + $0xa0] sm:$0xff]
      %v2333 = vld [vmem:[%s4 + $0xa8] sm:$0xff]
      %v2334 = vld [vmem:[%s4 + $0xb0] sm:$0xff]
      %v2335 = vld [vmem:[%s4 + $0xb8] sm:$0xff]
      %v2336 = vld [vmem:[%s4 + $0xc0] sm:$0xff]
      %v2337 = vld [vmem:[%s4 + $0xc8] sm:$0xff]
      %v2338 = vld [vmem:[%s4 + $0xd0] sm:$0xff]
      %v2339 = vld [vmem:[%s4 + $0xd8] sm:$0xff]
      %v2340 = vld [vmem:[%s4 + $0xe0] sm:$0xff]
      %v2341 = vld [vmem:[%s4 + $0xe8] sm:$0xff]
      %v2342 = vld [vmem:[%s4 + $0xf0] sm:$0xff]
      %v2343 = vld [vmem:[%s4 + $0xf8] sm:$0xff]
      %v2344 = vld [vmem:[%s4 + $0x100] sm:$0xff]
      %v2345 = vld [vmem:[%s4 + $0x108] sm:$0xff]
      %v2346 = vld [vmem:[%s4 + $0x110] sm:$0xff]
      %v2347 = vld [vmem:[%s4 + $0x118] sm:$0xff]
      %v2348 = vld [vmem:[%s4 + $0x120] sm:$0xff]
      %v2349 = vld [vmem:[%s4 + $0x128] sm:$0xff]
      %v2350 = vld [vmem:[%s4 + $0x130] sm:$0xff]
      %v2351 = vld [vmem:[%s4 + $0x138] sm:$0xff]
      %v2352 = vld [vmem:[%s4 + $0x140] sm:$0xff]
      %v2353 = vld [vmem:[%s4 + $0x148] sm:$0xff]
      %v2354 = vld [vmem:[%s3] sm:$0x1]
      %v2355 = vlaneseq
      %v2356 = vshrl.u32 %v2355, 7
      %v2357 = vsub.s32 0, %v2356
      %v2358 = vrot.slane %v2354, %v2357
      %v2359 = vmul.f32 %v2108, %v2358
      %v2360 = vmul.f32 %v2111, %v2358
      %v2361 = vmul.f32 %v2116, %v2358
      %v2362 = vmul.f32 %v2120, %v2358
      %v2363 = vmul.f32 %v2126, %v2358
      %v2364 = vmul.f32 %v2130, %v2358
      %v2365 = vmul.f32 %v2136, %v2358
      %v2366 = vmul.f32 %v2140, %v2358
      %v2367 = vmul.f32 %v2146, %v2358
      %v2368 = vmul.f32 %v2150, %v2358
      %v2369 = vmul.f32 %v2156, %v2358
      %v2370 = vmul.f32 %v2160, %v2358
      %v2371 = vmul.f32 %v2166, %v2358
      %v2372 = vmul.f32 %v2170, %v2358
      %v2373 = vmul.f32 %v2176, %v2358
      %v2374 = vmul.f32 %v2180, %v2358
      %v2375 = vmul.f32 %v2186, %v2358
      %v2376 = vmul.f32 %v2190, %v2358
      %v2377 = vmul.f32 %v2196, %v2358
      %v2378 = vmul.f32 %v2200, %v2358
      %v2379 = vmul.f32 %v2206, %v2358
      %v2380 = vmul.f32 %v2210, %v2358
      %v2381 = vmul.f32 %v2216, %v2358
      %v2382 = vmul.f32 %v2220, %v2358
      %v2383 = vmul.f32 %v2226, %v2358
      %v2384 = vmul.f32 %v2230, %v2358
      %v2385 = vmul.f32 %v2236, %v2358
      %v2386 = vmul.f32 %v2240, %v2358
      %v2387 = vmul.f32 %v2246, %v2358
      %v2388 = vmul.f32 %v2250, %v2358
      %v2389 = vmul.f32 %v2256, %v2358
      %v2390 = vmul.f32 %v2260, %v2358
      %v2391 = vmul.f32 %v2266, %v2358
      %v2392 = vmul.f32 %v2270, %v2358
      %v2393 = vmul.f32 %v2276, %v2358
      %v2394 = vmul.f32 %v2280, %v2358
      %v2395 = vmul.f32 %v2286, %v2358
      %v2396 = vmul.f32 %v2290, %v2358
      %v2397 = vmul.f32 %v2296, %v2358
      %v2398 = vmul.f32 %v2300, %v2358
      %v2399 = vmul.f32 %v2306, %v2358
      %v2400 = vmul.f32 %v2309, %v2358
      %v2401 = vld [vmem:[%s3 + $0x1] sm:$0x1]
      %v2402 = vlaneseq
      %v2403 = vshrl.u32 %v2402, 7
      %v2404 = vsub.s32 0, %v2403
      %v2405 = vrot.slane %v2401, %v2404
      %v2406 = vadd.f32 %v2359, %v2405
      %v2407 = vadd.f32 %v2360, %v2405
      %v2408 = vadd.f32 %v2361, %v2405
      %v2409 = vadd.f32 %v2362, %v2405
      %v2410 = vadd.f32 %v2363, %v2405
      %v2411 = vadd.f32 %v2364, %v2405
      %v2412 = vadd.f32 %v2365, %v2405
      %v2413 = vadd.f32 %v2366, %v2405
      %v2414 = vadd.f32 %v2367, %v2405
      %v2415 = vadd.f32 %v2368, %v2405
      %v2416 = vadd.f32 %v2369, %v2405
      %v2417 = vadd.f32 %v2370, %v2405
      %v2418 = vadd.f32 %v2371, %v2405
      %v2419 = vadd.f32 %v2372, %v2405
      %v2420 = vadd.f32 %v2373, %v2405
      %v2421 = vadd.f32 %v2374, %v2405
      %v2422 = vadd.f32 %v2375, %v2405
      %v2423 = vadd.f32 %v2376, %v2405
      %v2424 = vadd.f32 %v2377, %v2405
      %v2425 = vadd.f32 %v2378, %v2405
      %v2426 = vadd.f32 %v2379, %v2405
      %v2427 = vadd.f32 %v2380, %v2405
      %v2428 = vadd.f32 %v2381, %v2405
      %v2429 = vadd.f32 %v2382, %v2405
      %v2430 = vadd.f32 %v2383, %v2405
      %v2431 = vadd.f32 %v2384, %v2405
      %v2432 = vadd.f32 %v2385, %v2405
      %v2433 = vadd.f32 %v2386, %v2405
      %v2434 = vadd.f32 %v2387, %v2405
      %v2435 = vadd.f32 %v2388, %v2405
      %v2436 = vadd.f32 %v2389, %v2405
      %v2437 = vadd.f32 %v2390, %v2405
      %v2438 = vadd.f32 %v2391, %v2405
      %v2439 = vadd.f32 %v2392, %v2405
      %v2440 = vadd.f32 %v2393, %v2405
      %v2441 = vadd.f32 %v2394, %v2405
      %v2442 = vadd.f32 %v2395, %v2405
      %v2443 = vadd.f32 %v2396, %v2405
      %v2444 = vadd.f32 %v2397, %v2405
      %v2445 = vadd.f32 %v2398, %v2405
      %v2446 = vadd.f32 %v2399, %v2405
      %v2447 = vadd.f32 %v2400, %v2405
      %v2448 = vmax.f32 %v2406, 0.0
      %v2449 = vmax.f32 %v2407, 0.0
      %v2450 = vmax.f32 %v2408, 0.0
      %v2451 = vmax.f32 %v2409, 0.0
      %v2452 = vmax.f32 %v2410, 0.0
      %v2453 = vmax.f32 %v2411, 0.0
      %v2454 = vmax.f32 %v2412, 0.0
      %v2455 = vmax.f32 %v2413, 0.0
      %v2456 = vmax.f32 %v2414, 0.0
      %v2457 = vmax.f32 %v2415, 0.0
      %v2458 = vmax.f32 %v2416, 0.0
      %v2459 = vmax.f32 %v2417, 0.0
      %v2460 = vmax.f32 %v2418, 0.0
      %v2461 = vmax.f32 %v2419, 0.0
      %v2462 = vmax.f32 %v2420, 0.0
      %v2463 = vmax.f32 %v2421, 0.0
      %v2464 = vmax.f32 %v2422, 0.0
      %v2465 = vmax.f32 %v2423, 0.0
      %v2466 = vmax.f32 %v2424, 0.0
      %v2467 = vmax.f32 %v2425, 0.0
      %v2468 = vmax.f32 %v2426, 0.0
      %v2469 = vmax.f32 %v2427, 0.0
      %v2470 = vmax.f32 %v2428, 0.0
      %v2471 = vmax.f32 %v2429, 0.0
      %v2472 = vmax.f32 %v2430, 0.0
      %v2473 = vmax.f32 %v2431, 0.0
      %v2474 = vmax.f32 %v2432, 0.0
      %v2475 = vmax.f32 %v2433, 0.0
      %v2476 = vmax.f32 %v2434, 0.0
      %v2477 = vmax.f32 %v2435, 0.0
      %v2478 = vmax.f32 %v2436, 0.0
      %v2479 = vmax.f32 %v2437, 0.0
      %v2480 = vmax.f32 %v2438, 0.0
      %v2481 = vmax.f32 %v2439, 0.0
      %v2482 = vmax.f32 %v2440, 0.0
      %v2483 = vmax.f32 %v2441, 0.0
      %v2484 = vmax.f32 %v2442, 0.0
      %v2485 = vmax.f32 %v2443, 0.0
      %v2486 = vmax.f32 %v2444, 0.0
      %v2487 = vmax.f32 %v2445, 0.0
      %v2488 = vmax.f32 %v2446, 0.0
      %v2489 = vmax.f32 %v2447, 0.0
      %2491 = vset.pattern.permute.xlu0 0
      %2492 = vperm.xlu0 %2491, %v2312
      %v2493 = vpop.permute.xlu0 %2492
      %2496 = vset.pattern.permute.xlu0 0
      %2497 = vperm.xlu0 %2496, %v2313
      %v2498 = vpop.permute.xlu0 %2497
      %2501 = vset.pattern.permute.xlu0 0
      %2502 = vperm.xlu0 %2501, %v2314
      %v2503 = vpop.permute.xlu0 %2502
      %2506 = vset.pattern.permute.xlu0 0
      %2507 = vperm.xlu0 %2506, %v2315
      %v2508 = vpop.permute.xlu0 %2507
      %2511 = vset.pattern.permute.xlu0 0
      %2512 = vperm.xlu0 %2511, %v2316
      %v2513 = vpop.permute.xlu0 %2512
      %2516 = vset.pattern.permute.xlu0 0
      %2517 = vperm.xlu0 %2516, %v2317
      %v2518 = vpop.permute.xlu0 %2517
      %2521 = vset.pattern.permute.xlu0 0
      %2522 = vperm.xlu0 %2521, %v2318
      %v2523 = vpop.permute.xlu0 %2522
      %2526 = vset.pattern.permute.xlu0 0
      %2527 = vperm.xlu0 %2526, %v2319
      %v2528 = vpop.permute.xlu0 %2527
      %2531 = vset.pattern.permute.xlu0 0
      %2532 = vperm.xlu0 %2531, %v2320
      %v2533 = vpop.permute.xlu0 %2532
      %2536 = vset.pattern.permute.xlu0 0
      %2537 = vperm.xlu0 %2536, %v2321
      %v2538 = vpop.permute.xlu0 %2537
      %2541 = vset.pattern.permute.xlu0 0
      %2542 = vperm.xlu0 %2541, %v2322
      %v2543 = vpop.permute.xlu0 %2542
      %2546 = vset.pattern.permute.xlu0 0
      %2547 = vperm.xlu0 %2546, %v2323
      %v2548 = vpop.permute.xlu0 %2547
      %2551 = vset.pattern.permute.xlu0 0
      %2552 = vperm.xlu0 %2551, %v2324
      %v2553 = vpop.permute.xlu0 %2552
      %2556 = vset.pattern.permute.xlu0 0
      %2557 = vperm.xlu0 %2556, %v2325
      %v2558 = vpop.permute.xlu0 %2557
      %2561 = vset.pattern.permute.xlu0 0
      %2562 = vperm.xlu0 %2561, %v2326
      %v2563 = vpop.permute.xlu0 %2562
      %2566 = vset.pattern.permute.xlu0 0
      %2567 = vperm.xlu0 %2566, %v2327
      %v2568 = vpop.permute.xlu0 %2567
      %2571 = vset.pattern.permute.xlu0 0
      %2572 = vperm.xlu0 %2571, %v2328
      %v2573 = vpop.permute.xlu0 %2572
      %2576 = vset.pattern.permute.xlu0 0
      %2577 = vperm.xlu0 %2576, %v2329
      %v2578 = vpop.permute.xlu0 %2577
      %2581 = vset.pattern.permute.xlu0 0
      %2582 = vperm.xlu0 %2581, %v2330
      %v2583 = vpop.permute.xlu0 %2582
      %2586 = vset.pattern.permute.xlu0 0
      %2587 = vperm.xlu0 %2586, %v2331
      %v2588 = vpop.permute.xlu0 %2587
      %2591 = vset.pattern.permute.xlu0 0
      %2592 = vperm.xlu0 %2591, %v2332
      %v2593 = vpop.permute.xlu0 %2592
      %2596 = vset.pattern.permute.xlu0 0
      %2597 = vperm.xlu0 %2596, %v2333
      %v2598 = vpop.permute.xlu0 %2597
      %2601 = vset.pattern.permute.xlu0 0
      %2602 = vperm.xlu0 %2601, %v2334
      %v2603 = vpop.permute.xlu0 %2602
      %2606 = vset.pattern.permute.xlu0 0
      %2607 = vperm.xlu0 %2606, %v2335
      %v2608 = vpop.permute.xlu0 %2607
      %2611 = vset.pattern.permute.xlu0 0
      %2612 = vperm.xlu0 %2611, %v2336
      %v2613 = vpop.permute.xlu0 %2612
      %2616 = vset.pattern.permute.xlu0 0
      %2617 = vperm.xlu0 %2616, %v2337
      %v2618 = vpop.permute.xlu0 %2617
      %2621 = vset.pattern.permute.xlu0 0
      %2622 = vperm.xlu0 %2621, %v2338
      %v2623 = vpop.permute.xlu0 %2622
      %2626 = vset.pattern.permute.xlu0 0
      %2627 = vperm.xlu0 %2626, %v2339
      %v2628 = vpop.permute.xlu0 %2627
      %2631 = vset.pattern.permute.xlu0 0
      %2632 = vperm.xlu0 %2631, %v2340
      %v2633 = vpop.permute.xlu0 %2632
      %2636 = vset.pattern.permute.xlu0 0
      %2637 = vperm.xlu0 %2636, %v2341
      %v2638 = vpop.permute.xlu0 %2637
      %2641 = vset.pattern.permute.xlu0 0
      %2642 = vperm.xlu0 %2641, %v2342
      %v2643 = vpop.permute.xlu0 %2642
      %2646 = vset.pattern.permute.xlu0 0
      %2647 = vperm.xlu0 %2646, %v2343
      %v2648 = vpop.permute.xlu0 %2647
      %2651 = vset.pattern.permute.xlu0 0
      %2652 = vperm.xlu0 %2651, %v2344
      %v2653 = vpop.permute.xlu0 %2652
      %2656 = vset.pattern.permute.xlu0 0
      %2657 = vperm.xlu0 %2656, %v2345
      %v2658 = vpop.permute.xlu0 %2657
      %2661 = vset.pattern.permute.xlu0 0
      %2662 = vperm.xlu0 %2661, %v2346
      %v2663 = vpop.permute.xlu0 %2662
      %2666 = vset.pattern.permute.xlu0 0
      %2667 = vperm.xlu0 %2666, %v2347
      %v2668 = vpop.permute.xlu0 %2667
      %2671 = vset.pattern.permute.xlu0 0
      %2672 = vperm.xlu0 %2671, %v2348
      %v2673 = vpop.permute.xlu0 %2672
      %2676 = vset.pattern.permute.xlu0 0
      %2677 = vperm.xlu0 %2676, %v2349
      %v2678 = vpop.permute.xlu0 %2677
      %2681 = vset.pattern.permute.xlu0 0
      %2682 = vperm.xlu0 %2681, %v2350
      %v2683 = vpop.permute.xlu0 %2682
      %2686 = vset.pattern.permute.xlu0 0
      %2687 = vperm.xlu0 %2686, %v2351
      %v2688 = vpop.permute.xlu0 %2687
      %2691 = vset.pattern.permute.xlu0 0
      %2692 = vperm.xlu0 %2691, %v2352
      %v2693 = vpop.permute.xlu0 %2692
      %2696 = vset.pattern.permute.xlu0 0
      %2697 = vperm.xlu0 %2696, %v2353
      %v2698 = vpop.permute.xlu0 %2697
      %v2700 = vmul.f32 %v2448, %v2493
      %v2701 = vmul.f32 %v2449, %v2498
      %v2702 = vmul.f32 %v2450, %v2503
      %v2703 = vmul.f32 %v2451, %v2508
      %v2704 = vmul.f32 %v2452, %v2513
      %v2705 = vmul.f32 %v2453, %v2518
      %v2706 = vmul.f32 %v2454, %v2523
      %v2707 = vmul.f32 %v2455, %v2528
      %v2708 = vmul.f32 %v2456, %v2533
      %v2709 = vmul.f32 %v2457, %v2538
      %v2710 = vmul.f32 %v2458, %v2543
      %v2711 = vmul.f32 %v2459, %v2548
      %v2712 = vmul.f32 %v2460, %v2553
      %v2713 = vmul.f32 %v2461, %v2558
      %v2714 = vmul.f32 %v2462, %v2563
      %v2715 = vmul.f32 %v2463, %v2568
      %v2716 = vmul.f32 %v2464, %v2573
      %v2717 = vmul.f32 %v2465, %v2578
      %v2718 = vmul.f32 %v2466, %v2583
      %v2719 = vmul.f32 %v2467, %v2588
      %v2720 = vmul.f32 %v2468, %v2593
      %v2721 = vmul.f32 %v2469, %v2598
      %v2722 = vmul.f32 %v2470, %v2603
      %v2723 = vmul.f32 %v2471, %v2608
      %v2724 = vmul.f32 %v2472, %v2613
      %v2725 = vmul.f32 %v2473, %v2618
      %v2726 = vmul.f32 %v2474, %v2623
      %v2727 = vmul.f32 %v2475, %v2628
      %v2728 = vmul.f32 %v2476, %v2633
      %v2729 = vmul.f32 %v2477, %v2638
      %v2730 = vmul.f32 %v2478, %v2643
      %v2731 = vmul.f32 %v2479, %v2648
      %v2732 = vmul.f32 %v2480, %v2653
      %v2733 = vmul.f32 %v2481, %v2658
      %v2734 = vmul.f32 %v2482, %v2663
      %v2735 = vmul.f32 %v2483, %v2668
      %v2736 = vmul.f32 %v2484, %v2673
      %v2737 = vmul.f32 %v2485, %v2678
      %v2738 = vmul.f32 %v2486, %v2683
      %v2739 = vmul.f32 %v2487, %v2688
      %v2740 = vmul.f32 %v2488, %v2693
      %v2741 = vmul.f32 %v2489, %v2698
      %v2742 = vld [vmem:[%s3 + $0x4] sm:$0x1]
      %v2743 = vlaneseq
      %v2744 = vshrl.u32 %v2743, 7
      %v2745 = vsub.s32 0, %v2744
      %v2746 = vrot.slane %v2742, %v2745
      %v2747 = vmul.f32 %v2118, %v2746
      %v2748 = vmul.f32 %v2122, %v2746
      %v2749 = vmul.f32 %v2128, %v2746
      %v2750 = vmul.f32 %v2132, %v2746
      %v2751 = vmul.f32 %v2138, %v2746
      %v2752 = vmul.f32 %v2142, %v2746
      %v2753 = vmul.f32 %v2148, %v2746
      %v2754 = vmul.f32 %v2152, %v2746
      %v2755 = vmul.f32 %v2158, %v2746
      %v2756 = vmul.f32 %v2162, %v2746
      %v2757 = vmul.f32 %v2168, %v2746
      %v2758 = vmul.f32 %v2172, %v2746
      %v2759 = vmul.f32 %v2178, %v2746
      %v2760 = vmul.f32 %v2182, %v2746
      %v2761 = vmul.f32 %v2188, %v2746
      %v2762 = vmul.f32 %v2192, %v2746
      %v2763 = vmul.f32 %v2198, %v2746
      %v2764 = vmul.f32 %v2202, %v2746
      %v2765 = vmul.f32 %v2208, %v2746
      %v2766 = vmul.f32 %v2212, %v2746
      %v2767 = vmul.f32 %v2218, %v2746
      %v2768 = vmul.f32 %v2222, %v2746
      %v2769 = vmul.f32 %v2228, %v2746
      %v2770 = vmul.f32 %v2232, %v2746
      %v2771 = vmul.f32 %v2238, %v2746
      %v2772 = vmul.f32 %v2242, %v2746
      %v2773 = vmul.f32 %v2248, %v2746
      %v2774 = vmul.f32 %v2252, %v2746
      %v2775 = vmul.f32 %v2258, %v2746
      %v2776 = vmul.f32 %v2262, %v2746
      %v2777 = vmul.f32 %v2268, %v2746
      %v2778 = vmul.f32 %v2272, %v2746
      %v2779 = vmul.f32 %v2278, %v2746
      %v2780 = vmul.f32 %v2282, %v2746
      %v2781 = vmul.f32 %v2288, %v2746
      %v2782 = vmul.f32 %v2292, %v2746
      %v2783 = vmul.f32 %v2298, %v2746
      %v2784 = vmul.f32 %v2302, %v2746
      %v2785 = vld [vmem:[%s3 + $0x5] sm:$0x1]
      %v2786 = vlaneseq
      %v2787 = vshrl.u32 %v2786, 7
      %v2788 = vsub.s32 0, %v2787
      %v2789 = vrot.slane %v2785, %v2788
      %v2790 = vadd.f32 %v2747, %v2789
      %v2791 = vadd.f32 %v2748, %v2789
      %v2792 = vadd.f32 %v2749, %v2789
      %v2793 = vadd.f32 %v2750, %v2789
      %v2794 = vadd.f32 %v2751, %v2789
      %v2795 = vadd.f32 %v2752, %v2789
      %v2796 = vadd.f32 %v2753, %v2789
      %v2797 = vadd.f32 %v2754, %v2789
      %v2798 = vadd.f32 %v2755, %v2789
      %v2799 = vadd.f32 %v2756, %v2789
      %v2800 = vadd.f32 %v2757, %v2789
      %v2801 = vadd.f32 %v2758, %v2789
      %v2802 = vadd.f32 %v2759, %v2789
      %v2803 = vadd.f32 %v2760, %v2789
      %v2804 = vadd.f32 %v2761, %v2789
      %v2805 = vadd.f32 %v2762, %v2789
      %v2806 = vadd.f32 %v2763, %v2789
      %v2807 = vadd.f32 %v2764, %v2789
      %v2808 = vadd.f32 %v2765, %v2789
      %v2809 = vadd.f32 %v2766, %v2789
      %v2810 = vadd.f32 %v2767, %v2789
      %v2811 = vadd.f32 %v2768, %v2789
      %v2812 = vadd.f32 %v2769, %v2789
      %v2813 = vadd.f32 %v2770, %v2789
      %v2814 = vadd.f32 %v2771, %v2789
      %v2815 = vadd.f32 %v2772, %v2789
      %v2816 = vadd.f32 %v2773, %v2789
      %v2817 = vadd.f32 %v2774, %v2789
      %v2818 = vadd.f32 %v2775, %v2789
      %v2819 = vadd.f32 %v2776, %v2789
      %v2820 = vadd.f32 %v2777, %v2789
      %v2821 = vadd.f32 %v2778, %v2789
      %v2822 = vadd.f32 %v2779, %v2789
      %v2823 = vadd.f32 %v2780, %v2789
      %v2824 = vadd.f32 %v2781, %v2789
      %v2825 = vadd.f32 %v2782, %v2789
      %v2826 = vadd.f32 %v2783, %v2789
      %v2827 = vadd.f32 %v2784, %v2789
      %v2828 = vpack.c.bf16 %v2701, %v2700
      %v2829 = vpack.c.bf16 %v2703, %v2702
      %v2830 = vpack.c.bf16 %v2705, %v2704
      %v2831 = vpack.c.bf16 %v2707, %v2706
      %v2832 = vpack.c.bf16 %v2709, %v2708
      %v2833 = vpack.c.bf16 %v2711, %v2710
      %v2834 = vpack.c.bf16 %v2713, %v2712
      %v2835 = vpack.c.bf16 %v2715, %v2714
      %v2836 = vpack.c.bf16 %v2717, %v2716
      %v2837 = vpack.c.bf16 %v2719, %v2718
      %v2838 = vpack.c.bf16 %v2721, %v2720
      %v2839 = vpack.c.bf16 %v2723, %v2722
      %v2840 = vpack.c.bf16 %v2725, %v2724
      %v2841 = vpack.c.bf16 %v2727, %v2726
      %v2842 = vpack.c.bf16 %v2729, %v2728
      %v2843 = vpack.c.bf16 %v2731, %v2730
      %v2844 = vpack.c.bf16 %v2733, %v2732
      %v2845 = vpack.c.bf16 %v2735, %v2734
      %v2846 = vpack.c.bf16 %v2737, %v2736
      %v2847 = vpack.c.bf16 %v2739, %v2738
      %v2848 = vpack.c.bf16 %v2741, %v2740
      %2849 = vst [vmem:[#allocation2 + $0x10] sm:$0xff] %v2828
      %2850 = vst [vmem:[#allocation2 + $0x18] sm:$0xff] %v2829
      %2851 = vst [vmem:[#allocation2 + $0x20] sm:$0xff] %v2830
      %2852 = vst [vmem:[#allocation2 + $0x28] sm:$0xff] %v2831
      %2853 = vst [vmem:[#allocation2 + $0x30] sm:$0xff] %v2832
      %2854 = vst [vmem:[#allocation2 + $0x38] sm:$0xff] %v2833
      %2855 = vst [vmem:[#allocation2 + $0x40] sm:$0xff] %v2834
      %2856 = vst [vmem:[#allocation2 + $0x48] sm:$0xff] %v2835
      %2857 = vst [vmem:[#allocation2 + $0x50] sm:$0xff] %v2836
      %2858 = vst [vmem:[#allocation2 + $0x58] sm:$0xff] %v2837
      %2859 = vst [vmem:[#allocation2 + $0x60] sm:$0xff] %v2838
      %2860 = vst [vmem:[#allocation2 + $0x68] sm:$0xff] %v2839
      %2861 = vst [vmem:[#allocation2 + $0x70] sm:$0xff] %v2840
      %2862 = vst [vmem:[#allocation2 + $0x78] sm:$0xff] %v2841
      %2863 = vst [vmem:[#allocation2 + $0x80] sm:$0xff] %v2842
      %2864 = vst [vmem:[#allocation2 + $0x88] sm:$0xff] %v2843
      %2865 = vst [vmem:[#allocation2 + $0x90] sm:$0xff] %v2844
      %2866 = vst [vmem:[#allocation2 + $0x98] sm:$0xff] %v2845
      %2867 = vst [vmem:[#allocation2 + $0xa0] sm:$0xff] %v2846
      %2868 = vst [vmem:[#allocation2 + $0xa8] sm:$0xff] %v2847
      %2869 = vst [vmem:[#allocation2 + $0xb0] sm:$0xff] %v2848
      %v2870 = vld [vmem:[#allocation2] sm:$0xc0]
      %v2871 = vld [vmem:[#allocation2 + $0x8] sm:$0xff]
      %v2872 = vld [vmem:[#allocation2 + $0x10] sm:$0xff]
      %v2873 = vld [vmem:[#allocation2 + $0x18] sm:$0xff]
      %v2874 = vld [vmem:[#allocation2 + $0x20] sm:$0xff]
      %v2875 = vld [vmem:[#allocation2 + $0x28] sm:$0xff]
      %v2876 = vld [vmem:[#allocation2 + $0x30] sm:$0xff]
      %v2877 = vld [vmem:[#allocation2 + $0x38] sm:$0xff]
      %v2878 = vld [vmem:[#allocation2 + $0x40] sm:$0xff]
      %v2879 = vld [vmem:[#allocation2 + $0x48] sm:$0xff]
      %v2880 = vld [vmem:[#allocation2 + $0x50] sm:$0xff]
      %v2881 = vld [vmem:[#allocation2 + $0x58] sm:$0xff]
      %v2882 = vld [vmem:[#allocation2 + $0x60] sm:$0xff]
      %v2883 = vld [vmem:[#allocation2 + $0x68] sm:$0xff]
      %v2884 = vld [vmem:[#allocation2 + $0x70] sm:$0xff]
      %v2885 = vld [vmem:[#allocation2 + $0x78] sm:$0xff]
      %v2886 = vld [vmem:[#allocation2 + $0x80] sm:$0xff]
      %v2887 = vld [vmem:[#allocation2 + $0x88] sm:$0xff]
      %v2888 = vld [vmem:[#allocation2 + $0x90] sm:$0xff]
      %v2889 = vld [vmem:[#allocation2 + $0x98] sm:$0xff]
      %v2890 = vld [vmem:[#allocation2 + $0xa0] sm:$0xff]
      %v2891 = vld [vmem:[#allocation2 + $0xa8] sm:$0x7f]
      %v2892 = vld [vmem:[#allocation2] sm:$0x80]
      %v2893 = vld [vmem:[#allocation2 + $0xa8] sm:$0xff]
      %v2894 = vld [vmem:[#allocation2 + $0x8] sm:$0x80]
      %v2895 = vld [vmem:[#allocation2 + $0xb0] sm:$0xff]
      %v2896 = vld [vmem:[#allocation2 + $0xb8] sm:$0x1]
      %v2897 = vld [vmem:[#allocation2 + $0x18] sm:$0xff]
      %v2898 = vld [vmem:[#allocation2 + $0x20] sm:$0xff]
      %v2899 = vld [vmem:[#allocation2 + $0x28] sm:$0xff]
      %v2900 = vld [vmem:[#allocation2 + $0x30] sm:$0xff]
      %v2901 = vld [vmem:[#allocation2 + $0x38] sm:$0xff]
      %v2902 = vld [vmem:[#allocation2 + $0x40] sm:$0xff]
      %v2903 = vld [vmem:[#allocation2 + $0x48] sm:$0xff]
      %v2904 = vld [vmem:[#allocation2 + $0x50] sm:$0xff]
      %v2905 = vld [vmem:[#allocation2 + $0x58] sm:$0xff]
      %v2906 = vld [vmem:[#allocation2 + $0x60] sm:$0xff]
      %v2907 = vld [vmem:[#allocation2 + $0x68] sm:$0xff]
      %v2908 = vld [vmem:[#allocation2 + $0x70] sm:$0xff]
      %v2909 = vld [vmem:[#allocation2 + $0x78] sm:$0xff]
      %v2910 = vld [vmem:[#allocation2 + $0x80] sm:$0xff]
      %v2911 = vld [vmem:[#allocation2 + $0x88] sm:$0xff]
      %v2912 = vld [vmem:[#allocation2 + $0x90] sm:$0xff]
      %v2913 = vld [vmem:[#allocation2 + $0x98] sm:$0xff]
      %v2914 = vld [vmem:[#allocation2 + $0xa0] sm:$0xff]
      %v2915 = vld [vmem:[#allocation2 + $0xa8] sm:$0xff]
      %v2916 = vld [vmem:[#allocation2 + $0xb0] sm:$0xff]
      %v2917 = vld [vmem:[#allocation2 + $0xb8] sm:$0xff]
      %v2918 = vld [vmem:[#allocation2 + $0xc0] sm:$0x1]
      %v2919 = vld [vmem:[#allocation2 + $0x18] sm:$0xfe]
      %v2920 = vld [vmem:[#allocation2 + $0xc0] sm:$0x3]
      %v2922 = vshrl.u32 %v2892, 16
      %v2924 = vshll.u32 %v2892, 16
      %v2926 = vrot.slane %v2924, 1
      %v2927 = vor.u32 %v2922, %v2926
      %v2929 = vshll.u32 %v2871, 16
      %v2931 = vrot.slane %v2929, 1
      %v2932 = vsel %vm423, %v2927, %v2931
      %v2933 = vshrl.u32 %v2871, 16
      %v2935 = vor.u32 %v2933, %v2931
      %v2937 = vshll.u32 %v2872, 16
      %v2939 = vrot.slane %v2937, 1
      %v2940 = vsel %vm423, %v2935, %v2939
      %v2941 = vshrl.u32 %v2872, 16
      %v2943 = vor.u32 %v2941, %v2939
      %v2945 = vshll.u32 %v2873, 16
      %v2947 = vrot.slane %v2945, 1
      %v2948 = vsel %vm423, %v2943, %v2947
      %v2949 = vshrl.u32 %v2873, 16
      %v2951 = vor.u32 %v2949, %v2947
      %v2953 = vshll.u32 %v2874, 16
      %v2955 = vrot.slane %v2953, 1
      %v2956 = vsel %vm423, %v2951, %v2955
      %v2957 = vshrl.u32 %v2874, 16
      %v2959 = vor.u32 %v2957, %v2955
      %v2961 = vshll.u32 %v2875, 16
      %v2963 = vrot.slane %v2961, 1
      %v2964 = vsel %vm423, %v2959, %v2963
      %v2965 = vshrl.u32 %v2875, 16
      %v2967 = vor.u32 %v2965, %v2963
      %v2969 = vshll.u32 %v2876, 16
      %v2971 = vrot.slane %v2969, 1
      %v2972 = vsel %vm423, %v2967, %v2971
      %v2973 = vshrl.u32 %v2876, 16
      %v2975 = vor.u32 %v2973, %v2971
      %v2977 = vshll.u32 %v2877, 16
      %v2979 = vrot.slane %v2977, 1
      %v2980 = vsel %vm423, %v2975, %v2979
      %v2981 = vshrl.u32 %v2877, 16
      %v2983 = vor.u32 %v2981, %v2979
      %v2985 = vshll.u32 %v2878, 16
      %v2987 = vrot.slane %v2985, 1
      %v2988 = vsel %vm423, %v2983, %v2987
      %v2989 = vshrl.u32 %v2878, 16
      %v2991 = vor.u32 %v2989, %v2987
      %v2993 = vshll.u32 %v2879, 16
      %v2995 = vrot.slane %v2993, 1
      %v2996 = vsel %vm423, %v2991, %v2995
      %v2997 = vshrl.u32 %v2879, 16
      %v2999 = vor.u32 %v2997, %v2995
      %v3001 = vshll.u32 %v2880, 16
      %v3003 = vrot.slane %v3001, 1
      %v3004 = vsel %vm423, %v2999, %v3003
      %v3005 = vshrl.u32 %v2880, 16
      %v3007 = vor.u32 %v3005, %v3003
      %v3009 = vshll.u32 %v2881, 16
      %v3011 = vrot.slane %v3009, 1
      %v3012 = vsel %vm423, %v3007, %v3011
      %v3013 = vshrl.u32 %v2881, 16
      %v3015 = vor.u32 %v3013, %v3011
      %v3017 = vshll.u32 %v2882, 16
      %v3019 = vrot.slane %v3017, 1
      %v3020 = vsel %vm423, %v3015, %v3019
      %v3021 = vshrl.u32 %v2882, 16
      %v3023 = vor.u32 %v3021, %v3019
      %v3025 = vshll.u32 %v2883, 16
      %v3027 = vrot.slane %v3025, 1
      %v3028 = vsel %vm423, %v3023, %v3027
      %v3029 = vshrl.u32 %v2883, 16
      %v3031 = vor.u32 %v3029, %v3027
      %v3033 = vshll.u32 %v2884, 16
      %v3035 = vrot.slane %v3033, 1
      %v3036 = vsel %vm423, %v3031, %v3035
      %v3037 = vshrl.u32 %v2884, 16
      %v3039 = vor.u32 %v3037, %v3035
      %v3041 = vshll.u32 %v2885, 16
      %v3043 = vrot.slane %v3041, 1
      %v3044 = vsel %vm423, %v3039, %v3043
      %v3045 = vshrl.u32 %v2885, 16
      %v3047 = vor.u32 %v3045, %v3043
      %v3049 = vshll.u32 %v2886, 16
      %v3051 = vrot.slane %v3049, 1
      %v3052 = vsel %vm423, %v3047, %v3051
      %v3053 = vshrl.u32 %v2886, 16
      %v3055 = vor.u32 %v3053, %v3051
      %v3057 = vshll.u32 %v2887, 16
      %v3059 = vrot.slane %v3057, 1
      %v3060 = vsel %vm423, %v3055, %v3059
      %v3061 = vshrl.u32 %v2887, 16
      %v3063 = vor.u32 %v3061, %v3059
      %v3065 = vshll.u32 %v2888, 16
      %v3067 = vrot.slane %v3065, 1
      %v3068 = vsel %vm423, %v3063, %v3067
      %v3069 = vshrl.u32 %v2888, 16
      %v3071 = vor.u32 %v3069, %v3067
      %v3073 = vshll.u32 %v2889, 16
      %v3075 = vrot.slane %v3073, 1
      %v3076 = vsel %vm423, %v3071, %v3075
      %v3077 = vshrl.u32 %v2889, 16
      %v3079 = vor.u32 %v3077, %v3075
      %v3081 = vshll.u32 %v2890, 16
      %v3083 = vrot.slane %v3081, 1
      %v3084 = vsel %vm423, %v3079, %v3083
      %v3085 = vshrl.u32 %v2890, 16
      %v3087 = vor.u32 %v3085, %v3083
      %v3089 = vshll.u32 %v2891, 16
      %v3091 = vrot.slane %v3089, 1
      %v3092 = vsel %vm423, %v3087, %v3091
      %v3093 = vshrl.u32 %v2891, 16
      %v3095 = vor.u32 %v3093, %v3091
      %v3118 = vrot.slane %v2892, 1
      %v3119 = vrot.slane %v2871, 1
      %v3120 = vsel %vm646, %v3118, %v3119
      %v3121 = vrot.slane %v2872, 1
      %v3122 = vsel %vm646, %v3119, %v3121
      %v3123 = vrot.slane %v2873, 1
      %v3124 = vsel %vm646, %v3121, %v3123
      %v3125 = vrot.slane %v2874, 1
      %v3126 = vsel %vm646, %v3123, %v3125
      %v3127 = vrot.slane %v2875, 1
      %v3128 = vsel %vm646, %v3125, %v3127
      %v3129 = vrot.slane %v2876, 1
      %v3130 = vsel %vm646, %v3127, %v3129
      %v3131 = vrot.slane %v2877, 1
      %v3132 = vsel %vm646, %v3129, %v3131
      %v3133 = vrot.slane %v2878, 1
      %v3134 = vsel %vm646, %v3131, %v3133
      %v3135 = vrot.slane %v2879, 1
      %v3136 = vsel %vm646, %v3133, %v3135
      %v3137 = vrot.slane %v2880, 1
      %v3138 = vsel %vm646, %v3135, %v3137
      %v3139 = vrot.slane %v2881, 1
      %v3140 = vsel %vm646, %v3137, %v3139
      %v3141 = vrot.slane %v2882, 1
      %v3142 = vsel %vm646, %v3139, %v3141
      %v3143 = vrot.slane %v2883, 1
      %v3144 = vsel %vm646, %v3141, %v3143
      %v3145 = vrot.slane %v2884, 1
      %v3146 = vsel %vm646, %v3143, %v3145
      %v3147 = vrot.slane %v2885, 1
      %v3148 = vsel %vm646, %v3145, %v3147
      %v3149 = vrot.slane %v2886, 1
      %v3150 = vsel %vm646, %v3147, %v3149
      %v3151 = vrot.slane %v2887, 1
      %v3152 = vsel %vm646, %v3149, %v3151
      %v3153 = vrot.slane %v2888, 1
      %v3154 = vsel %vm646, %v3151, %v3153
      %v3155 = vrot.slane %v2889, 1
      %v3156 = vsel %vm646, %v3153, %v3155
      %v3157 = vrot.slane %v2890, 1
      %v3158 = vsel %vm646, %v3155, %v3157
      %v3159 = vrot.slane %v2893, 1
      %v3160 = vsel %vm646, %v3157, %v3159
      %v3163 = vrot.slane %v2894, 1
      %v3164 = vsel %vm646, %v3163, %v3121
      %v3165 = vrot.slane %v2895, 1
      %v3166 = vsel %vm646, %v3159, %v3165
      %vm3167 = vsmask.f32 6400
      %v3168 = vrot.slane %v2941, 1
      %v3169 = vrot.slane %v2937, 2
      %v3170 = vor.u32 %v3168, %v3169
      %v3171 = vrot.slane %v2949, 1
      %v3172 = vrot.slane %v2945, 2
      %v3173 = vor.u32 %v3171, %v3172
      %v3174 = vsel %vm3167, %v3170, %v3173
      %v3175 = vrot.slane %v2957, 1
      %v3176 = vrot.slane %v2953, 2
      %v3177 = vor.u32 %v3175, %v3176
      %v3178 = vsel %vm3167, %v3173, %v3177
      %v3179 = vrot.slane %v2965, 1
      %v3180 = vrot.slane %v2961, 2
      %v3181 = vor.u32 %v3179, %v3180
      %v3182 = vsel %vm3167, %v3177, %v3181
      %v3183 = vrot.slane %v2973, 1
      %v3184 = vrot.slane %v2969, 2
      %v3185 = vor.u32 %v3183, %v3184
      %v3186 = vsel %vm3167, %v3181, %v3185
      %v3187 = vrot.slane %v2981, 1
      %v3188 = vrot.slane %v2977, 2
      %v3189 = vor.u32 %v3187, %v3188
      %v3190 = vsel %vm3167, %v3185, %v3189
      %v3191 = vrot.slane %v2989, 1
      %v3192 = vrot.slane %v2985, 2
      %v3193 = vor.u32 %v3191, %v3192
      %v3194 = vsel %vm3167, %v3189, %v3193
      %v3195 = vrot.slane %v2997, 1
      %v3196 = vrot.slane %v2993, 2
      %v3197 = vor.u32 %v3195, %v3196
      %v3198 = vsel %vm3167, %v3193, %v3197
      %v3199 = vrot.slane %v3005, 1
      %v3200 = vrot.slane %v3001, 2
      %v3201 = vor.u32 %v3199, %v3200
      %v3202 = vsel %vm3167, %v3197, %v3201
      %v3203 = vrot.slane %v3013, 1
      %v3204 = vrot.slane %v3009, 2
      %v3205 = vor.u32 %v3203, %v3204
      %v3206 = vsel %vm3167, %v3201, %v3205
      %v3207 = vrot.slane %v3021, 1
      %v3208 = vrot.slane %v3017, 2
      %v3209 = vor.u32 %v3207, %v3208
      %v3210 = vsel %vm3167, %v3205, %v3209
      %v3211 = vrot.slane %v3029, 1
      %v3212 = vrot.slane %v3025, 2
      %v3213 = vor.u32 %v3211, %v3212
      %v3214 = vsel %vm3167, %v3209, %v3213
      %v3215 = vrot.slane %v3037, 1
      %v3216 = vrot.slane %v3033, 2
      %v3217 = vor.u32 %v3215, %v3216
      %v3218 = vsel %vm3167, %v3213, %v3217
      %v3219 = vrot.slane %v3045, 1
      %v3220 = vrot.slane %v3041, 2
      %v3221 = vor.u32 %v3219, %v3220
      %v3222 = vsel %vm3167, %v3217, %v3221
      %v3223 = vrot.slane %v3053, 1
      %v3224 = vrot.slane %v3049, 2
      %v3225 = vor.u32 %v3223, %v3224
      %v3226 = vsel %vm3167, %v3221, %v3225
      %v3227 = vrot.slane %v3061, 1
      %v3228 = vrot.slane %v3057, 2
      %v3229 = vor.u32 %v3227, %v3228
      %v3230 = vsel %vm3167, %v3225, %v3229
      %v3231 = vrot.slane %v3069, 1
      %v3232 = vrot.slane %v3065, 2
      %v3233 = vor.u32 %v3231, %v3232
      %v3234 = vsel %vm3167, %v3229, %v3233
      %v3235 = vrot.slane %v3077, 1
      %v3236 = vrot.slane %v3073, 2
      %v3237 = vor.u32 %v3235, %v3236
      %v3238 = vsel %vm3167, %v3233, %v3237
      %v3239 = vrot.slane %v3085, 1
      %v3240 = vrot.slane %v3081, 2
      %v3241 = vor.u32 %v3239, %v3240
      %v3242 = vsel %vm3167, %v3237, %v3241
      %v3244 = vshrl.u32 %v2893, 16
      %v3246 = vrot.slane %v3244, 1
      %v3247 = vshll.u32 %v2893, 16
      %v3249 = vrot.slane %v3247, 2
      %v3250 = vor.u32 %v3246, %v3249
      %v3251 = vsel %vm3167, %v3241, %v3250
      %v3253 = vshrl.u32 %v2895, 16
      %v3255 = vrot.slane %v3253, 1
      %v3256 = vshll.u32 %v2895, 16
      %v3258 = vrot.slane %v3256, 2
      %v3259 = vor.u32 %v3255, %v3258
      %v3260 = vsel %vm3167, %v3250, %v3259
      %vm3262 = vcmask 1045504
      %v3263 = vrot.slane %v2872, 2
      %v3264 = vrot.slane %v2873, 2
      %v3265 = vsel %vm3262, %v3263, %v3264
      %v3266 = vrot.slane %v2874, 2
      %v3267 = vsel %vm3262, %v3264, %v3266
      %v3268 = vrot.slane %v2875, 2
      %v3269 = vsel %vm3262, %v3266, %v3268
      %v3270 = vrot.slane %v2876, 2
      %v3271 = vsel %vm3262, %v3268, %v3270
      %v3272 = vrot.slane %v2877, 2
      %v3273 = vsel %vm3262, %v3270, %v3272
      %v3274 = vrot.slane %v2878, 2
      %v3275 = vsel %vm3262, %v3272, %v3274
      %v3276 = vrot.slane %v2879, 2
      %v3277 = vsel %vm3262, %v3274, %v3276
      %v3278 = vrot.slane %v2880, 2
      %v3279 = vsel %vm3262, %v3276, %v3278
      %v3280 = vrot.slane %v2881, 2
      %v3281 = vsel %vm3262, %v3278, %v3280
      %v3282 = vrot.slane %v2882, 2
      %v3283 = vsel %vm3262, %v3280, %v3282
      %v3284 = vrot.slane %v2883, 2
      %v3285 = vsel %vm3262, %v3282, %v3284
      %v3286 = vrot.slane %v2884, 2
      %v3287 = vsel %vm3262, %v3284, %v3286
      %v3288 = vrot.slane %v2885, 2
      %v3289 = vsel %vm3262, %v3286, %v3288
      %v3290 = vrot.slane %v2886, 2
      %v3291 = vsel %vm3262, %v3288, %v3290
      %v3292 = vrot.slane %v2887, 2
      %v3293 = vsel %vm3262, %v3290, %v3292
      %v3294 = vrot.slane %v2888, 2
      %v3295 = vsel %vm3262, %v3292, %v3294
      %v3296 = vrot.slane %v2889, 2
      %v3297 = vsel %vm3262, %v3294, %v3296
      %v3298 = vrot.slane %v2890, 2
      %v3299 = vsel %vm3262, %v3296, %v3298
      %v3300 = vrot.slane %v2893, 2
      %v3301 = vsel %vm3262, %v3298, %v3300
      %v3302 = vrot.slane %v2895, 2
      %v3303 = vsel %vm3262, %v3300, %v3302
      %v3304 = vrot.slane %v2896, 2
      %v3305 = vsel %vm3262, %v3302, %v3304
      %v3328 = vrot.slane %v2897, 2
      %v3329 = vrot.slane %v2898, 2
      %v3330 = vsel %vm3262, %v3328, %v3329
      %v3331 = vrot.slane %v2899, 2
      %v3332 = vsel %vm3262, %v3329, %v3331
      %v3333 = vrot.slane %v2900, 2
      %v3334 = vsel %vm3262, %v3331, %v3333
      %v3335 = vrot.slane %v2901, 2
      %v3336 = vsel %vm3262, %v3333, %v3335
      %v3337 = vrot.slane %v2902, 2
      %v3338 = vsel %vm3262, %v3335, %v3337
      %v3339 = vrot.slane %v2903, 2
      %v3340 = vsel %vm3262, %v3337, %v3339
      %v3341 = vrot.slane %v2904, 2
      %v3342 = vsel %vm3262, %v3339, %v3341
      %v3343 = vrot.slane %v2905, 2
      %v3344 = vsel %vm3262, %v3341, %v3343
      %v3345 = vrot.slane %v2906, 2
      %v3346 = vsel %vm3262, %v3343, %v3345
      %v3347 = vrot.slane %v2907, 2
      %v3348 = vsel %vm3262, %v3345, %v3347
      %v3349 = vrot.slane %v2908, 2
      %v3350 = vsel %vm3262, %v3347, %v3349
      %v3351 = vrot.slane %v2909, 2
      %v3352 = vsel %vm3262, %v3349, %v3351
      %v3353 = vrot.slane %v2910, 2
      %v3354 = vsel %vm3262, %v3351, %v3353
      %v3355 = vrot.slane %v2911, 2
      %v3356 = vsel %vm3262, %v3353, %v3355
      %v3357 = vrot.slane %v2912, 2
      %v3358 = vsel %vm3262, %v3355, %v3357
      %v3359 = vrot.slane %v2913, 2
      %v3360 = vsel %vm3262, %v3357, %v3359
      %v3361 = vrot.slane %v2914, 2
      %v3362 = vsel %vm3262, %v3359, %v3361
      %v3363 = vrot.slane %v2915, 2
      %v3364 = vsel %vm3262, %v3361, %v3363
      %v3365 = vrot.slane %v2916, 2
      %v3366 = vsel %vm3262, %v3363, %v3365
      %v3367 = vrot.slane %v2917, 2
      %v3368 = vsel %vm3262, %v3365, %v3367
      %v3369 = vrot.slane %v2918, 2
      %v3370 = vsel %vm3262, %v3367, %v3369
      %v3372 = vshrl.u32 %v2919, 16
      %v3374 = vrot.slane %v3372, 2
      %v3375 = vshll.u32 %v2919, 16
      %v3377 = vrot.slane %v3375, 3
      %v3378 = vor.u32 %v3374, %v3377
      %v3380 = vshrl.u32 %v2898, 16
      %v3382 = vrot.slane %v3380, 2
      %v3383 = vshll.u32 %v2898, 16
      %v3385 = vrot.slane %v3383, 3
      %v3386 = vor.u32 %v3382, %v3385
      %v3387 = vsel %vm1801, %v3378, %v3386
      %v3389 = vshrl.u32 %v2899, 16
      %v3391 = vrot.slane %v3389, 2
      %v3392 = vshll.u32 %v2899, 16
      %v3394 = vrot.slane %v3392, 3
      %v3395 = vor.u32 %v3391, %v3394
      %v3396 = vsel %vm1801, %v3386, %v3395
      %v3398 = vshrl.u32 %v2900, 16
      %v3400 = vrot.slane %v3398, 2
      %v3401 = vshll.u32 %v2900, 16
      %v3403 = vrot.slane %v3401, 3
      %v3404 = vor.u32 %v3400, %v3403
      %v3405 = vsel %vm1801, %v3395, %v3404
      %v3407 = vshrl.u32 %v2901, 16
      %v3409 = vrot.slane %v3407, 2
      %v3410 = vshll.u32 %v2901, 16
      %v3412 = vrot.slane %v3410, 3
      %v3413 = vor.u32 %v3409, %v3412
      %v3414 = vsel %vm1801, %v3404, %v3413
      %v3416 = vshrl.u32 %v2902, 16
      %v3418 = vrot.slane %v3416, 2
      %v3419 = vshll.u32 %v2902, 16
      %v3421 = vrot.slane %v3419, 3
      %v3422 = vor.u32 %v3418, %v3421
      %v3423 = vsel %vm1801, %v3413, %v3422
      %v3425 = vshrl.u32 %v2903, 16
      %v3427 = vrot.slane %v3425, 2
      %v3428 = vshll.u32 %v2903, 16
      %v3430 = vrot.slane %v3428, 3
      %v3431 = vor.u32 %v3427, %v3430
      %v3432 = vsel %vm1801, %v3422, %v3431
      %v3434 = vshrl.u32 %v2904, 16
      %v3436 = vrot.slane %v3434, 2
      %v3437 = vshll.u32 %v2904, 16
      %v3439 = vrot.slane %v3437, 3
      %v3440 = vor.u32 %v3436, %v3439
      %v3441 = vsel %vm1801, %v3431, %v3440
      %v3443 = vshrl.u32 %v2905, 16
      %v3445 = vrot.slane %v3443, 2
      %v3446 = vshll.u32 %v2905, 16
      %v3448 = vrot.slane %v3446, 3
      %v3449 = vor.u32 %v3445, %v3448
      %v3450 = vsel %vm1801, %v3440, %v3449
      %v3452 = vshrl.u32 %v2906, 16
      %v3454 = vrot.slane %v3452, 2
      %v3455 = vshll.u32 %v2906, 16
      %v3457 = vrot.slane %v3455, 3
      %v3458 = vor.u32 %v3454, %v3457
      %v3459 = vsel %vm1801, %v3449, %v3458
      %v3461 = vshrl.u32 %v2907, 16
      %v3463 = vrot.slane %v3461, 2
      %v3464 = vshll.u32 %v2907, 16
      %v3466 = vrot.slane %v3464, 3
      %v3467 = vor.u32 %v3463, %v3466
      %v3468 = vsel %vm1801, %v3458, %v3467
      %v3470 = vshrl.u32 %v2908, 16
      %v3472 = vrot.slane %v3470, 2
      %v3473 = vshll.u32 %v2908, 16
      %v3475 = vrot.slane %v3473, 3
      %v3476 = vor.u32 %v3472, %v3475
      %v3477 = vsel %vm1801, %v3467, %v3476
      %v3479 = vshrl.u32 %v2909, 16
      %v3481 = vrot.slane %v3479, 2
      %v3482 = vshll.u32 %v2909, 16
      %v3484 = vrot.slane %v3482, 3
      %v3485 = vor.u32 %v3481, %v3484
      %v3486 = vsel %vm1801, %v3476, %v3485
      %v3488 = vshrl.u32 %v2910, 16
      %v3490 = vrot.slane %v3488, 2
      %v3491 = vshll.u32 %v2910, 16
      %v3493 = vrot.slane %v3491, 3
      %v3494 = vor.u32 %v3490, %v3493
      %v3495 = vsel %vm1801, %v3485, %v3494
      %v3497 = vshrl.u32 %v2911, 16
      %v3499 = vrot.slane %v3497, 2
      %v3500 = vshll.u32 %v2911, 16
      %v3502 = vrot.slane %v3500, 3
      %v3503 = vor.u32 %v3499, %v3502
      %v3504 = vsel %vm1801, %v3494, %v3503
      %v3506 = vshrl.u32 %v2912, 16
      %v3508 = vrot.slane %v3506, 2
      %v3509 = vshll.u32 %v2912, 16
      %v3511 = vrot.slane %v3509, 3
      %v3512 = vor.u32 %v3508, %v3511
      %v3513 = vsel %vm1801, %v3503, %v3512
      %v3515 = vshrl.u32 %v2913, 16
      %v3517 = vrot.slane %v3515, 2
      %v3518 = vshll.u32 %v2913, 16
      %v3520 = vrot.slane %v3518, 3
      %v3521 = vor.u32 %v3517, %v3520
      %v3522 = vsel %vm1801, %v3512, %v3521
      %v3524 = vshrl.u32 %v2914, 16
      %v3526 = vrot.slane %v3524, 2
      %v3527 = vshll.u32 %v2914, 16
      %v3529 = vrot.slane %v3527, 3
      %v3530 = vor.u32 %v3526, %v3529
      %v3531 = vsel %vm1801, %v3521, %v3530
      %v3533 = vshrl.u32 %v2915, 16
      %v3535 = vrot.slane %v3533, 2
      %v3536 = vshll.u32 %v2915, 16
      %v3538 = vrot.slane %v3536, 3
      %v3539 = vor.u32 %v3535, %v3538
      %v3540 = vsel %vm1801, %v3530, %v3539
      %v3542 = vshrl.u32 %v2916, 16
      %v3544 = vrot.slane %v3542, 2
      %v3545 = vshll.u32 %v2916, 16
      %v3547 = vrot.slane %v3545, 3
      %v3548 = vor.u32 %v3544, %v3547
      %v3549 = vsel %vm1801, %v3539, %v3548
      %v3551 = vshrl.u32 %v2917, 16
      %v3553 = vrot.slane %v3551, 2
      %v3554 = vshll.u32 %v2917, 16
      %v3556 = vrot.slane %v3554, 3
      %v3557 = vor.u32 %v3553, %v3556
      %v3558 = vsel %vm1801, %v3548, %v3557
      %v3560 = vshrl.u32 %v2918, 16
      %v3562 = vrot.slane %v3560, 2
      %v3563 = vshll.u32 %v2918, 16
      %v3565 = vrot.slane %v3563, 3
      %v3566 = vor.u32 %v3562, %v3565
      %v3567 = vsel %vm1801, %v3557, %v3566
      %vm3570 = vcmask 1044480
      %v3571 = vrot.slane %v2919, 3
      %v3572 = vrot.slane %v2898, 3
      %v3573 = vsel %vm3570, %v3571, %v3572
      %v3574 = vrot.slane %v2899, 3
      %v3575 = vsel %vm3570, %v3572, %v3574
      %v3576 = vrot.slane %v2900, 3
      %v3577 = vsel %vm3570, %v3574, %v3576
      %v3578 = vrot.slane %v2901, 3
      %v3579 = vsel %vm3570, %v3576, %v3578
      %v3580 = vrot.slane %v2902, 3
      %v3581 = vsel %vm3570, %v3578, %v3580
      %v3582 = vrot.slane %v2903, 3
      %v3583 = vsel %vm3570, %v3580, %v3582
      %v3584 = vrot.slane %v2904, 3
      %v3585 = vsel %vm3570, %v3582, %v3584
      %v3586 = vrot.slane %v2905, 3
      %v3587 = vsel %vm3570, %v3584, %v3586
      %v3588 = vrot.slane %v2906, 3
      %v3589 = vsel %vm3570, %v3586, %v3588
      %v3590 = vrot.slane %v2907, 3
      %v3591 = vsel %vm3570, %v3588, %v3590
      %v3592 = vrot.slane %v2908, 3
      %v3593 = vsel %vm3570, %v3590, %v3592
      %v3594 = vrot.slane %v2909, 3
      %v3595 = vsel %vm3570, %v3592, %v3594
      %v3596 = vrot.slane %v2910, 3
      %v3597 = vsel %vm3570, %v3594, %v3596
      %v3598 = vrot.slane %v2911, 3
      %v3599 = vsel %vm3570, %v3596, %v3598
      %v3600 = vrot.slane %v2912, 3
      %v3601 = vsel %vm3570, %v3598, %v3600
      %v3602 = vrot.slane %v2913, 3
      %v3603 = vsel %vm3570, %v3600, %v3602
      %v3604 = vrot.slane %v2914, 3
      %v3605 = vsel %vm3570, %v3602, %v3604
      %v3606 = vrot.slane %v2915, 3
      %v3607 = vsel %vm3570, %v3604, %v3606
      %v3608 = vrot.slane %v2916, 3
      %v3609 = vsel %vm3570, %v3606, %v3608
      %v3610 = vrot.slane %v2917, 3
      %v3611 = vsel %vm3570, %v3608, %v3610
      %v3612 = vrot.slane %v2920, 3
      %v3613 = vsel %vm3570, %v3610, %v3612
      %v3614 = vld [vmem:[%s2] sm:$0xf]
      %v3615 = vld [vmem:[%s2 + $0x4] sm:$0xf]
      %v3616 = vld [vmem:[%s2 + $0x8] sm:$0xf]
      %v3617 = vld [vmem:[%s2 + $0xc] sm:$0xf]
      %v3618 = vld [vmem:[%s2 + $0x10] sm:$0xf]
      %v3619 = vld [vmem:[%s2 + $0x14] sm:$0xf]
      %v3620 = vld [vmem:[%s2 + $0x18] sm:$0xf]
      %v3621 = vld [vmem:[%s2 + $0x1c] sm:$0xf]
      %v3622 = vld [vmem:[%s2 + $0x20] sm:$0xf]
      %v3623 = vld [vmem:[%s2 + $0x24] sm:$0xf]
      %v3624 = vld [vmem:[%s2 + $0x28] sm:$0xf]
      %v3625 = vld [vmem:[%s2 + $0x2c] sm:$0xf]
      %v3626 = vld [vmem:[%s2 + $0x30] sm:$0xf]
      %v3627 = vld [vmem:[%s2 + $0x34] sm:$0xf]
      %v3628 = vld [vmem:[%s2 + $0x38] sm:$0xf]
      %v3629 = vld [vmem:[%s2 + $0x3c] sm:$0xf]
      %v3630 = vld [vmem:[%s2 + $0x40] sm:$0xf]
      %v3631 = vld [vmem:[%s2 + $0x44] sm:$0xf]
      %v3632 = vld [vmem:[%s2 + $0x48] sm:$0xf]
      %v3633 = vld [vmem:[%s2 + $0x4c] sm:$0xf]
      %v3634 = vld [vmem:[%s2 + $0x50] sm:$0xf]
      %v3635 = vld [vmem:[%s2 + $0x54] sm:$0xf]
      %v3636 = vld [vmem:[%s2 + $0x58] sm:$0xf]
      %v3637 = vld [vmem:[%s2 + $0x5c] sm:$0xf]
      %v3638 = vld [vmem:[%s2 + $0x60] sm:$0xf]
      %v3639 = vld [vmem:[%s2 + $0x64] sm:$0xf]
      %v3640 = vld [vmem:[%s2 + $0x68] sm:$0xf]
      %v3641 = vld [vmem:[%s2 + $0x6c] sm:$0xf]
      %v3642 = vld [vmem:[%s2 + $0x70] sm:$0xf]
      %v3643 = vld [vmem:[%s2 + $0x74] sm:$0xf]
      %v3644 = vld [vmem:[%s2 + $0x78] sm:$0xf]
      %v3645 = vld [vmem:[%s2 + $0x7c] sm:$0xf]
      %v3646 = vld [vmem:[%s2 + $0x80] sm:$0xf]
      %v3647 = vld [vmem:[%s2 + $0x84] sm:$0xf]
      %v3648 = vld [vmem:[%s2 + $0x88] sm:$0xf]
      %v3649 = vld [vmem:[%s2 + $0x8c] sm:$0xf]
      %v3650 = vld [vmem:[%s2 + $0x90] sm:$0xf]
      %v3651 = vld [vmem:[%s2 + $0x94] sm:$0xf]
      %v3652 = vld [vmem:[%s2 + $0x98] sm:$0xf]
      %v3653 = vld [vmem:[%s2 + $0x9c] sm:$0xf]
      %v3654 = vld [vmem:[%s2 + $0xa0] sm:$0xf]
      %v3655 = vld [vmem:[%s2 + $0xa4] sm:$0xf]
      %v3656 = vld [vmem:[%s2 + $0xa8] sm:$0xf]
      %v3657 = vld [vmem:[%s2 + $0xac] sm:$0xf]
      %v3658 = vld [vmem:[%s2 + $0xb0] sm:$0xf]
      %v3659 = vld [vmem:[%s2 + $0xb4] sm:$0xf]
      %v3660 = vld [vmem:[%s2 + $0xb8] sm:$0xf]
      %v3661 = vld [vmem:[%s2 + $0xbc] sm:$0xf]
      %v3662 = vld [vmem:[%s2 + $0xc0] sm:$0xf]
      %v3663 = vld [vmem:[%s2 + $0xc4] sm:$0xf]
      %v3664 = vld [vmem:[%s2 + $0xc8] sm:$0xf]
      %v3665 = vld [vmem:[%s2 + $0xcc] sm:$0xf]
      %v3666 = vld [vmem:[%s2 + $0xd0] sm:$0xf]
      %v3667 = vld [vmem:[%s2 + $0xd4] sm:$0xf]
      %v3668 = vld [vmem:[%s2 + $0xd8] sm:$0xf]
      %v3669 = vld [vmem:[%s2 + $0xdc] sm:$0xf]
      %v3670 = vld [vmem:[%s2 + $0xe0] sm:$0xf]
      %v3671 = vld [vmem:[%s2 + $0xe4] sm:$0xf]
      %v3672 = vld [vmem:[%s2 + $0xe8] sm:$0xf]
      %v3673 = vld [vmem:[%s2 + $0xec] sm:$0xf]
      %v3674 = vld [vmem:[%s2 + $0xf0] sm:$0xf]
      %v3675 = vld [vmem:[%s2 + $0xf4] sm:$0xf]
      %v3676 = vld [vmem:[%s2 + $0xf8] sm:$0xf]
      %v3677 = vld [vmem:[%s2 + $0xfc] sm:$0xf]
      %v3678 = vld [vmem:[%s2 + $0x100] sm:$0xf]
      %v3679 = vld [vmem:[%s2 + $0x104] sm:$0xf]
      %v3680 = vld [vmem:[%s2 + $0x108] sm:$0xf]
      %v3681 = vld [vmem:[%s2 + $0x10c] sm:$0xf]
      %v3682 = vld [vmem:[%s2 + $0x110] sm:$0xf]
      %v3683 = vld [vmem:[%s2 + $0x114] sm:$0xf]
      %v3684 = vld [vmem:[%s2 + $0x118] sm:$0xf]
      %v3685 = vld [vmem:[%s2 + $0x11c] sm:$0xf]
      %v3686 = vld [vmem:[%s2 + $0x120] sm:$0xf]
      %v3687 = vld [vmem:[%s2 + $0x124] sm:$0xf]
      %v3688 = vld [vmem:[%s2 + $0x128] sm:$0xf]
      %v3689 = vld [vmem:[%s2 + $0x12c] sm:$0xf]
      %v3690 = vld [vmem:[%s2 + $0x130] sm:$0xf]
      %v3691 = vld [vmem:[%s2 + $0x134] sm:$0xf]
      %v3692 = vld [vmem:[%s2 + $0x138] sm:$0xf]
      %v3693 = vld [vmem:[%s2 + $0x13c] sm:$0xf]
      %v3694 = vld [vmem:[%s2 + $0x140] sm:$0xf]
      %v3695 = vld [vmem:[%s2 + $0x144] sm:$0xf]
      %v3696 = vld [vmem:[%s2 + $0x148] sm:$0xf]
      %v3697 = vld [vmem:[%s2 + $0x14c] sm:$0xf]
      %v3698 = vld [vmem:[%s2 + $0x150] sm:$0xf]
      %v3699 = vld [vmem:[%s2 + $0x154] sm:$0xf]
      %v3700 = vld [vmem:[%s2 + $0x158] sm:$0xf]
      %v3701 = vld [vmem:[%s2 + $0x15c] sm:$0xf]
      %v3702 = vld [vmem:[%s2 + $0x160] sm:$0xf]
      %v3703 = vld [vmem:[%s2 + $0x164] sm:$0xf]
      %v3704 = vld [vmem:[%s2 + $0x168] sm:$0xf]
      %v3705 = vld [vmem:[%s2 + $0x16c] sm:$0xf]
      %v3706 = vld [vmem:[%s2 + $0x170] sm:$0xf]
      %v3707 = vld [vmem:[%s2 + $0x174] sm:$0xf]
      %v3708 = vld [vmem:[%s2 + $0x178] sm:$0xf]
      %v3709 = vld [vmem:[%s2 + $0x17c] sm:$0xf]
      %v3710 = vld [vmem:[%s2 + $0x180] sm:$0xf]
      %v3711 = vld [vmem:[%s2 + $0x184] sm:$0xf]
      %v3712 = vld [vmem:[%s2 + $0x188] sm:$0xf]
      %v3713 = vld [vmem:[%s2 + $0x18c] sm:$0xf]
      %v3714 = vld [vmem:[%s2 + $0x190] sm:$0xf]
      %v3715 = vld [vmem:[%s2 + $0x194] sm:$0xf]
      %v3716 = vld [vmem:[%s2 + $0x198] sm:$0xf]
      %v3717 = vld [vmem:[%s2 + $0x19c] sm:$0xf]
      %v3718 = vld [vmem:[%s2 + $0x1a0] sm:$0xf]
      %v3719 = vld [vmem:[%s2 + $0x1a4] sm:$0xf]
      %v3720 = vld [vmem:[%s2 + $0x1a8] sm:$0xf]
      %v3721 = vld [vmem:[%s2 + $0x1ac] sm:$0xf]
      %v3722 = vld [vmem:[%s2 + $0x1b0] sm:$0xf]
      %v3723 = vld [vmem:[%s2 + $0x1b4] sm:$0xf]
      %v3724 = vld [vmem:[%s2 + $0x1b8] sm:$0xf]
      %v3725 = vld [vmem:[%s2 + $0x1bc] sm:$0xf]
      %v3726 = vld [vmem:[%s2 + $0x1c0] sm:$0xf]
      %v3727 = vld [vmem:[%s2 + $0x1c4] sm:$0xf]
      %v3728 = vld [vmem:[%s2 + $0x1c8] sm:$0xf]
      %v3729 = vld [vmem:[%s2 + $0x1cc] sm:$0xf]
      %v3730 = vld [vmem:[%s2 + $0x1d0] sm:$0xf]
      %v3731 = vld [vmem:[%s2 + $0x1d4] sm:$0xf]
      %v3732 = vld [vmem:[%s2 + $0x1d8] sm:$0xf]
      %v3733 = vld [vmem:[%s2 + $0x1dc] sm:$0xf]
      %v3734 = vld [vmem:[%s2 + $0x1e0] sm:$0xf]
      %v3735 = vld [vmem:[%s2 + $0x1e4] sm:$0xf]
      %v3736 = vld [vmem:[%s2 + $0x1e8] sm:$0xf]
      %v3737 = vld [vmem:[%s2 + $0x1ec] sm:$0xf]
      %v3738 = vld [vmem:[%s2 + $0x1f0] sm:$0xf]
      %v3739 = vld [vmem:[%s2 + $0x1f4] sm:$0xf]
      %v3740 = vld [vmem:[%s2 + $0x1f8] sm:$0xf]
      %v3741 = vld [vmem:[%s2 + $0x1fc] sm:$0xf]
      %v3742 = vld [vmem:[%s2 + $0x200] sm:$0xf]
      %v3743 = vld [vmem:[%s2 + $0x204] sm:$0xf]
      %v3744 = vld [vmem:[%s2 + $0x208] sm:$0xf]
      %v3745 = vld [vmem:[%s2 + $0x20c] sm:$0xf]
      %v3746 = vld [vmem:[%s2 + $0x210] sm:$0xf]
      %v3747 = vld [vmem:[%s2 + $0x214] sm:$0xf]
      %v3748 = vld [vmem:[%s2 + $0x218] sm:$0xf]
      %v3749 = vld [vmem:[%s2 + $0x21c] sm:$0xf]
      %v3750 = vld [vmem:[%s2 + $0x220] sm:$0xf]
      %v3751 = vld [vmem:[%s2 + $0x224] sm:$0xf]
      %v3752 = vld [vmem:[%s2 + $0x228] sm:$0xf]
      %v3753 = vld [vmem:[%s2 + $0x22c] sm:$0xf]
      %v3754 = vld [vmem:[%s2 + $0x230] sm:$0xf]
      %v3755 = vld [vmem:[%s2 + $0x234] sm:$0xf]
      %v3756 = vld [vmem:[%s2 + $0x238] sm:$0xf]
      %v3757 = vld [vmem:[%s2 + $0x23c] sm:$0xf]
      %v3759 = vshrl.u32 %v2870, 16
      %v3761 = vrot.slane %v3759, 6
      %v3762 = vshll.u32 %v2870, 16
      %v3764 = vrot.slane %v3762, 7
      %v3765 = vor.u32 %v3761, %v3764
      %v3766 = vrot.slane %v2933, 6
      %v3767 = vrot.slane %v2929, 7
      %v3768 = vor.u32 %v3766, %v3767
      %v3769 = vsel %vm1197, %v3765, %v3768
      %v3771 = vshrl.u32 %v2932, 16
      %v3773 = vrot.slane %v3771, 6
      %v3774 = vshll.u32 %v2932, 16
      %v3776 = vrot.slane %v3774, 7
      %v3777 = vor.u32 %v3773, %v3776
      %v3779 = vshrl.u32 %v2940, 16
      %v3781 = vrot.slane %v3779, 6
      %v3782 = vshll.u32 %v2940, 16
      %v3784 = vrot.slane %v3782, 7
      %v3785 = vor.u32 %v3781, %v3784
      %v3786 = vsel %vm1197, %v3777, %v3785
      %v3788 = vshrl.u32 %v3120, 16
      %v3790 = vrot.slane %v3788, 6
      %v3791 = vshll.u32 %v3120, 16
      %v3793 = vrot.slane %v3791, 7
      %v3794 = vor.u32 %v3790, %v3793
      %v3796 = vshrl.u32 %v3122, 16
      %v3798 = vrot.slane %v3796, 6
      %v3799 = vshll.u32 %v3122, 16
      %v3801 = vrot.slane %v3799, 7
      %v3802 = vor.u32 %v3798, %v3801
      %v3803 = vsel %vm1197, %v3794, %v3802
      %v3805 = vshrl.u32 %v3164, 16
      %v3807 = vrot.slane %v3805, 6
      %v3808 = vshll.u32 %v3164, 16
      %v3810 = vrot.slane %v3808, 7
      %v3811 = vor.u32 %v3807, %v3810
      %v3813 = vshrl.u32 %v3124, 16
      %v3815 = vrot.slane %v3813, 6
      %v3816 = vshll.u32 %v3124, 16
      %v3818 = vrot.slane %v3816, 7
      %v3819 = vor.u32 %v3815, %v3818
      %v3820 = vsel %vm1197, %v3811, %v3819
      %v3822 = vshrl.u32 %v3170, 16
      %v3824 = vrot.slane %v3822, 6
      %v3825 = vshll.u32 %v3170, 16
      %v3827 = vrot.slane %v3825, 7
      %v3828 = vor.u32 %v3824, %v3827
      %v3830 = vshrl.u32 %v3174, 16
      %v3832 = vrot.slane %v3830, 6
      %v3833 = vshll.u32 %v3174, 16
      %v3835 = vrot.slane %v3833, 7
      %v3836 = vor.u32 %v3832, %v3835
      %v3837 = vsel %vm1197, %v3828, %v3836
      %v3839 = vshrl.u32 %v3263, 16
      %v3841 = vrot.slane %v3839, 6
      %v3842 = vshll.u32 %v3263, 16
      %v3844 = vrot.slane %v3842, 7
      %v3845 = vor.u32 %v3841, %v3844
      %v3847 = vshrl.u32 %v3265, 16
      %v3849 = vrot.slane %v3847, 6
      %v3850 = vshll.u32 %v3265, 16
      %v3852 = vrot.slane %v3850, 7
      %v3853 = vor.u32 %v3849, %v3852
      %v3854 = vsel %vm1197, %v3845, %v3853
      %v3856 = vshrl.u32 %v3328, 16
      %v3858 = vrot.slane %v3856, 6
      %v3859 = vshll.u32 %v3328, 16
      %v3861 = vrot.slane %v3859, 7
      %v3862 = vor.u32 %v3858, %v3861
      %v3864 = vshrl.u32 %v3330, 16
      %v3866 = vrot.slane %v3864, 6
      %v3867 = vshll.u32 %v3330, 16
      %v3869 = vrot.slane %v3867, 7
      %v3870 = vor.u32 %v3866, %v3869
      %v3871 = vsel %vm1197, %v3862, %v3870
      %v3873 = vshrl.u32 %v3378, 16
      %v3875 = vrot.slane %v3873, 6
      %v3876 = vshll.u32 %v3378, 16
      %v3878 = vrot.slane %v3876, 7
      %v3879 = vor.u32 %v3875, %v3878
      %v3881 = vshrl.u32 %v3387, 16
      %v3883 = vrot.slane %v3881, 6
      %v3884 = vshll.u32 %v3387, 16
      %v3886 = vrot.slane %v3884, 7
      %v3887 = vor.u32 %v3883, %v3886
      %v3888 = vsel %vm1197, %v3879, %v3887
      %v3890 = vshrl.u32 %v3571, 16
      %v3892 = vrot.slane %v3890, 6
      %v3893 = vshll.u32 %v3571, 16
      %v3895 = vrot.slane %v3893, 7
      %v3896 = vor.u32 %v3892, %v3895
      %v3898 = vshrl.u32 %v3573, 16
      %v3900 = vrot.slane %v3898, 6
      %v3901 = vshll.u32 %v3573, 16
      %v3903 = vrot.slane %v3901, 7
      %v3904 = vor.u32 %v3900, %v3903
      %v3905 = vsel %vm1197, %v3896, %v3904
      %v3906 = vrot.slane %v2941, 6
      %v3907 = vrot.slane %v2937, 7
      %v3908 = vor.u32 %v3906, %v3907
      %v3909 = vsel %vm1197, %v3768, %v3908
      %v3911 = vshrl.u32 %v2948, 16
      %v3913 = vrot.slane %v3911, 6
      %v3914 = vshll.u32 %v2948, 16
      %v3916 = vrot.slane %v3914, 7
      %v3917 = vor.u32 %v3913, %v3916
      %v3918 = vsel %vm1197, %v3785, %v3917
      %v3919 = vsel %vm1197, %v3802, %v3819
      %v3921 = vshrl.u32 %v3126, 16
      %v3923 = vrot.slane %v3921, 6
      %v3924 = vshll.u32 %v3126, 16
      %v3926 = vrot.slane %v3924, 7
      %v3927 = vor.u32 %v3923, %v3926
      %v3928 = vsel %vm1197, %v3819, %v3927
      %v3930 = vshrl.u32 %v3178, 16
      %v3932 = vrot.slane %v3930, 6
      %v3933 = vshll.u32 %v3178, 16
      %v3935 = vrot.slane %v3933, 7
      %v3936 = vor.u32 %v3932, %v3935
      %v3937 = vsel %vm1197, %v3836, %v3936
      %v3939 = vshrl.u32 %v3267, 16
      %v3941 = vrot.slane %v3939, 6
      %v3942 = vshll.u32 %v3267, 16
      %v3944 = vrot.slane %v3942, 7
      %v3945 = vor.u32 %v3941, %v3944
      %v3946 = vsel %vm1197, %v3853, %v3945
      %v3948 = vshrl.u32 %v3332, 16
      %v3950 = vrot.slane %v3948, 6
      %v3951 = vshll.u32 %v3332, 16
      %v3953 = vrot.slane %v3951, 7
      %v3954 = vor.u32 %v3950, %v3953
      %v3955 = vsel %vm1197, %v3870, %v3954
      %v3957 = vshrl.u32 %v3396, 16
      %v3959 = vrot.slane %v3957, 6
      %v3960 = vshll.u32 %v3396, 16
      %v3962 = vrot.slane %v3960, 7
      %v3963 = vor.u32 %v3959, %v3962
      %v3964 = vsel %vm1197, %v3887, %v3963
      %v3966 = vshrl.u32 %v3575, 16
      %v3968 = vrot.slane %v3966, 6
      %v3969 = vshll.u32 %v3575, 16
      %v3971 = vrot.slane %v3969, 7
      %v3972 = vor.u32 %v3968, %v3971
      %v3973 = vsel %vm1197, %v3904, %v3972
      %v3974 = vrot.slane %v2949, 6
      %v3975 = vrot.slane %v2945, 7
      %v3976 = vor.u32 %v3974, %v3975
      %v3977 = vsel %vm1197, %v3908, %v3976
      %v3979 = vshrl.u32 %v2956, 16
      %v3981 = vrot.slane %v3979, 6
      %v3982 = vshll.u32 %v2956, 16
      %v3984 = vrot.slane %v3982, 7
      %v3985 = vor.u32 %v3981, %v3984
      %v3986 = vsel %vm1197, %v3917, %v3985
      %v3988 = vshrl.u32 %v3128, 16
      %v3990 = vrot.slane %v3988, 6
      %v3991 = vshll.u32 %v3128, 16
      %v3993 = vrot.slane %v3991, 7
      %v3994 = vor.u32 %v3990, %v3993
      %v3995 = vsel %vm1197, %v3927, %v3994
      %v3997 = vshrl.u32 %v3182, 16
      %v3999 = vrot.slane %v3997, 6
      %v4000 = vshll.u32 %v3182, 16
      %v4002 = vrot.slane %v4000, 7
      %v4003 = vor.u32 %v3999, %v4002
      %v4004 = vsel %vm1197, %v3936, %v4003
      %v4006 = vshrl.u32 %v3269, 16
      %v4008 = vrot.slane %v4006, 6
      %v4009 = vshll.u32 %v3269, 16
      %v4011 = vrot.slane %v4009, 7
      %v4012 = vor.u32 %v4008, %v4011
      %v4013 = vsel %vm1197, %v3945, %v4012
      %v4015 = vshrl.u32 %v3334, 16
      %v4017 = vrot.slane %v4015, 6
      %v4018 = vshll.u32 %v3334, 16
      %v4020 = vrot.slane %v4018, 7
      %v4021 = vor.u32 %v4017, %v4020
      %v4022 = vsel %vm1197, %v3954, %v4021
      %v4024 = vshrl.u32 %v3405, 16
      %v4026 = vrot.slane %v4024, 6
      %v4027 = vshll.u32 %v3405, 16
      %v4029 = vrot.slane %v4027, 7
      %v4030 = vor.u32 %v4026, %v4029
      %v4031 = vsel %vm1197, %v3963, %v4030
      %v4033 = vshrl.u32 %v3577, 16
      %v4035 = vrot.slane %v4033, 6
      %v4036 = vshll.u32 %v3577, 16
      %v4038 = vrot.slane %v4036, 7
      %v4039 = vor.u32 %v4035, %v4038
      %v4040 = vsel %vm1197, %v3972, %v4039
      %v4041 = vrot.slane %v2957, 6
      %v4042 = vrot.slane %v2953, 7
      %v4043 = vor.u32 %v4041, %v4042
      %v4044 = vsel %vm1197, %v3976, %v4043
      %v4046 = vshrl.u32 %v2964, 16
      %v4048 = vrot.slane %v4046, 6
      %v4049 = vshll.u32 %v2964, 16
      %v4051 = vrot.slane %v4049, 7
      %v4052 = vor.u32 %v4048, %v4051
      %v4053 = vsel %vm1197, %v3985, %v4052
      %v4055 = vshrl.u32 %v3130, 16
      %v4057 = vrot.slane %v4055, 6
      %v4058 = vshll.u32 %v3130, 16
      %v4060 = vrot.slane %v4058, 7
      %v4061 = vor.u32 %v4057, %v4060
      %v4062 = vsel %vm1197, %v3994, %v4061
      %v4064 = vshrl.u32 %v3186, 16
      %v4066 = vrot.slane %v4064, 6
      %v4067 = vshll.u32 %v3186, 16
      %v4069 = vrot.slane %v4067, 7
      %v4070 = vor.u32 %v4066, %v4069
      %v4071 = vsel %vm1197, %v4003, %v4070
      %v4073 = vshrl.u32 %v3271, 16
      %v4075 = vrot.slane %v4073, 6
      %v4076 = vshll.u32 %v3271, 16
      %v4078 = vrot.slane %v4076, 7
      %v4079 = vor.u32 %v4075, %v4078
      %v4080 = vsel %vm1197, %v4012, %v4079
      %v4082 = vshrl.u32 %v3336, 16
      %v4084 = vrot.slane %v4082, 6
      %v4085 = vshll.u32 %v3336, 16
      %v4087 = vrot.slane %v4085, 7
      %v4088 = vor.u32 %v4084, %v4087
      %v4089 = vsel %vm1197, %v4021, %v4088
      %v4091 = vshrl.u32 %v3414, 16
      %v4093 = vrot.slane %v4091, 6
      %v4094 = vshll.u32 %v3414, 16
      %v4096 = vrot.slane %v4094, 7
      %v4097 = vor.u32 %v4093, %v4096
      %v4098 = vsel %vm1197, %v4030, %v4097
      %v4100 = vshrl.u32 %v3579, 16
      %v4102 = vrot.slane %v4100, 6
      %v4103 = vshll.u32 %v3579, 16
      %v4105 = vrot.slane %v4103, 7
      %v4106 = vor.u32 %v4102, %v4105
      %v4107 = vsel %vm1197, %v4039, %v4106
      %v4108 = vrot.slane %v2965, 6
      %v4109 = vrot.slane %v2961, 7
      %v4110 = vor.u32 %v4108, %v4109
      %v4111 = vsel %vm1197, %v4043, %v4110
      %v4113 = vshrl.u32 %v2972, 16
      %v4115 = vrot.slane %v4113, 6
      %v4116 = vshll.u32 %v2972, 16
      %v4118 = vrot.slane %v4116, 7
      %v4119 = vor.u32 %v4115, %v4118
      %v4120 = vsel %vm1197, %v4052, %v4119
      %v4122 = vshrl.u32 %v3132, 16
      %v4124 = vrot.slane %v4122, 6
      %v4125 = vshll.u32 %v3132, 16
      %v4127 = vrot.slane %v4125, 7
      %v4128 = vor.u32 %v4124, %v4127
      %v4129 = vsel %vm1197, %v4061, %v4128
      %v4131 = vshrl.u32 %v3190, 16
      %v4133 = vrot.slane %v4131, 6
      %v4134 = vshll.u32 %v3190, 16
      %v4136 = vrot.slane %v4134, 7
      %v4137 = vor.u32 %v4133, %v4136
      %v4138 = vsel %vm1197, %v4070, %v4137
      %v4140 = vshrl.u32 %v3273, 16
      %v4142 = vrot.slane %v4140, 6
      %v4143 = vshll.u32 %v3273, 16
      %v4145 = vrot.slane %v4143, 7
      %v4146 = vor.u32 %v4142, %v4145
      %v4147 = vsel %vm1197, %v4079, %v4146
      %v4149 = vshrl.u32 %v3338, 16
      %v4151 = vrot.slane %v4149, 6
      %v4152 = vshll.u32 %v3338, 16
      %v4154 = vrot.slane %v4152, 7
      %v4155 = vor.u32 %v4151, %v4154
      %v4156 = vsel %vm1197, %v4088, %v4155
      %v4158 = vshrl.u32 %v3423, 16
      %v4160 = vrot.slane %v4158, 6
      %v4161 = vshll.u32 %v3423, 16
      %v4163 = vrot.slane %v4161, 7
      %v4164 = vor.u32 %v4160, %v4163
      %v4165 = vsel %vm1197, %v4097, %v4164
      %v4167 = vshrl.u32 %v3581, 16
      %v4169 = vrot.slane %v4167, 6
      %v4170 = vshll.u32 %v3581, 16
      %v4172 = vrot.slane %v4170, 7
      %v4173 = vor.u32 %v4169, %v4172
      %v4174 = vsel %vm1197, %v4106, %v4173
      %v4175 = vrot.slane %v2973, 6
      %v4176 = vrot.slane %v2969, 7
      %v4177 = vor.u32 %v4175, %v4176
      %v4178 = vsel %vm1197, %v4110, %v4177
      %v4180 = vshrl.u32 %v2980, 16
      %v4182 = vrot.slane %v4180, 6
      %v4183 = vshll.u32 %v2980, 16
      %v4185 = vrot.slane %v4183, 7
      %v4186 = vor.u32 %v4182, %v4185
      %v4187 = vsel %vm1197, %v4119, %v4186
      %v4189 = vshrl.u32 %v3134, 16
      %v4191 = vrot.slane %v4189, 6
      %v4192 = vshll.u32 %v3134, 16
      %v4194 = vrot.slane %v4192, 7
      %v4195 = vor.u32 %v4191, %v4194
      %v4196 = vsel %vm1197, %v4128, %v4195
      %v4198 = vshrl.u32 %v3194, 16
      %v4200 = vrot.slane %v4198, 6
      %v4201 = vshll.u32 %v3194, 16
      %v4203 = vrot.slane %v4201, 7
      %v4204 = vor.u32 %v4200, %v4203
      %v4205 = vsel %vm1197, %v4137, %v4204
      %v4207 = vshrl.u32 %v3275, 16
      %v4209 = vrot.slane %v4207, 6
      %v4210 = vshll.u32 %v3275, 16
      %v4212 = vrot.slane %v4210, 7
      %v4213 = vor.u32 %v4209, %v4212
      %v4214 = vsel %vm1197, %v4146, %v4213
      %v4216 = vshrl.u32 %v3340, 16
      %v4218 = vrot.slane %v4216, 6
      %v4219 = vshll.u32 %v3340, 16
      %v4221 = vrot.slane %v4219, 7
      %v4222 = vor.u32 %v4218, %v4221
      %v4223 = vsel %vm1197, %v4155, %v4222
      %v4225 = vshrl.u32 %v3432, 16
      %v4227 = vrot.slane %v4225, 6
      %v4228 = vshll.u32 %v3432, 16
      %v4230 = vrot.slane %v4228, 7
      %v4231 = vor.u32 %v4227, %v4230
      %v4232 = vsel %vm1197, %v4164, %v4231
      %v4234 = vshrl.u32 %v3583, 16
      %v4236 = vrot.slane %v4234, 6
      %v4237 = vshll.u32 %v3583, 16
      %v4239 = vrot.slane %v4237, 7
      %v4240 = vor.u32 %v4236, %v4239
      %v4241 = vsel %vm1197, %v4173, %v4240
      %v4242 = vrot.slane %v2981, 6
      %v4243 = vrot.slane %v2977, 7
      %v4244 = vor.u32 %v4242, %v4243
      %v4245 = vsel %vm1197, %v4177, %v4244
      %v4247 = vshrl.u32 %v2988, 16
      %v4249 = vrot.slane %v4247, 6
      %v4250 = vshll.u32 %v2988, 16
      %v4252 = vrot.slane %v4250, 7
      %v4253 = vor.u32 %v4249, %v4252
      %v4254 = vsel %vm1197, %v4186, %v4253
      %v4256 = vshrl.u32 %v3136, 16
      %v4258 = vrot.slane %v4256, 6
      %v4259 = vshll.u32 %v3136, 16
      %v4261 = vrot.slane %v4259, 7
      %v4262 = vor.u32 %v4258, %v4261
      %v4263 = vsel %vm1197, %v4195, %v4262
      %v4265 = vshrl.u32 %v3198, 16
      %v4267 = vrot.slane %v4265, 6
      %v4268 = vshll.u32 %v3198, 16
      %v4270 = vrot.slane %v4268, 7
      %v4271 = vor.u32 %v4267, %v4270
      %v4272 = vsel %vm1197, %v4204, %v4271
      %v4274 = vshrl.u32 %v3277, 16
      %v4276 = vrot.slane %v4274, 6
      %v4277 = vshll.u32 %v3277, 16
      %v4279 = vrot.slane %v4277, 7
      %v4280 = vor.u32 %v4276, %v4279
      %v4281 = vsel %vm1197, %v4213, %v4280
      %v4283 = vshrl.u32 %v3342, 16
      %v4285 = vrot.slane %v4283, 6
      %v4286 = vshll.u32 %v3342, 16
      %v4288 = vrot.slane %v4286, 7
      %v4289 = vor.u32 %v4285, %v4288
      %v4290 = vsel %vm1197, %v4222, %v4289
      %v4292 = vshrl.u32 %v3441, 16
      %v4294 = vrot.slane %v4292, 6
      %v4295 = vshll.u32 %v3441, 16
      %v4297 = vrot.slane %v4295, 7
      %v4298 = vor.u32 %v4294, %v4297
      %v4299 = vsel %vm1197, %v4231, %v4298
      %v4301 = vshrl.u32 %v3585, 16
      %v4303 = vrot.slane %v4301, 6
      %v4304 = vshll.u32 %v3585, 16
      %v4306 = vrot.slane %v4304, 7
      %v4307 = vor.u32 %v4303, %v4306
      %v4308 = vsel %vm1197, %v4240, %v4307
      %v4309 = vrot.slane %v2989, 6
      %v4310 = vrot.slane %v2985, 7
      %v4311 = vor.u32 %v4309, %v4310
      %v4312 = vsel %vm1197, %v4244, %v4311
      %v4314 = vshrl.u32 %v2996, 16
      %v4316 = vrot.slane %v4314, 6
      %v4317 = vshll.u32 %v2996, 16
      %v4319 = vrot.slane %v4317, 7
      %v4320 = vor.u32 %v4316, %v4319
      %v4321 = vsel %vm1197, %v4253, %v4320
      %v4323 = vshrl.u32 %v3138, 16
      %v4325 = vrot.slane %v4323, 6
      %v4326 = vshll.u32 %v3138, 16
      %v4328 = vrot.slane %v4326, 7
      %v4329 = vor.u32 %v4325, %v4328
      %v4330 = vsel %vm1197, %v4262, %v4329
      %v4332 = vshrl.u32 %v3202, 16
      %v4334 = vrot.slane %v4332, 6
      %v4335 = vshll.u32 %v3202, 16
      %v4337 = vrot.slane %v4335, 7
      %v4338 = vor.u32 %v4334, %v4337
      %v4339 = vsel %vm1197, %v4271, %v4338
      %v4341 = vshrl.u32 %v3279, 16
      %v4343 = vrot.slane %v4341, 6
      %v4344 = vshll.u32 %v3279, 16
      %v4346 = vrot.slane %v4344, 7
      %v4347 = vor.u32 %v4343, %v4346
      %v4348 = vsel %vm1197, %v4280, %v4347
      %v4350 = vshrl.u32 %v3344, 16
      %v4352 = vrot.slane %v4350, 6
      %v4353 = vshll.u32 %v3344, 16
      %v4355 = vrot.slane %v4353, 7
      %v4356 = vor.u32 %v4352, %v4355
      %v4357 = vsel %vm1197, %v4289, %v4356
      %v4359 = vshrl.u32 %v3450, 16
      %v4361 = vrot.slane %v4359, 6
      %v4362 = vshll.u32 %v3450, 16
      %v4364 = vrot.slane %v4362, 7
      %v4365 = vor.u32 %v4361, %v4364
      %v4366 = vsel %vm1197, %v4298, %v4365
      %v4368 = vshrl.u32 %v3587, 16
      %v4370 = vrot.slane %v4368, 6
      %v4371 = vshll.u32 %v3587, 16
      %v4373 = vrot.slane %v4371, 7
      %v4374 = vor.u32 %v4370, %v4373
      %v4375 = vsel %vm1197, %v4307, %v4374
      %v4376 = vrot.slane %v2997, 6
      %v4377 = vrot.slane %v2993, 7
      %v4378 = vor.u32 %v4376, %v4377
      %v4379 = vsel %vm1197, %v4311, %v4378
      %v4381 = vshrl.u32 %v3004, 16
      %v4383 = vrot.slane %v4381, 6
      %v4384 = vshll.u32 %v3004, 16
      %v4386 = vrot.slane %v4384, 7
      %v4387 = vor.u32 %v4383, %v4386
      %v4388 = vsel %vm1197, %v4320, %v4387
      %v4390 = vshrl.u32 %v3140, 16
      %v4392 = vrot.slane %v4390, 6
      %v4393 = vshll.u32 %v3140, 16
      %v4395 = vrot.slane %v4393, 7
      %v4396 = vor.u32 %v4392, %v4395
      %v4397 = vsel %vm1197, %v4329, %v4396
      %v4399 = vshrl.u32 %v3206, 16
      %v4401 = vrot.slane %v4399, 6
      %v4402 = vshll.u32 %v3206, 16
      %v4404 = vrot.slane %v4402, 7
      %v4405 = vor.u32 %v4401, %v4404
      %v4406 = vsel %vm1197, %v4338, %v4405
      %v4408 = vshrl.u32 %v3281, 16
      %v4410 = vrot.slane %v4408, 6
      %v4411 = vshll.u32 %v3281, 16
      %v4413 = vrot.slane %v4411, 7
      %v4414 = vor.u32 %v4410, %v4413
      %v4415 = vsel %vm1197, %v4347, %v4414
      %v4417 = vshrl.u32 %v3346, 16
      %v4419 = vrot.slane %v4417, 6
      %v4420 = vshll.u32 %v3346, 16
      %v4422 = vrot.slane %v4420, 7
      %v4423 = vor.u32 %v4419, %v4422
      %v4424 = vsel %vm1197, %v4356, %v4423
      %v4426 = vshrl.u32 %v3459, 16
      %v4428 = vrot.slane %v4426, 6
      %v4429 = vshll.u32 %v3459, 16
      %v4431 = vrot.slane %v4429, 7
      %v4432 = vor.u32 %v4428, %v4431
      %v4433 = vsel %vm1197, %v4365, %v4432
      %v4435 = vshrl.u32 %v3589, 16
      %v4437 = vrot.slane %v4435, 6
      %v4438 = vshll.u32 %v3589, 16
      %v4440 = vrot.slane %v4438, 7
      %v4441 = vor.u32 %v4437, %v4440
      %v4442 = vsel %vm1197, %v4374, %v4441
      %v4443 = vrot.slane %v3005, 6
      %v4444 = vrot.slane %v3001, 7
      %v4445 = vor.u32 %v4443, %v4444
      %v4446 = vsel %vm1197, %v4378, %v4445
      %v4448 = vshrl.u32 %v3012, 16
      %v4450 = vrot.slane %v4448, 6
      %v4451 = vshll.u32 %v3012, 16
      %v4453 = vrot.slane %v4451, 7
      %v4454 = vor.u32 %v4450, %v4453
      %v4455 = vsel %vm1197, %v4387, %v4454
      %v4457 = vshrl.u32 %v3142, 16
      %v4459 = vrot.slane %v4457, 6
      %v4460 = vshll.u32 %v3142, 16
      %v4462 = vrot.slane %v4460, 7
      %v4463 = vor.u32 %v4459, %v4462
      %v4464 = vsel %vm1197, %v4396, %v4463
      %v4466 = vshrl.u32 %v3210, 16
      %v4468 = vrot.slane %v4466, 6
      %v4469 = vshll.u32 %v3210, 16
      %v4471 = vrot.slane %v4469, 7
      %v4472 = vor.u32 %v4468, %v4471
      %v4473 = vsel %vm1197, %v4405, %v4472
      %v4475 = vshrl.u32 %v3283, 16
      %v4477 = vrot.slane %v4475, 6
      %v4478 = vshll.u32 %v3283, 16
      %v4480 = vrot.slane %v4478, 7
      %v4481 = vor.u32 %v4477, %v4480
      %v4482 = vsel %vm1197, %v4414, %v4481
      %v4484 = vshrl.u32 %v3348, 16
      %v4486 = vrot.slane %v4484, 6
      %v4487 = vshll.u32 %v3348, 16
      %v4489 = vrot.slane %v4487, 7
      %v4490 = vor.u32 %v4486, %v4489
      %v4491 = vsel %vm1197, %v4423, %v4490
      %v4493 = vshrl.u32 %v3468, 16
      %v4495 = vrot.slane %v4493, 6
      %v4496 = vshll.u32 %v3468, 16
      %v4498 = vrot.slane %v4496, 7
      %v4499 = vor.u32 %v4495, %v4498
      %v4500 = vsel %vm1197, %v4432, %v4499
      %v4502 = vshrl.u32 %v3591, 16
      %v4504 = vrot.slane %v4502, 6
      %v4505 = vshll.u32 %v3591, 16
      %v4507 = vrot.slane %v4505, 7
      %v4508 = vor.u32 %v4504, %v4507
      %v4509 = vsel %vm1197, %v4441, %v4508
      %v4510 = vrot.slane %v3013, 6
      %v4511 = vrot.slane %v3009, 7
      %v4512 = vor.u32 %v4510, %v4511
      %v4513 = vsel %vm1197, %v4445, %v4512
      %v4515 = vshrl.u32 %v3020, 16
      %v4517 = vrot.slane %v4515, 6
      %v4518 = vshll.u32 %v3020, 16
      %v4520 = vrot.slane %v4518, 7
      %v4521 = vor.u32 %v4517, %v4520
      %v4522 = vsel %vm1197, %v4454, %v4521
      %v4524 = vshrl.u32 %v3144, 16
      %v4526 = vrot.slane %v4524, 6
      %v4527 = vshll.u32 %v3144, 16
      %v4529 = vrot.slane %v4527, 7
      %v4530 = vor.u32 %v4526, %v4529
      %v4531 = vsel %vm1197, %v4463, %v4530
      %v4533 = vshrl.u32 %v3214, 16
      %v4535 = vrot.slane %v4533, 6
      %v4536 = vshll.u32 %v3214, 16
      %v4538 = vrot.slane %v4536, 7
      %v4539 = vor.u32 %v4535, %v4538
      %v4540 = vsel %vm1197, %v4472, %v4539
      %v4542 = vshrl.u32 %v3285, 16
      %v4544 = vrot.slane %v4542, 6
      %v4545 = vshll.u32 %v3285, 16
      %v4547 = vrot.slane %v4545, 7
      %v4548 = vor.u32 %v4544, %v4547
      %v4549 = vsel %vm1197, %v4481, %v4548
      %v4551 = vshrl.u32 %v3350, 16
      %v4553 = vrot.slane %v4551, 6
      %v4554 = vshll.u32 %v3350, 16
      %v4556 = vrot.slane %v4554, 7
      %v4557 = vor.u32 %v4553, %v4556
      %v4558 = vsel %vm1197, %v4490, %v4557
      %v4560 = vshrl.u32 %v3477, 16
      %v4562 = vrot.slane %v4560, 6
      %v4563 = vshll.u32 %v3477, 16
      %v4565 = vrot.slane %v4563, 7
      %v4566 = vor.u32 %v4562, %v4565
      %v4567 = vsel %vm1197, %v4499, %v4566
      %v4569 = vshrl.u32 %v3593, 16
      %v4571 = vrot.slane %v4569, 6
      %v4572 = vshll.u32 %v3593, 16
      %v4574 = vrot.slane %v4572, 7
      %v4575 = vor.u32 %v4571, %v4574
      %v4576 = vsel %vm1197, %v4508, %v4575
      %v4577 = vrot.slane %v3021, 6
      %v4578 = vrot.slane %v3017, 7
      %v4579 = vor.u32 %v4577, %v4578
      %v4580 = vsel %vm1197, %v4512, %v4579
      %v4582 = vshrl.u32 %v3028, 16
      %v4584 = vrot.slane %v4582, 6
      %v4585 = vshll.u32 %v3028, 16
      %v4587 = vrot.slane %v4585, 7
      %v4588 = vor.u32 %v4584, %v4587
      %v4589 = vsel %vm1197, %v4521, %v4588
      %v4591 = vshrl.u32 %v3146, 16
      %v4593 = vrot.slane %v4591, 6
      %v4594 = vshll.u32 %v3146, 16
      %v4596 = vrot.slane %v4594, 7
      %v4597 = vor.u32 %v4593, %v4596
      %v4598 = vsel %vm1197, %v4530, %v4597
      %v4600 = vshrl.u32 %v3218, 16
      %v4602 = vrot.slane %v4600, 6
      %v4603 = vshll.u32 %v3218, 16
      %v4605 = vrot.slane %v4603, 7
      %v4606 = vor.u32 %v4602, %v4605
      %v4607 = vsel %vm1197, %v4539, %v4606
      %v4609 = vshrl.u32 %v3287, 16
      %v4611 = vrot.slane %v4609, 6
      %v4612 = vshll.u32 %v3287, 16
      %v4614 = vrot.slane %v4612, 7
      %v4615 = vor.u32 %v4611, %v4614
      %v4616 = vsel %vm1197, %v4548, %v4615
      %v4618 = vshrl.u32 %v3352, 16
      %v4620 = vrot.slane %v4618, 6
      %v4621 = vshll.u32 %v3352, 16
      %v4623 = vrot.slane %v4621, 7
      %v4624 = vor.u32 %v4620, %v4623
      %v4625 = vsel %vm1197, %v4557, %v4624
      %v4627 = vshrl.u32 %v3486, 16
      %v4629 = vrot.slane %v4627, 6
      %v4630 = vshll.u32 %v3486, 16
      %v4632 = vrot.slane %v4630, 7
      %v4633 = vor.u32 %v4629, %v4632
      %v4634 = vsel %vm1197, %v4566, %v4633
      %v4636 = vshrl.u32 %v3595, 16
      %v4638 = vrot.slane %v4636, 6
      %v4639 = vshll.u32 %v3595, 16
      %v4641 = vrot.slane %v4639, 7
      %v4642 = vor.u32 %v4638, %v4641
      %v4643 = vsel %vm1197, %v4575, %v4642
      %v4644 = vrot.slane %v3029, 6
      %v4645 = vrot.slane %v3025, 7
      %v4646 = vor.u32 %v4644, %v4645
      %v4647 = vsel %vm1197, %v4579, %v4646
      %v4649 = vshrl.u32 %v3036, 16
      %v4651 = vrot.slane %v4649, 6
      %v4652 = vshll.u32 %v3036, 16
      %v4654 = vrot.slane %v4652, 7
      %v4655 = vor.u32 %v4651, %v4654
      %v4656 = vsel %vm1197, %v4588, %v4655
      %v4658 = vshrl.u32 %v3148, 16
      %v4660 = vrot.slane %v4658, 6
      %v4661 = vshll.u32 %v3148, 16
      %v4663 = vrot.slane %v4661, 7
      %v4664 = vor.u32 %v4660, %v4663
      %v4665 = vsel %vm1197, %v4597, %v4664
      %v4667 = vshrl.u32 %v3222, 16
      %v4669 = vrot.slane %v4667, 6
      %v4670 = vshll.u32 %v3222, 16
      %v4672 = vrot.slane %v4670, 7
      %v4673 = vor.u32 %v4669, %v4672
      %v4674 = vsel %vm1197, %v4606, %v4673
      %v4676 = vshrl.u32 %v3289, 16
      %v4678 = vrot.slane %v4676, 6
      %v4679 = vshll.u32 %v3289, 16
      %v4681 = vrot.slane %v4679, 7
      %v4682 = vor.u32 %v4678, %v4681
      %v4683 = vsel %vm1197, %v4615, %v4682
      %v4685 = vshrl.u32 %v3354, 16
      %v4687 = vrot.slane %v4685, 6
      %v4688 = vshll.u32 %v3354, 16
      %v4690 = vrot.slane %v4688, 7
      %v4691 = vor.u32 %v4687, %v4690
      %v4692 = vsel %vm1197, %v4624, %v4691
      %v4694 = vshrl.u32 %v3495, 16
      %v4696 = vrot.slane %v4694, 6
      %v4697 = vshll.u32 %v3495, 16
      %v4699 = vrot.slane %v4697, 7
      %v4700 = vor.u32 %v4696, %v4699
      %v4701 = vsel %vm1197, %v4633, %v4700
      %v4703 = vshrl.u32 %v3597, 16
      %v4705 = vrot.slane %v4703, 6
      %v4706 = vshll.u32 %v3597, 16
      %v4708 = vrot.slane %v4706, 7
      %v4709 = vor.u32 %v4705, %v4708
      %v4710 = vsel %vm1197, %v4642, %v4709
      %v4711 = vrot.slane %v3037, 6
      %v4712 = vrot.slane %v3033, 7
      %v4713 = vor.u32 %v4711, %v4712
      %v4714 = vsel %vm1197, %v4646, %v4713
      %v4716 = vshrl.u32 %v3044, 16
      %v4718 = vrot.slane %v4716, 6
      %v4719 = vshll.u32 %v3044, 16
      %v4721 = vrot.slane %v4719, 7
      %v4722 = vor.u32 %v4718, %v4721
      %v4723 = vsel %vm1197, %v4655, %v4722
      %v4725 = vshrl.u32 %v3150, 16
      %v4727 = vrot.slane %v4725, 6
      %v4728 = vshll.u32 %v3150, 16
      %v4730 = vrot.slane %v4728, 7
      %v4731 = vor.u32 %v4727, %v4730
      %v4732 = vsel %vm1197, %v4664, %v4731
      %v4734 = vshrl.u32 %v3226, 16
      %v4736 = vrot.slane %v4734, 6
      %v4737 = vshll.u32 %v3226, 16
      %v4739 = vrot.slane %v4737, 7
      %v4740 = vor.u32 %v4736, %v4739
      %v4741 = vsel %vm1197, %v4673, %v4740
      %v4743 = vshrl.u32 %v3291, 16
      %v4745 = vrot.slane %v4743, 6
      %v4746 = vshll.u32 %v3291, 16
      %v4748 = vrot.slane %v4746, 7
      %v4749 = vor.u32 %v4745, %v4748
      %v4750 = vsel %vm1197, %v4682, %v4749
      %v4752 = vshrl.u32 %v3356, 16
      %v4754 = vrot.slane %v4752, 6
      %v4755 = vshll.u32 %v3356, 16
      %v4757 = vrot.slane %v4755, 7
      %v4758 = vor.u32 %v4754, %v4757
      %v4759 = vsel %vm1197, %v4691, %v4758
      %v4761 = vshrl.u32 %v3504, 16
      %v4763 = vrot.slane %v4761, 6
      %v4764 = vshll.u32 %v3504, 16
      %v4766 = vrot.slane %v4764, 7
      %v4767 = vor.u32 %v4763, %v4766
      %v4768 = vsel %vm1197, %v4700, %v4767
      %v4770 = vshrl.u32 %v3599, 16
      %v4772 = vrot.slane %v4770, 6
      %v4773 = vshll.u32 %v3599, 16
      %v4775 = vrot.slane %v4773, 7
      %v4776 = vor.u32 %v4772, %v4775
      %v4777 = vsel %vm1197, %v4709, %v4776
      %v4778 = vrot.slane %v3045, 6
      %v4779 = vrot.slane %v3041, 7
      %v4780 = vor.u32 %v4778, %v4779
      %v4781 = vsel %vm1197, %v4713, %v4780
      %v4783 = vshrl.u32 %v3052, 16
      %v4785 = vrot.slane %v4783, 6
      %v4786 = vshll.u32 %v3052, 16
      %v4788 = vrot.slane %v4786, 7
      %v4789 = vor.u32 %v4785, %v4788
      %v4790 = vsel %vm1197, %v4722, %v4789
      %v4792 = vshrl.u32 %v3152, 16
      %v4794 = vrot.slane %v4792, 6
      %v4795 = vshll.u32 %v3152, 16
      %v4797 = vrot.slane %v4795, 7
      %v4798 = vor.u32 %v4794, %v4797
      %v4799 = vsel %vm1197, %v4731, %v4798
      %v4801 = vshrl.u32 %v3230, 16
      %v4803 = vrot.slane %v4801, 6
      %v4804 = vshll.u32 %v3230, 16
      %v4806 = vrot.slane %v4804, 7
      %v4807 = vor.u32 %v4803, %v4806
      %v4808 = vsel %vm1197, %v4740, %v4807
      %v4810 = vshrl.u32 %v3293, 16
      %v4812 = vrot.slane %v4810, 6
      %v4813 = vshll.u32 %v3293, 16
      %v4815 = vrot.slane %v4813, 7
      %v4816 = vor.u32 %v4812, %v4815
      %v4817 = vsel %vm1197, %v4749, %v4816
      %v4819 = vshrl.u32 %v3358, 16
      %v4821 = vrot.slane %v4819, 6
      %v4822 = vshll.u32 %v3358, 16
      %v4824 = vrot.slane %v4822, 7
      %v4825 = vor.u32 %v4821, %v4824
      %v4826 = vsel %vm1197, %v4758, %v4825
      %v4828 = vshrl.u32 %v3513, 16
      %v4830 = vrot.slane %v4828, 6
      %v4831 = vshll.u32 %v3513, 16
      %v4833 = vrot.slane %v4831, 7
      %v4834 = vor.u32 %v4830, %v4833
      %v4835 = vsel %vm1197, %v4767, %v4834
      %v4837 = vshrl.u32 %v3601, 16
      %v4839 = vrot.slane %v4837, 6
      %v4840 = vshll.u32 %v3601, 16
      %v4842 = vrot.slane %v4840, 7
      %v4843 = vor.u32 %v4839, %v4842
      %v4844 = vsel %vm1197, %v4776, %v4843
      %v4845 = vrot.slane %v3053, 6
      %v4846 = vrot.slane %v3049, 7
      %v4847 = vor.u32 %v4845, %v4846
      %v4848 = vsel %vm1197, %v4780, %v4847
      %v4850 = vshrl.u32 %v3060, 16
      %v4852 = vrot.slane %v4850, 6
      %v4853 = vshll.u32 %v3060, 16
      %v4855 = vrot.slane %v4853, 7
      %v4856 = vor.u32 %v4852, %v4855
      %v4857 = vsel %vm1197, %v4789, %v4856
      %v4859 = vshrl.u32 %v3154, 16
      %v4861 = vrot.slane %v4859, 6
      %v4862 = vshll.u32 %v3154, 16
      %v4864 = vrot.slane %v4862, 7
      %v4865 = vor.u32 %v4861, %v4864
      %v4866 = vsel %vm1197, %v4798, %v4865
      %v4868 = vshrl.u32 %v3234, 16
      %v4870 = vrot.slane %v4868, 6
      %v4871 = vshll.u32 %v3234, 16
      %v4873 = vrot.slane %v4871, 7
      %v4874 = vor.u32 %v4870, %v4873
      %v4875 = vsel %vm1197, %v4807, %v4874
      %v4877 = vshrl.u32 %v3295, 16
      %v4879 = vrot.slane %v4877, 6
      %v4880 = vshll.u32 %v3295, 16
      %v4882 = vrot.slane %v4880, 7
      %v4883 = vor.u32 %v4879, %v4882
      %v4884 = vsel %vm1197, %v4816, %v4883
      %v4886 = vshrl.u32 %v3360, 16
      %v4888 = vrot.slane %v4886, 6
      %v4889 = vshll.u32 %v3360, 16
      %v4891 = vrot.slane %v4889, 7
      %v4892 = vor.u32 %v4888, %v4891
      %v4893 = vsel %vm1197, %v4825, %v4892
      %v4895 = vshrl.u32 %v3522, 16
      %v4897 = vrot.slane %v4895, 6
      %v4898 = vshll.u32 %v3522, 16
      %v4900 = vrot.slane %v4898, 7
      %v4901 = vor.u32 %v4897, %v4900
      %v4902 = vsel %vm1197, %v4834, %v4901
      %v4904 = vshrl.u32 %v3603, 16
      %v4906 = vrot.slane %v4904, 6
      %v4907 = vshll.u32 %v3603, 16
      %v4909 = vrot.slane %v4907, 7
      %v4910 = vor.u32 %v4906, %v4909
      %v4911 = vsel %vm1197, %v4843, %v4910
      %v4912 = vrot.slane %v3061, 6
      %v4913 = vrot.slane %v3057, 7
      %v4914 = vor.u32 %v4912, %v4913
      %v4915 = vsel %vm1197, %v4847, %v4914
      %v4917 = vshrl.u32 %v3068, 16
      %v4919 = vrot.slane %v4917, 6
      %v4920 = vshll.u32 %v3068, 16
      %v4922 = vrot.slane %v4920, 7
      %v4923 = vor.u32 %v4919, %v4922
      %v4924 = vsel %vm1197, %v4856, %v4923
      %v4926 = vshrl.u32 %v3156, 16
      %v4928 = vrot.slane %v4926, 6
      %v4929 = vshll.u32 %v3156, 16
      %v4931 = vrot.slane %v4929, 7
      %v4932 = vor.u32 %v4928, %v4931
      %v4933 = vsel %vm1197, %v4865, %v4932
      %v4935 = vshrl.u32 %v3238, 16
      %v4937 = vrot.slane %v4935, 6
      %v4938 = vshll.u32 %v3238, 16
      %v4940 = vrot.slane %v4938, 7
      %v4941 = vor.u32 %v4937, %v4940
      %v4942 = vsel %vm1197, %v4874, %v4941
      %v4944 = vshrl.u32 %v3297, 16
      %v4946 = vrot.slane %v4944, 6
      %v4947 = vshll.u32 %v3297, 16
      %v4949 = vrot.slane %v4947, 7
      %v4950 = vor.u32 %v4946, %v4949
      %v4951 = vsel %vm1197, %v4883, %v4950
      %v4953 = vshrl.u32 %v3362, 16
      %v4955 = vrot.slane %v4953, 6
      %v4956 = vshll.u32 %v3362, 16
      %v4958 = vrot.slane %v4956, 7
      %v4959 = vor.u32 %v4955, %v4958
      %v4960 = vsel %vm1197, %v4892, %v4959
      %v4962 = vshrl.u32 %v3531, 16
      %v4964 = vrot.slane %v4962, 6
      %v4965 = vshll.u32 %v3531, 16
      %v4967 = vrot.slane %v4965, 7
      %v4968 = vor.u32 %v4964, %v4967
      %v4969 = vsel %vm1197, %v4901, %v4968
      %v4971 = vshrl.u32 %v3605, 16
      %v4973 = vrot.slane %v4971, 6
      %v4974 = vshll.u32 %v3605, 16
      %v4976 = vrot.slane %v4974, 7
      %v4977 = vor.u32 %v4973, %v4976
      %v4978 = vsel %vm1197, %v4910, %v4977
      %v4979 = vrot.slane %v3069, 6
      %v4980 = vrot.slane %v3065, 7
      %v4981 = vor.u32 %v4979, %v4980
      %v4982 = vsel %vm1197, %v4914, %v4981
      %v4984 = vshrl.u32 %v3076, 16
      %v4986 = vrot.slane %v4984, 6
      %v4987 = vshll.u32 %v3076, 16
      %v4989 = vrot.slane %v4987, 7
      %v4990 = vor.u32 %v4986, %v4989
      %v4991 = vsel %vm1197, %v4923, %v4990
      %v4993 = vshrl.u32 %v3158, 16
      %v4995 = vrot.slane %v4993, 6
      %v4996 = vshll.u32 %v3158, 16
      %v4998 = vrot.slane %v4996, 7
      %v4999 = vor.u32 %v4995, %v4998
      %v5000 = vsel %vm1197, %v4932, %v4999
      %v5002 = vshrl.u32 %v3242, 16
      %v5004 = vrot.slane %v5002, 6
      %v5005 = vshll.u32 %v3242, 16
      %v5007 = vrot.slane %v5005, 7
      %v5008 = vor.u32 %v5004, %v5007
      %v5009 = vsel %vm1197, %v4941, %v5008
      %v5011 = vshrl.u32 %v3299, 16
      %v5013 = vrot.slane %v5011, 6
      %v5014 = vshll.u32 %v3299, 16
      %v5016 = vrot.slane %v5014, 7
      %v5017 = vor.u32 %v5013, %v5016
      %v5018 = vsel %vm1197, %v4950, %v5017
      %v5020 = vshrl.u32 %v3364, 16
      %v5022 = vrot.slane %v5020, 6
      %v5023 = vshll.u32 %v3364, 16
      %v5025 = vrot.slane %v5023, 7
      %v5026 = vor.u32 %v5022, %v5025
      %v5027 = vsel %vm1197, %v4959, %v5026
      %v5029 = vshrl.u32 %v3540, 16
      %v5031 = vrot.slane %v5029, 6
      %v5032 = vshll.u32 %v3540, 16
      %v5034 = vrot.slane %v5032, 7
      %v5035 = vor.u32 %v5031, %v5034
      %v5036 = vsel %vm1197, %v4968, %v5035
      %v5038 = vshrl.u32 %v3607, 16
      %v5040 = vrot.slane %v5038, 6
      %v5041 = vshll.u32 %v3607, 16
      %v5043 = vrot.slane %v5041, 7
      %v5044 = vor.u32 %v5040, %v5043
      %v5045 = vsel %vm1197, %v4977, %v5044
      %v5046 = vrot.slane %v3077, 6
      %v5047 = vrot.slane %v3073, 7
      %v5048 = vor.u32 %v5046, %v5047
      %v5049 = vsel %vm1197, %v4981, %v5048
      %v5051 = vshrl.u32 %v3084, 16
      %v5053 = vrot.slane %v5051, 6
      %v5054 = vshll.u32 %v3084, 16
      %v5056 = vrot.slane %v5054, 7
      %v5057 = vor.u32 %v5053, %v5056
      %v5058 = vsel %vm1197, %v4990, %v5057
      %v5060 = vshrl.u32 %v3160, 16
      %v5062 = vrot.slane %v5060, 6
      %v5063 = vshll.u32 %v3160, 16
      %v5065 = vrot.slane %v5063, 7
      %v5066 = vor.u32 %v5062, %v5065
      %v5067 = vsel %vm1197, %v4999, %v5066
      %v5069 = vshrl.u32 %v3251, 16
      %v5071 = vrot.slane %v5069, 6
      %v5072 = vshll.u32 %v3251, 16
      %v5074 = vrot.slane %v5072, 7
      %v5075 = vor.u32 %v5071, %v5074
      %v5076 = vsel %vm1197, %v5008, %v5075
      %v5078 = vshrl.u32 %v3301, 16
      %v5080 = vrot.slane %v5078, 6
      %v5081 = vshll.u32 %v3301, 16
      %v5083 = vrot.slane %v5081, 7
      %v5084 = vor.u32 %v5080, %v5083
      %v5085 = vsel %vm1197, %v5017, %v5084
      %v5087 = vshrl.u32 %v3366, 16
      %v5089 = vrot.slane %v5087, 6
      %v5090 = vshll.u32 %v3366, 16
      %v5092 = vrot.slane %v5090, 7
      %v5093 = vor.u32 %v5089, %v5092
      %v5094 = vsel %vm1197, %v5026, %v5093
      %v5096 = vshrl.u32 %v3549, 16
      %v5098 = vrot.slane %v5096, 6
      %v5099 = vshll.u32 %v3549, 16
      %v5101 = vrot.slane %v5099, 7
      %v5102 = vor.u32 %v5098, %v5101
      %v5103 = vsel %vm1197, %v5035, %v5102
      %v5105 = vshrl.u32 %v3609, 16
      %v5107 = vrot.slane %v5105, 6
      %v5108 = vshll.u32 %v3609, 16
      %v5110 = vrot.slane %v5108, 7
      %v5111 = vor.u32 %v5107, %v5110
      %v5112 = vsel %vm1197, %v5044, %v5111
      %v5113 = vrot.slane %v3085, 6
      %v5114 = vrot.slane %v3081, 7
      %v5115 = vor.u32 %v5113, %v5114
      %v5116 = vsel %vm1197, %v5048, %v5115
      %v5118 = vshrl.u32 %v3092, 16
      %v5120 = vrot.slane %v5118, 6
      %v5121 = vshll.u32 %v3092, 16
      %v5123 = vrot.slane %v5121, 7
      %v5124 = vor.u32 %v5120, %v5123
      %v5125 = vsel %vm1197, %v5057, %v5124
      %v5127 = vshrl.u32 %v3166, 16
      %v5129 = vrot.slane %v5127, 6
      %v5130 = vshll.u32 %v3166, 16
      %v5132 = vrot.slane %v5130, 7
      %v5133 = vor.u32 %v5129, %v5132
      %v5134 = vsel %vm1197, %v5066, %v5133
      %v5136 = vshrl.u32 %v3260, 16
      %v5138 = vrot.slane %v5136, 6
      %v5139 = vshll.u32 %v3260, 16
      %v5141 = vrot.slane %v5139, 7
      %v5142 = vor.u32 %v5138, %v5141
      %v5143 = vsel %vm1197, %v5075, %v5142
      %v5145 = vshrl.u32 %v3303, 16
      %v5147 = vrot.slane %v5145, 6
      %v5148 = vshll.u32 %v3303, 16
      %v5150 = vrot.slane %v5148, 7
      %v5151 = vor.u32 %v5147, %v5150
      %v5152 = vsel %vm1197, %v5084, %v5151
      %v5154 = vshrl.u32 %v3368, 16
      %v5156 = vrot.slane %v5154, 6
      %v5157 = vshll.u32 %v3368, 16
      %v5159 = vrot.slane %v5157, 7
      %v5160 = vor.u32 %v5156, %v5159
      %v5161 = vsel %vm1197, %v5093, %v5160
      %v5163 = vshrl.u32 %v3558, 16
      %v5165 = vrot.slane %v5163, 6
      %v5166 = vshll.u32 %v3558, 16
      %v5168 = vrot.slane %v5166, 7
      %v5169 = vor.u32 %v5165, %v5168
      %v5170 = vsel %vm1197, %v5102, %v5169
      %v5172 = vshrl.u32 %v3611, 16
      %v5174 = vrot.slane %v5172, 6
      %v5175 = vshll.u32 %v3611, 16
      %v5177 = vrot.slane %v5175, 7
      %v5178 = vor.u32 %v5174, %v5177
      %v5179 = vsel %vm1197, %v5111, %v5178
      %v5180 = vrot.slane %v3093, 6
      %v5181 = vrot.slane %v3089, 7
      %v5182 = vor.u32 %v5180, %v5181
      %v5183 = vsel %vm1197, %v5115, %v5182
      %v5185 = vshrl.u32 %v3095, 16
      %v5187 = vrot.slane %v5185, 6
      %v5188 = vshll.u32 %v3095, 16
      %v5190 = vrot.slane %v5188, 7
      %v5191 = vor.u32 %v5187, %v5190
      %v5192 = vsel %vm1197, %v5124, %v5191
      %v5194 = vshrl.u32 %v3159, 16
      %v5196 = vrot.slane %v5194, 6
      %v5197 = vshll.u32 %v3159, 16
      %v5199 = vrot.slane %v5197, 7
      %v5200 = vor.u32 %v5196, %v5199
      %v5201 = vsel %vm1197, %v5066, %v5200
      %v5203 = vshrl.u32 %v3165, 16
      %v5205 = vrot.slane %v5203, 6
      %v5206 = vshll.u32 %v3165, 16
      %v5208 = vrot.slane %v5206, 7
      %v5209 = vor.u32 %v5205, %v5208
      %v5210 = vsel %vm1197, %v5133, %v5209
      %v5212 = vshrl.u32 %v3259, 16
      %v5214 = vrot.slane %v5212, 6
      %v5215 = vshll.u32 %v3259, 16
      %v5217 = vrot.slane %v5215, 7
      %v5218 = vor.u32 %v5214, %v5217
      %v5219 = vsel %vm1197, %v5142, %v5218
      %v5221 = vshrl.u32 %v3305, 16
      %v5223 = vrot.slane %v5221, 6
      %v5224 = vshll.u32 %v3305, 16
      %v5226 = vrot.slane %v5224, 7
      %v5227 = vor.u32 %v5223, %v5226
      %v5228 = vsel %vm1197, %v5151, %v5227
      %v5230 = vshrl.u32 %v3370, 16
      %v5232 = vrot.slane %v5230, 6
      %v5233 = vshll.u32 %v3370, 16
      %v5235 = vrot.slane %v5233, 7
      %v5236 = vor.u32 %v5232, %v5235
      %v5237 = vsel %vm1197, %v5160, %v5236
      %v5239 = vshrl.u32 %v3567, 16
      %v5241 = vrot.slane %v5239, 6
      %v5242 = vshll.u32 %v3567, 16
      %v5244 = vrot.slane %v5242, 7
      %v5245 = vor.u32 %v5241, %v5244
      %v5246 = vsel %vm1197, %v5169, %v5245
      %v5248 = vshrl.u32 %v3613, 16
      %v5250 = vrot.slane %v5248, 6
      %v5251 = vshll.u32 %v3613, 16
      %v5253 = vrot.slane %v5251, 7
      %v5254 = vor.u32 %v5250, %v5253
      %v5255 = vsel %vm1197, %v5178, %v5254
      %v5571 = vunpack.c.l.b16 %v3614
      %v5572 = vunpack.c.l.b16 %v3615
      %v5573 = vunpack.c.l.b16 %v3616
      %v5574 = vunpack.c.l.b16 %v3617
      %v5575 = vunpack.c.l.b16 %v3618
      %v5576 = vunpack.c.l.b16 %v3619
      %v5577 = vunpack.c.l.b16 %v3620
      %v5578 = vunpack.c.l.b16 %v3621
      %v5579 = vunpack.c.l.b16 %v3622
      %v5580 = vunpack.c.l.b16 %v3623
      %v5581 = vunpack.c.l.b16 %v3624
      %v5582 = vunpack.c.l.b16 %v3625
      %v5583 = vunpack.c.l.b16 %v3626
      %v5584 = vunpack.c.l.b16 %v3627
      %v5585 = vunpack.c.l.b16 %v3628
      %v5586 = vunpack.c.l.b16 %v3629
      %v5587 = vunpack.c.l.b16 %v3630
      %v5588 = vunpack.c.l.b16 %v3631
      %v5589 = vunpack.c.l.b16 %v3632
      %v5590 = vunpack.c.l.b16 %v3633
      %v5591 = vunpack.c.l.b16 %v3634
      %v5592 = vunpack.c.l.b16 %v3635
      %v5593 = vunpack.c.l.b16 %v3636
      %v5594 = vunpack.c.l.b16 %v3637
      %v5595 = vunpack.c.l.b16 %v3638
      %v5596 = vunpack.c.l.b16 %v3639
      %v5597 = vunpack.c.l.b16 %v3640
      %v5598 = vunpack.c.l.b16 %v3641
      %v5599 = vunpack.c.l.b16 %v3642
      %v5600 = vunpack.c.l.b16 %v3643
      %v5601 = vunpack.c.l.b16 %v3644
      %v5602 = vunpack.c.l.b16 %v3645
      %v5603 = vunpack.c.l.b16 %v3646
      %v5604 = vunpack.c.l.b16 %v3647
      %v5605 = vunpack.c.l.b16 %v3648
      %v5606 = vunpack.c.l.b16 %v3649
      %v5607 = vunpack.c.l.b16 %v3650
      %v5608 = vunpack.c.l.b16 %v3651
      %v5609 = vunpack.c.l.b16 %v3652
      %v5610 = vunpack.c.l.b16 %v3653
      %v5611 = vunpack.c.l.b16 %v3654
      %v5612 = vunpack.c.l.b16 %v3655
      %v5613 = vunpack.c.l.b16 %v3656
      %v5614 = vunpack.c.l.b16 %v3657
      %v5615 = vunpack.c.l.b16 %v3658
      %v5616 = vunpack.c.l.b16 %v3659
      %v5617 = vunpack.c.l.b16 %v3660
      %v5618 = vunpack.c.l.b16 %v3661
      %v5619 = vunpack.c.l.b16 %v3662
      %v5620 = vunpack.c.l.b16 %v3663
      %v5621 = vunpack.c.l.b16 %v3664
      %v5622 = vunpack.c.l.b16 %v3665
      %v5623 = vunpack.c.l.b16 %v3666
      %v5624 = vunpack.c.l.b16 %v3667
      %v5625 = vunpack.c.l.b16 %v3668
      %v5626 = vunpack.c.l.b16 %v3669
      %v5627 = vunpack.c.l.b16 %v3670
      %v5628 = vunpack.c.l.b16 %v3671
      %v5629 = vunpack.c.l.b16 %v3672
      %v5630 = vunpack.c.l.b16 %v3673
      %v5631 = vunpack.c.l.b16 %v3674
      %v5632 = vunpack.c.l.b16 %v3675
      %v5633 = vunpack.c.l.b16 %v3676
      %v5634 = vunpack.c.l.b16 %v3677
      %v5635 = vunpack.c.l.b16 %v3678
      %v5636 = vunpack.c.l.b16 %v3679
      %v5637 = vunpack.c.l.b16 %v3680
      %v5638 = vunpack.c.l.b16 %v3681
      %v5639 = vunpack.c.l.b16 %v3682
      %v5640 = vunpack.c.l.b16 %v3683
      %v5641 = vunpack.c.l.b16 %v3684
      %v5642 = vunpack.c.l.b16 %v3685
      %v5643 = vunpack.c.l.b16 %v3686
      %v5644 = vunpack.c.l.b16 %v3687
      %v5645 = vunpack.c.l.b16 %v3688
      %v5646 = vunpack.c.l.b16 %v3689
      %v5647 = vunpack.c.l.b16 %v3690
      %v5648 = vunpack.c.l.b16 %v3691
      %v5649 = vunpack.c.l.b16 %v3692
      %v5650 = vunpack.c.l.b16 %v3693
      %v5651 = vunpack.c.l.b16 %v3694
      %v5652 = vunpack.c.l.b16 %v3695
      %v5653 = vunpack.c.l.b16 %v3696
      %v5654 = vunpack.c.l.b16 %v3697
      %v5655 = vunpack.c.l.b16 %v3698
      %v5656 = vunpack.c.l.b16 %v3699
      %v5657 = vunpack.c.l.b16 %v3700
      %v5658 = vunpack.c.l.b16 %v3701
      %v5659 = vunpack.c.l.b16 %v3702
      %v5660 = vunpack.c.l.b16 %v3703
      %v5661 = vunpack.c.l.b16 %v3704
      %v5662 = vunpack.c.l.b16 %v3705
      %v5663 = vunpack.c.l.b16 %v3706
      %v5664 = vunpack.c.l.b16 %v3707
      %v5665 = vunpack.c.l.b16 %v3708
      %v5666 = vunpack.c.l.b16 %v3709
      %v5667 = vunpack.c.l.b16 %v3710
      %v5668 = vunpack.c.l.b16 %v3711
      %v5669 = vunpack.c.l.b16 %v3712
      %v5670 = vunpack.c.l.b16 %v3713
      %v5671 = vunpack.c.l.b16 %v3714
      %v5672 = vunpack.c.l.b16 %v3715
      %v5673 = vunpack.c.l.b16 %v3716
      %v5674 = vunpack.c.l.b16 %v3717
      %v5675 = vunpack.c.l.b16 %v3718
      %v5676 = vunpack.c.l.b16 %v3719
      %v5677 = vunpack.c.l.b16 %v3720
      %v5678 = vunpack.c.l.b16 %v3721
      %v5679 = vunpack.c.l.b16 %v3722
      %v5680 = vunpack.c.l.b16 %v3723
      %v5681 = vunpack.c.l.b16 %v3724
      %v5682 = vunpack.c.l.b16 %v3725
      %v5683 = vunpack.c.l.b16 %v3726
      %v5684 = vunpack.c.l.b16 %v3727
      %v5685 = vunpack.c.l.b16 %v3728
      %v5686 = vunpack.c.l.b16 %v3729
      %v5687 = vunpack.c.l.b16 %v3730
      %v5688 = vunpack.c.l.b16 %v3731
      %v5689 = vunpack.c.l.b16 %v3732
      %v5690 = vunpack.c.l.b16 %v3733
      %v5691 = vunpack.c.l.b16 %v3734
      %v5692 = vunpack.c.l.b16 %v3735
      %v5693 = vunpack.c.l.b16 %v3736
      %v5694 = vunpack.c.l.b16 %v3737
      %v5695 = vunpack.c.l.b16 %v3738
      %v5696 = vunpack.c.l.b16 %v3739
      %v5697 = vunpack.c.l.b16 %v3740
      %v5698 = vunpack.c.l.b16 %v3741
      %v5699 = vunpack.c.l.b16 %v3742
      %v5700 = vunpack.c.l.b16 %v3743
      %v5701 = vunpack.c.l.b16 %v3744
      %v5702 = vunpack.c.l.b16 %v3745
      %v5703 = vunpack.c.l.b16 %v3746
      %v5704 = vunpack.c.l.b16 %v3747
      %v5705 = vunpack.c.l.b16 %v3748
      %v5706 = vunpack.c.l.b16 %v3749
      %v5707 = vunpack.c.l.b16 %v3750
      %v5708 = vunpack.c.l.b16 %v3751
      %v5709 = vunpack.c.l.b16 %v3752
      %v5710 = vunpack.c.l.b16 %v3753
      %v5711 = vunpack.c.l.b16 %v3754
      %v5712 = vunpack.c.l.b16 %v3755
      %v5713 = vunpack.c.l.b16 %v3756
      %v5714 = vunpack.c.l.b16 %v3757
      %v5715 = vpack.c.b16 %v5572, %v5571
      %v5716 = vpack.c.b16 %v5574, %v5573
      %v5717 = vpack.c.b16 %v5576, %v5575
      %v5718 = vpack.c.b16 %v5578, %v5577
      %v5719 = vpack.c.b16 %v5580, %v5579
      %v5720 = vpack.c.b16 %v5582, %v5581
      %v5721 = vpack.c.b16 %v5584, %v5583
      %v5722 = vpack.c.b16 %v5586, %v5585
      %v5723 = vpack.c.b16 %v5588, %v5587
      %v5724 = vpack.c.b16 %v5590, %v5589
      %v5725 = vpack.c.b16 %v5592, %v5591
      %v5726 = vpack.c.b16 %v5594, %v5593
      %v5727 = vpack.c.b16 %v5596, %v5595
      %v5728 = vpack.c.b16 %v5598, %v5597
      %v5729 = vpack.c.b16 %v5600, %v5599
      %v5730 = vpack.c.b16 %v5602, %v5601
      %v5731 = vpack.c.b16 %v5604, %v5603
      %v5732 = vpack.c.b16 %v5606, %v5605
      %v5733 = vpack.c.b16 %v5608, %v5607
      %v5734 = vpack.c.b16 %v5610, %v5609
      %v5735 = vpack.c.b16 %v5612, %v5611
      %v5736 = vpack.c.b16 %v5614, %v5613
      %v5737 = vpack.c.b16 %v5616, %v5615
      %v5738 = vpack.c.b16 %v5618, %v5617
      %v5739 = vpack.c.b16 %v5620, %v5619
      %v5740 = vpack.c.b16 %v5622, %v5621
      %v5741 = vpack.c.b16 %v5624, %v5623
      %v5742 = vpack.c.b16 %v5626, %v5625
      %v5743 = vpack.c.b16 %v5628, %v5627
      %v5744 = vpack.c.b16 %v5630, %v5629
      %v5745 = vpack.c.b16 %v5632, %v5631
      %v5746 = vpack.c.b16 %v5634, %v5633
      %v5747 = vpack.c.b16 %v5636, %v5635
      %v5748 = vpack.c.b16 %v5638, %v5637
      %v5749 = vpack.c.b16 %v5640, %v5639
      %v5750 = vpack.c.b16 %v5642, %v5641
      %v5751 = vpack.c.b16 %v5644, %v5643
      %v5752 = vpack.c.b16 %v5646, %v5645
      %v5753 = vpack.c.b16 %v5648, %v5647
      %v5754 = vpack.c.b16 %v5650, %v5649
      %v5755 = vpack.c.b16 %v5652, %v5651
      %v5756 = vpack.c.b16 %v5654, %v5653
      %v5757 = vpack.c.b16 %v5656, %v5655
      %v5758 = vpack.c.b16 %v5658, %v5657
      %v5759 = vpack.c.b16 %v5660, %v5659
      %v5760 = vpack.c.b16 %v5662, %v5661
      %v5761 = vpack.c.b16 %v5664, %v5663
      %v5762 = vpack.c.b16 %v5666, %v5665
      %v5763 = vpack.c.b16 %v5668, %v5667
      %v5764 = vpack.c.b16 %v5670, %v5669
      %v5765 = vpack.c.b16 %v5672, %v5671
      %v5766 = vpack.c.b16 %v5674, %v5673
      %v5767 = vpack.c.b16 %v5676, %v5675
      %v5768 = vpack.c.b16 %v5678, %v5677
      %v5769 = vpack.c.b16 %v5680, %v5679
      %v5770 = vpack.c.b16 %v5682, %v5681
      %v5771 = vpack.c.b16 %v5684, %v5683
      %v5772 = vpack.c.b16 %v5686, %v5685
      %v5773 = vpack.c.b16 %v5688, %v5687
      %v5774 = vpack.c.b16 %v5690, %v5689
      %v5775 = vpack.c.b16 %v5692, %v5691
      %v5776 = vpack.c.b16 %v5694, %v5693
      %v5777 = vpack.c.b16 %v5696, %v5695
      %v5778 = vpack.c.b16 %v5698, %v5697
      %v5779 = vpack.c.b16 %v5700, %v5699
      %v5780 = vpack.c.b16 %v5702, %v5701
      %v5781 = vpack.c.b16 %v5704, %v5703
      %v5782 = vpack.c.b16 %v5706, %v5705
      %v5783 = vpack.c.b16 %v5708, %v5707
      %v5784 = vpack.c.b16 %v5710, %v5709
      %v5785 = vpack.c.b16 %v5712, %v5711
      %v5786 = vpack.c.b16 %v5714, %v5713
      %5859 = vmatprep.subr.bf16.mxu0 0
      %5860 = vmatpush1.bf16.msra.mxu0 %v5715
      %5861 = vmatprep.subr.bf16.mxu0 0
      %5862 = vmatpush1.bf16.msra.mxu0 %v5716
      %5863 = vmatprep.subr.bf16.mxu0 0
      %5864 = vmatpush1.bf16.msra.mxu0 %v5717
      %5865 = vmatprep.subr.bf16.mxu0 0
      %5866 = vmatpush1.bf16.msra.mxu0 %v5718
      %5867 = vmatprep.subr.bf16.mxu0 0
      %5868 = vmatpush1.bf16.msra.mxu0 %v5719
      %5869 = vmatprep.subr.bf16.mxu0 0
      %5870 = vmatpush1.bf16.msra.mxu0 %v5720
      %5871 = vmatprep.subr.bf16.mxu0 0
      %5872 = vmatpush1.bf16.msra.mxu0 %v5721
      %5873 = vmatprep.subr.bf16.mxu0 0
      %5874 = vmatpush1.bf16.msra.mxu0 %v5722
      %5875 = vmatprep.subr.bf16.mxu0 0
      %5876 = vmatpush1.bf16.msra.mxu0 %v5723
      %5877 = vmatprep.subr.bf16.mxu0 0
      %5878 = vmatpush1.bf16.msra.mxu0 %v5724
      %5879 = vmatprep.subr.bf16.mxu0 0
      %5880 = vmatpush1.bf16.msra.mxu0 %v5725
      %5881 = vmatprep.subr.bf16.mxu0 0
      %5882 = vmatpush1.bf16.msra.mxu0 %v5726
      %5883 = vmatprep.subr.bf16.mxu0 0
      %5884 = vmatpush1.bf16.msra.mxu0 %v5727
      %5885 = vmatprep.subr.bf16.mxu0 0
      %5886 = vmatpush1.bf16.msra.mxu0 %v5728
      %5887 = vmatprep.subr.bf16.mxu0 0
      %5888 = vmatpush1.bf16.msra.mxu0 %v5729
      %5889 = vmatprep.subr.bf16.mxu0 0
      %5890 = vmatpush1.bf16.msra.mxu0 %v5730
      %5891 = vmatprep.mubr.bf16.mxu0 %v3786
      %5892 = vmatmul.mubr.bf16.gmra.mrb[0].mxu0 %v3769
      %v5893 = vpop.f32.mrb[0].mxu0
      %v5894 = vpop.f32.mrb[0].mxu0
      %v5895 = vpop.f32.mrb[0].mxu0
      %v5896 = vpop.f32.mrb[0].mxu0
      %5897 = vmatprep.mubr.bf16.mxu0 %v3918
      %5898 = vmatmul.mubr.bf16.gmra.mrb[0].mxu0 %v3909
      %v5899 = vpop.f32.mrb[0].mxu0
      %v5900 = vadd.f32 0.0, %v5899
      %v5901 = vpop.f32.mrb[0].mxu0
      %v5902 = vpop.f32.mrb[0].mxu0
      %v5903 = vadd.f32 0.0, %v5902
      %v5904 = vpop.f32.mrb[0].mxu0
      %5905 = vmatprep.mubr.bf16.mxu0 %v3986
      %5906 = vmatmul.mubr.bf16.gmra.mrb[0].mxu0 %v3977
      %v5907 = vpop.f32.mrb[0].mxu0
      %v5908 = vadd.f32 0.0, %v5907
      %v5909 = vpop.f32.mrb[0].mxu0
      %v5910 = vpop.f32.mrb[0].mxu0
      %v5911 = vadd.f32 0.0, %v5910
      %v5912 = vpop.f32.mrb[0].mxu0
      %5913 = vmatprep.mubr.bf16.mxu0 %v4053
      %5914 = vmatmul.mubr.bf16.gmra.mrb[0].mxu0 %v4044
      %v5915 = vpop.f32.mrb[0].mxu0
      %v5916 = vadd.f32 0.0, %v5915
      %v5917 = vpop.f32.mrb[0].mxu0
      %v5918 = vpop.f32.mrb[0].mxu0
      %v5919 = vadd.f32 0.0, %v5918
      %v5920 = vpop.f32.mrb[0].mxu0
      %5921 = vmatprep.mubr.bf16.mxu0 %v4120
      %5922 = vmatmul.mubr.bf16.gmra.mrb[0].mxu0 %v4111
      %v5923 = vpop.f32.mrb[0].mxu0
      %v5924 = vadd.f32 0.0, %v5923
      %v5925 = vpop.f32.mrb[0].mxu0
      %v5926 = vpop.f32.mrb[0].mxu0
      %v5927 = vadd.f32 0.0, %v5926
      %v5928 = vpop.f32.mrb[0].mxu0
      %5929 = vmatprep.mubr.bf16.mxu0 %v4187
      %5930 = vmatmul.mubr.bf16.gmra.mrb[0].mxu0 %v4178
      %v5931 = vpop.f32.mrb[0].mxu0
      %v5932 = vadd.f32 0.0, %v5931
      %v5933 = vpop.f32.mrb[0].mxu0
      %v5934 = vpop.f32.mrb[0].mxu0
      %v5935 = vadd.f32 0.0, %v5934
      %v5936 = vpop.f32.mrb[0].mxu0
      %5937 = vmatprep.mubr.bf16.mxu0 %v4254
      %5938 = vmatmul.mubr.bf16.gmra.mrb[0].mxu0 %v4245
      %v5939 = vpop.f32.mrb[0].mxu0
      %v5940 = vadd.f32 0.0, %v5939
      %v5941 = vpop.f32.mrb[0].mxu0
      %v5942 = vpop.f32.mrb[0].mxu0
      %v5943 = vadd.f32 0.0, %v5942
      %v5944 = vpop.f32.mrb[0].mxu0
      %5945 = vmatprep.mubr.bf16.mxu0 %v4321
      %5946 = vmatmul.mubr.bf16.gmra.mrb[0].mxu0 %v4312
      %v5947 = vpop.f32.mrb[0].mxu0
      %v5948 = vadd.f32 0.0, %v5947
      %v5949 = vpop.f32.mrb[0].mxu0
      %v5950 = vpop.f32.mrb[0].mxu0
      %v5951 = vadd.f32 0.0, %v5950
      %v5952 = vpop.f32.mrb[0].mxu0
      %5953 = vmatprep.mubr.bf16.mxu0 %v4388
      %5954 = vmatmul.mubr.bf16.gmra.mrb[0].mxu0 %v4379
      %v5955 = vpop.f32.mrb[0].mxu0
      %v5956 = vadd.f32 0.0, %v5955
      %v5957 = vpop.f32.mrb[0].mxu0
      %v5958 = vpop.f32.mrb[0].mxu0
      %v5959 = vadd.f32 0.0, %v5958
      %v5960 = vpop.f32.mrb[0].mxu0
      %5961 = vmatprep.mubr.bf16.mxu0 %v4455
      %5962 = vmatmul.mubr.bf16.gmra.mrb[0].mxu0 %v4446
      %v5963 = vpop.f32.mrb[0].mxu0
      %v5964 = vadd.f32 0.0, %v5963
      %v5965 = vpop.f32.mrb[0].mxu0
      %v5966 = vpop.f32.mrb[0].mxu0
      %v5967 = vadd.f32 0.0, %v5966
      %v5968 = vpop.f32.mrb[0].mxu0
      %5969 = vmatprep.mubr.bf16.mxu0 %v4522
      %5970 = vmatmul.mubr.bf16.gmra.mrb[0].mxu0 %v4513
      %v5971 = vpop.f32.mrb[0].mxu0
      %v5972 = vadd.f32 0.0, %v5971
      %v5973 = vpop.f32.mrb[0].mxu0
      %v5974 = vpop.f32.mrb[0].mxu0
      %v5975 = vadd.f32 0.0, %v5974
      %v5976 = vpop.f32.mrb[0].mxu0
      %5977 = vmatprep.mubr.bf16.mxu0 %v4589
      %5978 = vmatmul.mubr.bf16.gmra.mrb[0].mxu0 %v4580
      %v5979 = vpop.f32.mrb[0].mxu0
      %v5980 = vadd.f32 0.0, %v5979
      %v5981 = vpop.f32.mrb[0].mxu0
      %v5982 = vpop.f32.mrb[0].mxu0
      %v5983 = vadd.f32 0.0, %v5982
      %v5984 = vpop.f32.mrb[0].mxu0
      %5985 = vmatprep.mubr.bf16.mxu0 %v4656
      %5986 = vmatmul.mubr.bf16.gmra.mrb[0].mxu0 %v4647
      %v5987 = vpop.f32.mrb[0].mxu0
      %v5988 = vadd.f32 0.0, %v5987
      %v5989 = vpop.f32.mrb[0].mxu0
      %v5990 = vpop.f32.mrb[0].mxu0
      %v5991 = vadd.f32 0.0, %v5990
      %v5992 = vpop.f32.mrb[0].mxu0
      %5993 = vmatprep.mubr.bf16.mxu0 %v4723
      %5994 = vmatmul.mubr.bf16.gmra.mrb[0].mxu0 %v4714
      %v5995 = vpop.f32.mrb[0].mxu0
      %v5996 = vadd.f32 0.0, %v5995
      %v5997 = vpop.f32.mrb[0].mxu0
      %v5998 = vpop.f32.mrb[0].mxu0
      %v5999 = vadd.f32 0.0, %v5998
      %v6000 = vpop.f32.mrb[0].mxu0
      %6001 = vmatprep.mubr.bf16.mxu0 %v4790
      %6002 = vmatmul.mubr.bf16.gmra.mrb[0].mxu0 %v4781
      %v6003 = vpop.f32.mrb[0].mxu0
      %v6004 = vadd.f32 0.0, %v6003
      %v6005 = vpop.f32.mrb[0].mxu0
      %v6006 = vpop.f32.mrb[0].mxu0
      %v6007 = vadd.f32 0.0, %v6006
      %v6008 = vpop.f32.mrb[0].mxu0
      %6009 = vmatprep.mubr.bf16.mxu0 %v4857
      %6010 = vmatmul.mubr.bf16.gmra.mrb[0].mxu0 %v4848
      %v6011 = vpop.f32.mrb[0].mxu0
      %v6012 = vadd.f32 0.0, %v6011
      %v6013 = vpop.f32.mrb[0].mxu0
      %v6014 = vpop.f32.mrb[0].mxu0
      %v6015 = vadd.f32 0.0, %v6014
      %v6016 = vpop.f32.mrb[0].mxu0
      %6017 = vmatprep.mubr.bf16.mxu0 %v4924
      %6018 = vmatmul.mubr.bf16.gmra.mrb[0].mxu0 %v4915
      %v6019 = vpop.f32.mrb[0].mxu0
      %v6020 = vadd.f32 0.0, %v6019
      %v6021 = vpop.f32.mrb[0].mxu0
      %v6022 = vpop.f32.mrb[0].mxu0
      %v6023 = vadd.f32 0.0, %v6022
      %v6024 = vpop.f32.mrb[0].mxu0
      %6025 = vmatprep.mubr.bf16.mxu0 %v4991
      %6026 = vmatmul.mubr.bf16.gmra.mrb[0].mxu0 %v4982
      %v6027 = vpop.f32.mrb[0].mxu0
      %v6028 = vadd.f32 0.0, %v6027
      %v6029 = vpop.f32.mrb[0].mxu0
      %v6030 = vpop.f32.mrb[0].mxu0
      %v6031 = vadd.f32 0.0, %v6030
      %v6032 = vpop.f32.mrb[0].mxu0
      %6033 = vmatprep.mubr.bf16.mxu0 %v5058
      %6034 = vmatmul.mubr.bf16.gmra.mrb[0].mxu0 %v5049
      %v6035 = vpop.f32.mrb[0].mxu0
      %v6036 = vadd.f32 0.0, %v6035
      %v6037 = vpop.f32.mrb[0].mxu0
      %v6038 = vpop.f32.mrb[0].mxu0
      %v6039 = vadd.f32 0.0, %v6038
      %v6040 = vpop.f32.mrb[0].mxu0
      %6041 = vmatprep.mubr.bf16.mxu0 %v5125
      %6042 = vmatmul.mubr.bf16.gmra.mrb[0].mxu0 %v5116
      %v6043 = vpop.f32.mrb[0].mxu0
      %v6044 = vadd.f32 0.0, %v6043
      %v6045 = vpop.f32.mrb[0].mxu0
      %v6046 = vpop.f32.mrb[0].mxu0
      %v6047 = vadd.f32 0.0, %v6046
      %v6048 = vpop.f32.mrb[0].mxu0
      %6049 = vmatprep.mubr.bf16.mxu0 %v5192
      %6050 = vmatmul.mubr.bf16.gmra.mrb[0].mxu0 %v5183
      %v6051 = vpop.f32.mrb[0].mxu0
      %v6052 = vpop.f32.mrb[0].mxu0
      %v6053 = vpop.f32.mrb[0].mxu0
      %v6054 = vpop.f32.mrb[0].mxu0
      %6055 = vdwg.mxu0
      %6056 = vmatprep.subr.bf16.mxu0 0
      %6057 = vmatpush1.bf16.msra.mxu0 %v5731
      %6058 = vmatprep.subr.bf16.mxu0 0
      %6059 = vmatpush1.bf16.msra.mxu0 %v5732
      %6060 = vmatprep.subr.bf16.mxu0 0
      %6061 = vmatpush1.bf16.msra.mxu0 %v5733
      %6062 = vmatprep.subr.bf16.mxu0 0
      %6063 = vmatpush1.bf16.msra.mxu0 %v5734
      %6064 = vmatprep.subr.bf16.mxu0 0
      %6065 = vmatpush1.bf16.msra.mxu0 %v5735
      %6066 = vmatprep.subr.bf16.mxu0 0
      %6067 = vmatpush1.bf16.msra.mxu0 %v5736
      %6068 = vmatprep.subr.bf16.mxu0 0
      %6069 = vmatpush1.bf16.msra.mxu0 %v5737
      %6070 = vmatprep.subr.bf16.mxu0 0
      %6071 = vmatpush1.bf16.msra.mxu0 %v5738
      %6072 = vmatprep.subr.bf16.mxu0 0
      %6073 = vmatpush1.bf16.msra.mxu0 %v5739
      %6074 = vmatprep.subr.bf16.mxu0 0
      %6075 = vmatpush1.bf16.msra.mxu0 %v5740
      %6076 = vmatprep.subr.bf16.mxu0 0
      %6077 = vmatpush1.bf16.msra.mxu0 %v5741
      %6078 = vmatprep.subr.bf16.mxu0 0
      %6079 = vmatpush1.bf16.msra.mxu0 %v5742
      %6080 = vmatprep.subr.bf16.mxu0 0
      %6081 = vmatpush1.bf16.msra.mxu0 %v5743
      %6082 = vmatprep.subr.bf16.mxu0 0
      %6083 = vmatpush1.bf16.msra.mxu0 %v5744
      %6084 = vmatprep.subr.bf16.mxu0 0
      %6085 = vmatpush1.bf16.msra.mxu0 %v5745
      %6086 = vmatprep.subr.bf16.mxu0 0
      %6087 = vmatpush1.bf16.msra.mxu0 %v5746
      %6088 = vmatprep.mubr.bf16.mxu0 %v3820
      %6089 = vmatmul.mubr.bf16.gmra.mrb[0].mxu0 %v3803
      %v6090 = vpop.f32.mrb[0].mxu0
      %v6091 = vpop.f32.mrb[0].mxu0
      %v6092 = vpop.f32.mrb[0].mxu0
      %v6093 = vpop.f32.mrb[0].mxu0
      %6094 = vmatprep.mubr.bf16.mxu0 %v3928
      %6095 = vmatmul.mubr.bf16.gmra.mrb[0].mxu0 %v3919
      %v6096 = vpop.f32.mrb[0].mxu0
      %v6097 = vadd.f32 %v5900, %v6096
      %v6098 = vpop.f32.mrb[0].mxu0
      %v6099 = vpop.f32.mrb[0].mxu0
      %v6100 = vadd.f32 %v5903, %v6099
      %v6101 = vpop.f32.mrb[0].mxu0
      %6102 = vmatprep.mubr.bf16.mxu0 %v3995
      %6103 = vmatmul.mubr.bf16.gmra.mrb[0].mxu0 %v3928
      %v6104 = vpop.f32.mrb[0].mxu0
      %v6105 = vadd.f32 %v5908, %v6104
      %v6106 = vpop.f32.mrb[0].mxu0
      %v6107 = vpop.f32.mrb[0].mxu0
      %v6108 = vadd.f32 %v5911, %v6107
      %v6109 = vpop.f32.mrb[0].mxu0
      %6110 = vmatprep.mubr.bf16.mxu0 %v4062
      %6111 = vmatmul.mubr.bf16.gmra.mrb[0].mxu0 %v3995
      %v6112 = vpop.f32.mrb[0].mxu0
      %v6113 = vadd.f32 %v5916, %v6112
      %v6114 = vpop.f32.mrb[0].mxu0
      %v6115 = vpop.f32.mrb[0].mxu0
      %v6116 = vadd.f32 %v5919, %v6115
      %v6117 = vpop.f32.mrb[0].mxu0
      %6118 = vmatprep.mubr.bf16.mxu0 %v4129
      %6119 = vmatmul.mubr.bf16.gmra.mrb[0].mxu0 %v4062
      %v6120 = vpop.f32.mrb[0].mxu0
      %v6121 = vadd.f32 %v5924, %v6120
      %v6122 = vpop.f32.mrb[0].mxu0
      %v6123 = vpop.f32.mrb[0].mxu0
      %v6124 = vadd.f32 %v5927, %v6123
      %v6125 = vpop.f32.mrb[0].mxu0
      %6126 = vmatprep.mubr.bf16.mxu0 %v4196
      %6127 = vmatmul.mubr.bf16.gmra.mrb[0].mxu0 %v4129
      %v6128 = vpop.f32.mrb[0].mxu0
      %v6129 = vadd.f32 %v5932, %v6128
      %v6130 = vpop.f32.mrb[0].mxu0
      %v6131 = vpop.f32.mrb[0].mxu0
      %v6132 = vadd.f32 %v5935, %v6131
      %v6133 = vpop.f32.mrb[0].mxu0
      %6134 = vmatprep.mubr.bf16.mxu0 %v4263
      %6135 = vmatmul.mubr.bf16.gmra.mrb[0].mxu0 %v4196
      %v6136 = vpop.f32.mrb[0].mxu0
      %v6137 = vadd.f32 %v5940, %v6136
      %v6138 = vpop.f32.mrb[0].mxu0
      %v6139 = vpop.f32.mrb[0].mxu0
      %v6140 = vadd.f32 %v5943, %v6139
      %v6141 = vpop.f32.mrb[0].mxu0
      %6142 = vmatprep.mubr.bf16.mxu0 %v4330
      %6143 = vmatmul.mubr.bf16.gmra.mrb[0].mxu0 %v4263
      %v6144 = vpop.f32.mrb[0].mxu0
      %v6145 = vadd.f32 %v5948, %v6144
      %v6146 = vpop.f32.mrb[0].mxu0
      %v6147 = vpop.f32.mrb[0].mxu0
      %v6148 = vadd.f32 %v5951, %v6147
      %v6149 = vpop.f32.mrb[0].mxu0
      %6150 = vmatprep.mubr.bf16.mxu0 %v4397
      %6151 = vmatmul.mubr.bf16.gmra.mrb[0].mxu0 %v4330
      %v6152 = vpop.f32.mrb[0].mxu0
      %v6153 = vadd.f32 %v5956, %v6152
      %v6154 = vpop.f32.mrb[0].mxu0
      %v6155 = vpop.f32.mrb[0].mxu0
      %v6156 = vadd.f32 %v5959, %v6155
      %v6157 = vpop.f32.mrb[0].mxu0
      %6158 = vmatprep.mubr.bf16.mxu0 %v4464
      %6159 = vmatmul.mubr.bf16.gmra.mrb[0].mxu0 %v4397
      %v6160 = vpop.f32.mrb[0].mxu0
      %v6161 = vadd.f32 %v5964, %v6160
      %v6162 = vpop.f32.mrb[0].mxu0
      %v6163 = vpop.f32.mrb[0].mxu0
      %v6164 = vadd.f32 %v5967, %v6163
      %v6165 = vpop.f32.mrb[0].mxu0
      %6166 = vmatprep.mubr.bf16.mxu0 %v4531
      %6167 = vmatmul.mubr.bf16.gmra.mrb[0].mxu0 %v4464
      %v6168 = vpop.f32.mrb[0].mxu0
      %v6169 = vadd.f32 %v5972, %v6168
      %v6170 = vpop.f32.mrb[0].mxu0
      %v6171 = vpop.f32.mrb[0].mxu0
      %v6172 = vadd.f32 %v5975, %v6171
      %v6173 = vpop.f32.mrb[0].mxu0
      %6174 = vmatprep.mubr.bf16.mxu0 %v4598
      %6175 = vmatmul.mubr.bf16.gmra.mrb[0].mxu0 %v4531
      %v6176 = vpop.f32.mrb[0].mxu0
      %v6177 = vadd.f32 %v5980, %v6176
      %v6178 = vpop.f32.mrb[0].mxu0
      %v6179 = vpop.f32.mrb[0].mxu0
      %v6180 = vadd.f32 %v5983, %v6179
      %v6181 = vpop.f32.mrb[0].mxu0
      %6182 = vmatprep.mubr.bf16.mxu0 %v4665
      %6183 = vmatmul.mubr.bf16.gmra.mrb[0].mxu0 %v4598
      %v6184 = vpop.f32.mrb[0].mxu0
      %v6185 = vadd.f32 %v5988, %v6184
      %v6186 = vpop.f32.mrb[0].mxu0
      %v6187 = vpop.f32.mrb[0].mxu0
      %v6188 = vadd.f32 %v5991, %v6187
      %v6189 = vpop.f32.mrb[0].mxu0
      %6190 = vmatprep.mubr.bf16.mxu0 %v4732
      %6191 = vmatmul.mubr.bf16.gmra.mrb[0].mxu0 %v4665
      %v6192 = vpop.f32.mrb[0].mxu0
      %v6193 = vadd.f32 %v5996, %v6192
      %v6194 = vpop.f32.mrb[0].mxu0
      %v6195 = vpop.f32.mrb[0].mxu0
      %v6196 = vadd.f32 %v5999, %v6195
      %v6197 = vpop.f32.mrb[0].mxu0
      %6198 = vmatprep.mubr.bf16.mxu0 %v4799
      %6199 = vmatmul.mubr.bf16.gmra.mrb[0].mxu0 %v4732
      %v6200 = vpop.f32.mrb[0].mxu0
      %v6201 = vadd.f32 %v6004, %v6200
      %v6202 = vpop.f32.mrb[0].mxu0
      %v6203 = vpop.f32.mrb[0].mxu0
      %v6204 = vadd.f32 %v6007, %v6203
      %v6205 = vpop.f32.mrb[0].mxu0
      %6206 = vmatprep.mubr.bf16.mxu0 %v4866
      %6207 = vmatmul.mubr.bf16.gmra.mrb[0].mxu0 %v4799
      %v6208 = vpop.f32.mrb[0].mxu0
      %v6209 = vadd.f32 %v6012, %v6208
      %v6210 = vpop.f32.mrb[0].mxu0
      %v6211 = vpop.f32.mrb[0].mxu0
      %v6212 = vadd.f32 %v6015, %v6211
      %v6213 = vpop.f32.mrb[0].mxu0
      %6214 = vmatprep.mubr.bf16.mxu0 %v4933
      %6215 = vmatmul.mubr.bf16.gmra.mrb[0].mxu0 %v4866
      %v6216 = vpop.f32.mrb[0].mxu0
      %v6217 = vadd.f32 %v6020, %v6216
      %v6218 = vpop.f32.mrb[0].mxu0
      %v6219 = vpop.f32.mrb[0].mxu0
      %v6220 = vadd.f32 %v6023, %v6219
      %v6221 = vpop.f32.mrb[0].mxu0
      %6222 = vmatprep.mubr.bf16.mxu0 %v5000
      %6223 = vmatmul.mubr.bf16.gmra.mrb[0].mxu0 %v4933
      %v6224 = vpop.f32.mrb[0].mxu0
      %v6225 = vadd.f32 %v6028, %v6224
      %v6226 = vpop.f32.mrb[0].mxu0
      %v6227 = vpop.f32.mrb[0].mxu0
      %v6228 = vadd.f32 %v6031, %v6227
      %v6229 = vpop.f32.mrb[0].mxu0
      %6230 = vmatprep.mubr.bf16.mxu0 %v5067
      %6231 = vmatmul.mubr.bf16.gmra.mrb[0].mxu0 %v5000
      %v6232 = vpop.f32.mrb[0].mxu0
      %v6233 = vadd.f32 %v6036, %v6232
      %v6234 = vpop.f32.mrb[0].mxu0
      %v6235 = vpop.f32.mrb[0].mxu0
      %v6236 = vadd.f32 %v6039, %v6235
      %v6237 = vpop.f32.mrb[0].mxu0
      %6238 = vmatprep.mubr.bf16.mxu0 %v5134
      %6239 = vmatmul.mubr.bf16.gmra.mrb[0].mxu0 %v5067
      %v6240 = vpop.f32.mrb[0].mxu0
      %v6241 = vadd.f32 %v6044, %v6240
      %v6242 = vpop.f32.mrb[0].mxu0
      %v6243 = vpop.f32.mrb[0].mxu0
      %v6244 = vadd.f32 %v6047, %v6243
      %v6245 = vpop.f32.mrb[0].mxu0
      %6246 = vmatprep.mubr.bf16.mxu0 %v5210
      %6247 = vmatmul.mubr.bf16.gmra.mrb[0].mxu0 %v5201
      %v6248 = vpop.f32.mrb[0].mxu0
      %v6249 = vpop.f32.mrb[0].mxu0
      %v6250 = vpop.f32.mrb[0].mxu0
      %v6251 = vpop.f32.mrb[0].mxu0
      %6252 = vdwg.mxu0
      %6253 = vmatprep.subr.bf16.mxu0 0
      %6254 = vmatpush1.bf16.msra.mxu0 %v5747
      %6255 = vmatprep.subr.bf16.mxu0 0
      %6256 = vmatpush1.bf16.msra.mxu0 %v5748
      %6257 = vmatprep.subr.bf16.mxu0 0
      %6258 = vmatpush1.bf16.msra.mxu0 %v5749
      %6259 = vmatprep.subr.bf16.mxu0 0
      %6260 = vmatpush1.bf16.msra.mxu0 %v5750
      %6261 = vmatprep.subr.bf16.mxu0 0
      %6262 = vmatpush1.bf16.msra.mxu0 %v5751
      %6263 = vmatprep.subr.bf16.mxu0 0
      %6264 = vmatpush1.bf16.msra.mxu0 %v5752
      %6265 = vmatprep.subr.bf16.mxu0 0
      %6266 = vmatpush1.bf16.msra.mxu0 %v5753
      %6267 = vmatprep.subr.bf16.mxu0 0
      %6268 = vmatpush1.bf16.msra.mxu0 %v5754
      %6269 = vmatprep.subr.bf16.mxu0 0
      %6270 = vmatpush1.bf16.msra.mxu0 %v5755
      %6271 = vmatprep.subr.bf16.mxu0 0
      %6272 = vmatpush1.bf16.msra.mxu0 %v5756
      %6273 = vmatprep.subr.bf16.mxu0 0
      %6274 = vmatpush1.bf16.msra.mxu0 %v5757
      %6275 = vmatprep.subr.bf16.mxu0 0
      %6276 = vmatpush1.bf16.msra.mxu0 %v5758
      %6277 = vmatprep.subr.bf16.mxu0 0
      %6278 = vmatpush1.bf16.msra.mxu0 %v5759
      %6279 = vmatprep.subr.bf16.mxu0 0
      %6280 = vmatpush1.bf16.msra.mxu0 %v5760
      %6281 = vmatprep.subr.bf16.mxu0 0
      %6282 = vmatpush1.bf16.msra.mxu0 %v5761
      %6283 = vmatprep.subr.bf16.mxu0 0
      %6284 = vmatpush1.bf16.msra.mxu0 %v5762
      %6285 = vmatprep.mubr.bf16.mxu0 %v3854
      %6286 = vmatmul.mubr.bf16.gmra.mrb[0].mxu0 %v3837
      %v6287 = vpop.f32.mrb[0].mxu0
      %v6288 = vpop.f32.mrb[0].mxu0
      %v6289 = vpop.f32.mrb[0].mxu0
      %v6290 = vpop.f32.mrb[0].mxu0
      %6291 = vmatprep.mubr.bf16.mxu0 %v3946
      %6292 = vmatmul.mubr.bf16.gmra.mrb[0].mxu0 %v3937
      %v6293 = vpop.f32.mrb[0].mxu0
      %v6294 = vadd.f32 %v6097, %v6293
      %v6295 = vpop.f32.mrb[0].mxu0
      %v6296 = vpop.f32.mrb[0].mxu0
      %v6297 = vadd.f32 %v6100, %v6296
      %v6298 = vpop.f32.mrb[0].mxu0
      %6299 = vmatprep.mubr.bf16.mxu0 %v4013
      %6300 = vmatmul.mubr.bf16.gmra.mrb[0].mxu0 %v4004
      %v6301 = vpop.f32.mrb[0].mxu0
      %v6302 = vadd.f32 %v6105, %v6301
      %v6303 = vpop.f32.mrb[0].mxu0
      %v6304 = vpop.f32.mrb[0].mxu0
      %v6305 = vadd.f32 %v6108, %v6304
      %v6306 = vpop.f32.mrb[0].mxu0
      %6307 = vmatprep.mubr.bf16.mxu0 %v4080
      %6308 = vmatmul.mubr.bf16.gmra.mrb[0].mxu0 %v4071
      %v6309 = vpop.f32.mrb[0].mxu0
      %v6310 = vadd.f32 %v6113, %v6309
      %v6311 = vpop.f32.mrb[0].mxu0
      %v6312 = vpop.f32.mrb[0].mxu0
      %v6313 = vadd.f32 %v6116, %v6312
      %v6314 = vpop.f32.mrb[0].mxu0
      %6315 = vmatprep.mubr.bf16.mxu0 %v4147
      %6316 = vmatmul.mubr.bf16.gmra.mrb[0].mxu0 %v4138
      %v6317 = vpop.f32.mrb[0].mxu0
      %v6318 = vadd.f32 %v6121, %v6317
      %v6319 = vpop.f32.mrb[0].mxu0
      %v6320 = vpop.f32.mrb[0].mxu0
      %v6321 = vadd.f32 %v6124, %v6320
      %v6322 = vpop.f32.mrb[0].mxu0
      %6323 = vmatprep.mubr.bf16.mxu0 %v4214
      %6324 = vmatmul.mubr.bf16.gmra.mrb[0].mxu0 %v4205
      %v6325 = vpop.f32.mrb[0].mxu0
      %v6326 = vadd.f32 %v6129, %v6325
      %v6327 = vpop.f32.mrb[0].mxu0
      %v6328 = vpop.f32.mrb[0].mxu0
      %v6329 = vadd.f32 %v6132, %v6328
      %v6330 = vpop.f32.mrb[0].mxu0
      %6331 = vmatprep.mubr.bf16.mxu0 %v4281
      %6332 = vmatmul.mubr.bf16.gmra.mrb[0].mxu0 %v4272
      %v6333 = vpop.f32.mrb[0].mxu0
      %v6334 = vadd.f32 %v6137, %v6333
      %v6335 = vpop.f32.mrb[0].mxu0
      %v6336 = vpop.f32.mrb[0].mxu0
      %v6337 = vadd.f32 %v6140, %v6336
      %v6338 = vpop.f32.mrb[0].mxu0
      %6339 = vmatprep.mubr.bf16.mxu0 %v4348
      %6340 = vmatmul.mubr.bf16.gmra.mrb[0].mxu0 %v4339
      %v6341 = vpop.f32.mrb[0].mxu0
      %v6342 = vadd.f32 %v6145, %v6341
      %v6343 = vpop.f32.mrb[0].mxu0
      %v6344 = vpop.f32.mrb[0].mxu0
      %v6345 = vadd.f32 %v6148, %v6344
      %v6346 = vpop.f32.mrb[0].mxu0
      %6347 = vmatprep.mubr.bf16.mxu0 %v4415
      %6348 = vmatmul.mubr.bf16.gmra.mrb[0].mxu0 %v4406
      %v6349 = vpop.f32.mrb[0].mxu0
      %v6350 = vadd.f32 %v6153, %v6349
      %v6351 = vpop.f32.mrb[0].mxu0
      %v6352 = vpop.f32.mrb[0].mxu0
      %v6353 = vadd.f32 %v6156, %v6352
      %v6354 = vpop.f32.mrb[0].mxu0
      %6355 = vmatprep.mubr.bf16.mxu0 %v4482
      %6356 = vmatmul.mubr.bf16.gmra.mrb[0].mxu0 %v4473
      %v6357 = vpop.f32.mrb[0].mxu0
      %v6358 = vadd.f32 %v6161, %v6357
      %v6359 = vpop.f32.mrb[0].mxu0
      %v6360 = vpop.f32.mrb[0].mxu0
      %v6361 = vadd.f32 %v6164, %v6360
      %v6362 = vpop.f32.mrb[0].mxu0
      %6363 = vmatprep.mubr.bf16.mxu0 %v4549
      %6364 = vmatmul.mubr.bf16.gmra.mrb[0].mxu0 %v4540
      %v6365 = vpop.f32.mrb[0].mxu0
      %v6366 = vadd.f32 %v6169, %v6365
      %v6367 = vpop.f32.mrb[0].mxu0
      %v6368 = vpop.f32.mrb[0].mxu0
      %v6369 = vadd.f32 %v6172, %v6368
      %v6370 = vpop.f32.mrb[0].mxu0
      %6371 = vmatprep.mubr.bf16.mxu0 %v4616
      %6372 = vmatmul.mubr.bf16.gmra.mrb[0].mxu0 %v4607
      %v6373 = vpop.f32.mrb[0].mxu0
      %v6374 = vadd.f32 %v6177, %v6373
      %v6375 = vpop.f32.mrb[0].mxu0
      %v6376 = vpop.f32.mrb[0].mxu0
      %v6377 = vadd.f32 %v6180, %v6376
      %v6378 = vpop.f32.mrb[0].mxu0
      %6379 = vmatprep.mubr.bf16.mxu0 %v4683
      %6380 = vmatmul.mubr.bf16.gmra.mrb[0].mxu0 %v4674
      %v6381 = vpop.f32.mrb[0].mxu0
      %v6382 = vadd.f32 %v6185, %v6381
      %v6383 = vpop.f32.mrb[0].mxu0
      %v6384 = vpop.f32.mrb[0].mxu0
      %v6385 = vadd.f32 %v6188, %v6384
      %v6386 = vpop.f32.mrb[0].mxu0
      %6387 = vmatprep.mubr.bf16.mxu0 %v4750
      %6388 = vmatmul.mubr.bf16.gmra.mrb[0].mxu0 %v4741
      %v6389 = vpop.f32.mrb[0].mxu0
      %v6390 = vadd.f32 %v6193, %v6389
      %v6391 = vpop.f32.mrb[0].mxu0
      %v6392 = vpop.f32.mrb[0].mxu0
      %v6393 = vadd.f32 %v6196, %v6392
      %v6394 = vpop.f32.mrb[0].mxu0
      %6395 = vmatprep.mubr.bf16.mxu0 %v4817
      %6396 = vmatmul.mubr.bf16.gmra.mrb[0].mxu0 %v4808
      %v6397 = vpop.f32.mrb[0].mxu0
      %v6398 = vadd.f32 %v6201, %v6397
      %v6399 = vpop.f32.mrb[0].mxu0
      %v6400 = vpop.f32.mrb[0].mxu0
      %v6401 = vadd.f32 %v6204, %v6400
      %v6402 = vpop.f32.mrb[0].mxu0
      %6403 = vmatprep.mubr.bf16.mxu0 %v4884
      %6404 = vmatmul.mubr.bf16.gmra.mrb[0].mxu0 %v4875
      %v6405 = vpop.f32.mrb[0].mxu0
      %v6406 = vadd.f32 %v6209, %v6405
      %v6407 = vpop.f32.mrb[0].mxu0
      %v6408 = vpop.f32.mrb[0].mxu0
      %v6409 = vadd.f32 %v6212, %v6408
      %v6410 = vpop.f32.mrb[0].mxu0
      %6411 = vmatprep.mubr.bf16.mxu0 %v4951
      %6412 = vmatmul.mubr.bf16.gmra.mrb[0].mxu0 %v4942
      %v6413 = vpop.f32.mrb[0].mxu0
      %v6414 = vadd.f32 %v6217, %v6413
      %v6415 = vpop.f32.mrb[0].mxu0
      %v6416 = vpop.f32.mrb[0].mxu0
      %v6417 = vadd.f32 %v6220, %v6416
      %v6418 = vpop.f32.mrb[0].mxu0
      %6419 = vmatprep.mubr.bf16.mxu0 %v5018
      %6420 = vmatmul.mubr.bf16.gmra.mrb[0].mxu0 %v5009
      %v6421 = vpop.f32.mrb[0].mxu0
      %v6422 = vadd.f32 %v6225, %v6421
      %v6423 = vpop.f32.mrb[0].mxu0
      %v6424 = vpop.f32.mrb[0].mxu0
      %v6425 = vadd.f32 %v6228, %v6424
      %v6426 = vpop.f32.mrb[0].mxu0
      %6427 = vmatprep.mubr.bf16.mxu0 %v5085
      %6428 = vmatmul.mubr.bf16.gmra.mrb[0].mxu0 %v5076
      %v6429 = vpop.f32.mrb[0].mxu0
      %v6430 = vadd.f32 %v6233, %v6429
      %v6431 = vpop.f32.mrb[0].mxu0
      %v6432 = vpop.f32.mrb[0].mxu0
      %v6433 = vadd.f32 %v6236, %v6432
      %v6434 = vpop.f32.mrb[0].mxu0
      %6435 = vmatprep.mubr.bf16.mxu0 %v5152
      %6436 = vmatmul.mubr.bf16.gmra.mrb[0].mxu0 %v5143
      %v6437 = vpop.f32.mrb[0].mxu0
      %v6438 = vadd.f32 %v6241, %v6437
      %v6439 = vpop.f32.mrb[0].mxu0
      %v6440 = vpop.f32.mrb[0].mxu0
      %v6441 = vadd.f32 %v6244, %v6440
      %v6442 = vpop.f32.mrb[0].mxu0
      %6443 = vmatprep.mubr.bf16.mxu0 %v5228
      %6444 = vmatmul.mubr.bf16.gmra.mrb[0].mxu0 %v5219
      %v6445 = vpop.f32.mrb[0].mxu0
      %v6446 = vpop.f32.mrb[0].mxu0
      %v6447 = vpop.f32.mrb[0].mxu0
      %v6448 = vpop.f32.mrb[0].mxu0
      %6449 = vdwg.mxu0
      %6450 = vmatprep.subr.bf16.mxu0 0
      %6451 = vmatpush1.bf16.msra.mxu0 %v5763
      %6452 = vmatprep.subr.bf16.mxu0 0
      %6453 = vmatpush1.bf16.msra.mxu0 %v5764
      %6454 = vmatprep.subr.bf16.mxu0 0
      %6455 = vmatpush1.bf16.msra.mxu0 %v5765
      %6456 = vmatprep.subr.bf16.mxu0 0
      %6457 = vmatpush1.bf16.msra.mxu0 %v5766
      %6458 = vmatprep.subr.bf16.mxu0 0
      %6459 = vmatpush1.bf16.msra.mxu0 %v5767
      %6460 = vmatprep.subr.bf16.mxu0 0
      %6461 = vmatpush1.bf16.msra.mxu0 %v5768
      %6462 = vmatprep.subr.bf16.mxu0 0
      %6463 = vmatpush1.bf16.msra.mxu0 %v5769
      %6464 = vmatprep.subr.bf16.mxu0 0
      %6465 = vmatpush1.bf16.msra.mxu0 %v5770
      %6466 = vmatprep.subr.bf16.mxu0 0
      %6467 = vmatpush1.bf16.msra.mxu0 %v5771
      %6468 = vmatprep.subr.bf16.mxu0 0
      %6469 = vmatpush1.bf16.msra.mxu0 %v5772
      %6470 = vmatprep.subr.bf16.mxu0 0
      %6471 = vmatpush1.bf16.msra.mxu0 %v5773
      %6472 = vmatprep.subr.bf16.mxu0 0
      %6473 = vmatpush1.bf16.msra.mxu0 %v5774
      %6474 = vmatprep.subr.bf16.mxu0 0
      %6475 = vmatpush1.bf16.msra.mxu0 %v5775
      %6476 = vmatprep.subr.bf16.mxu0 0
      %6477 = vmatpush1.bf16.msra.mxu0 %v5776
      %6478 = vmatprep.subr.bf16.mxu0 0
      %6479 = vmatpush1.bf16.msra.mxu0 %v5777
      %6480 = vmatprep.subr.bf16.mxu0 0
      %6481 = vmatpush1.bf16.msra.mxu0 %v5778
      %6482 = vmatprep.mubr.bf16.mxu0 %v3888
      %6483 = vmatmul.mubr.bf16.gmra.mrb[0].mxu0 %v3871
      %v6484 = vpop.f32.mrb[0].mxu0
      %v6485 = vpop.f32.mrb[0].mxu0
      %v6486 = vpop.f32.mrb[0].mxu0
      %v6487 = vpop.f32.mrb[0].mxu0
      %6488 = vmatprep.mubr.bf16.mxu0 %v3964
      %6489 = vmatmul.mubr.bf16.gmra.mrb[0].mxu0 %v3955
      %v6490 = vpop.f32.mrb[0].mxu0
      %v6491 = vadd.f32 %v6294, %v6490
      %v6492 = vpop.f32.mrb[0].mxu0
      %v6493 = vpop.f32.mrb[0].mxu0
      %v6494 = vadd.f32 %v6297, %v6493
      %v6495 = vpop.f32.mrb[0].mxu0
      %6496 = vmatprep.mubr.bf16.mxu0 %v4031
      %6497 = vmatmul.mubr.bf16.gmra.mrb[0].mxu0 %v4022
      %v6498 = vpop.f32.mrb[0].mxu0
      %v6499 = vadd.f32 %v6302, %v6498
      %v6500 = vpop.f32.mrb[0].mxu0
      %v6501 = vpop.f32.mrb[0].mxu0
      %v6502 = vadd.f32 %v6305, %v6501
      %v6503 = vpop.f32.mrb[0].mxu0
      %6504 = vmatprep.mubr.bf16.mxu0 %v4098
      %6505 = vmatmul.mubr.bf16.gmra.mrb[0].mxu0 %v4089
      %v6506 = vpop.f32.mrb[0].mxu0
      %v6507 = vadd.f32 %v6310, %v6506
      %v6508 = vpop.f32.mrb[0].mxu0
      %v6509 = vpop.f32.mrb[0].mxu0
      %v6510 = vadd.f32 %v6313, %v6509
      %v6511 = vpop.f32.mrb[0].mxu0
      %6512 = vmatprep.mubr.bf16.mxu0 %v4165
      %6513 = vmatmul.mubr.bf16.gmra.mrb[0].mxu0 %v4156
      %v6514 = vpop.f32.mrb[0].mxu0
      %v6515 = vadd.f32 %v6318, %v6514
      %v6516 = vpop.f32.mrb[0].mxu0
      %v6517 = vpop.f32.mrb[0].mxu0
      %v6518 = vadd.f32 %v6321, %v6517
      %v6519 = vpop.f32.mrb[0].mxu0
      %6520 = vmatprep.mubr.bf16.mxu0 %v4232
      %6521 = vmatmul.mubr.bf16.gmra.mrb[0].mxu0 %v4223
      %v6522 = vpop.f32.mrb[0].mxu0
      %v6523 = vadd.f32 %v6326, %v6522
      %v6524 = vpop.f32.mrb[0].mxu0
      %v6525 = vpop.f32.mrb[0].mxu0
      %v6526 = vadd.f32 %v6329, %v6525
      %v6527 = vpop.f32.mrb[0].mxu0
      %6528 = vmatprep.mubr.bf16.mxu0 %v4299
      %6529 = vmatmul.mubr.bf16.gmra.mrb[0].mxu0 %v4290
      %v6530 = vpop.f32.mrb[0].mxu0
      %v6531 = vadd.f32 %v6334, %v6530
      %v6532 = vpop.f32.mrb[0].mxu0
      %v6533 = vpop.f32.mrb[0].mxu0
      %v6534 = vadd.f32 %v6337, %v6533
      %v6535 = vpop.f32.mrb[0].mxu0
      %6536 = vmatprep.mubr.bf16.mxu0 %v4366
      %6537 = vmatmul.mubr.bf16.gmra.mrb[0].mxu0 %v4357
      %v6538 = vpop.f32.mrb[0].mxu0
      %v6539 = vadd.f32 %v6342, %v6538
      %v6540 = vpop.f32.mrb[0].mxu0
      %v6541 = vpop.f32.mrb[0].mxu0
      %v6542 = vadd.f32 %v6345, %v6541
      %v6543 = vpop.f32.mrb[0].mxu0
      %6544 = vmatprep.mubr.bf16.mxu0 %v4433
      %6545 = vmatmul.mubr.bf16.gmra.mrb[0].mxu0 %v4424
      %v6546 = vpop.f32.mrb[0].mxu0
      %v6547 = vadd.f32 %v6350, %v6546
      %v6548 = vpop.f32.mrb[0].mxu0
      %v6549 = vpop.f32.mrb[0].mxu0
      %v6550 = vadd.f32 %v6353, %v6549
      %v6551 = vpop.f32.mrb[0].mxu0
      %6552 = vmatprep.mubr.bf16.mxu0 %v4500
      %6553 = vmatmul.mubr.bf16.gmra.mrb[0].mxu0 %v4491
      %v6554 = vpop.f32.mrb[0].mxu0
      %v6555 = vadd.f32 %v6358, %v6554
      %v6556 = vpop.f32.mrb[0].mxu0
      %v6557 = vpop.f32.mrb[0].mxu0
      %v6558 = vadd.f32 %v6361, %v6557
      %v6559 = vpop.f32.mrb[0].mxu0
      %6560 = vmatprep.mubr.bf16.mxu0 %v4567
      %6561 = vmatmul.mubr.bf16.gmra.mrb[0].mxu0 %v4558
      %v6562 = vpop.f32.mrb[0].mxu0
      %v6563 = vadd.f32 %v6366, %v6562
      %v6564 = vpop.f32.mrb[0].mxu0
      %v6565 = vpop.f32.mrb[0].mxu0
      %v6566 = vadd.f32 %v6369, %v6565
      %v6567 = vpop.f32.mrb[0].mxu0
      %6568 = vmatprep.mubr.bf16.mxu0 %v4634
      %6569 = vmatmul.mubr.bf16.gmra.mrb[0].mxu0 %v4625
      %v6570 = vpop.f32.mrb[0].mxu0
      %v6571 = vadd.f32 %v6374, %v6570
      %v6572 = vpop.f32.mrb[0].mxu0
      %v6573 = vpop.f32.mrb[0].mxu0
      %v6574 = vadd.f32 %v6377, %v6573
      %v6575 = vpop.f32.mrb[0].mxu0
      %6576 = vmatprep.mubr.bf16.mxu0 %v4701
      %6577 = vmatmul.mubr.bf16.gmra.mrb[0].mxu0 %v4692
      %v6578 = vpop.f32.mrb[0].mxu0
      %v6579 = vadd.f32 %v6382, %v6578
      %v6580 = vpop.f32.mrb[0].mxu0
      %v6581 = vpop.f32.mrb[0].mxu0
      %v6582 = vadd.f32 %v6385, %v6581
      %v6583 = vpop.f32.mrb[0].mxu0
      %6584 = vmatprep.mubr.bf16.mxu0 %v4768
      %6585 = vmatmul.mubr.bf16.gmra.mrb[0].mxu0 %v4759
      %v6586 = vpop.f32.mrb[0].mxu0
      %v6587 = vadd.f32 %v6390, %v6586
      %v6588 = vpop.f32.mrb[0].mxu0
      %v6589 = vpop.f32.mrb[0].mxu0
      %v6590 = vadd.f32 %v6393, %v6589
      %v6591 = vpop.f32.mrb[0].mxu0
      %6592 = vmatprep.mubr.bf16.mxu0 %v4835
      %6593 = vmatmul.mubr.bf16.gmra.mrb[0].mxu0 %v4826
      %v6594 = vpop.f32.mrb[0].mxu0
      %v6595 = vadd.f32 %v6398, %v6594
      %v6596 = vpop.f32.mrb[0].mxu0
      %v6597 = vpop.f32.mrb[0].mxu0
      %v6598 = vadd.f32 %v6401, %v6597
      %v6599 = vpop.f32.mrb[0].mxu0
      %6600 = vmatprep.mubr.bf16.mxu0 %v4902
      %6601 = vmatmul.mubr.bf16.gmra.mrb[0].mxu0 %v4893
      %v6602 = vpop.f32.mrb[0].mxu0
      %v6603 = vadd.f32 %v6406, %v6602
      %v6604 = vpop.f32.mrb[0].mxu0
      %v6605 = vpop.f32.mrb[0].mxu0
      %v6606 = vadd.f32 %v6409, %v6605
      %v6607 = vpop.f32.mrb[0].mxu0
      %6608 = vmatprep.mubr.bf16.mxu0 %v4969
      %6609 = vmatmul.mubr.bf16.gmra.mrb[0].mxu0 %v4960
      %v6610 = vpop.f32.mrb[0].mxu0
      %v6611 = vadd.f32 %v6414, %v6610
      %v6612 = vpop.f32.mrb[0].mxu0
      %v6613 = vpop.f32.mrb[0].mxu0
      %v6614 = vadd.f32 %v6417, %v6613
      %v6615 = vpop.f32.mrb[0].mxu0
      %6616 = vmatprep.mubr.bf16.mxu0 %v5036
      %6617 = vmatmul.mubr.bf16.gmra.mrb[0].mxu0 %v5027
      %v6618 = vpop.f32.mrb[0].mxu0
      %v6619 = vadd.f32 %v6422, %v6618
      %v6620 = vpop.f32.mrb[0].mxu0
      %v6621 = vpop.f32.mrb[0].mxu0
      %v6622 = vadd.f32 %v6425, %v6621
      %v6623 = vpop.f32.mrb[0].mxu0
      %6624 = vmatprep.mubr.bf16.mxu0 %v5103
      %6625 = vmatmul.mubr.bf16.gmra.mrb[0].mxu0 %v5094
      %v6626 = vpop.f32.mrb[0].mxu0
      %v6627 = vadd.f32 %v6430, %v6626
      %v6628 = vpop.f32.mrb[0].mxu0
      %v6629 = vpop.f32.mrb[0].mxu0
      %v6630 = vadd.f32 %v6433, %v6629
      %v6631 = vpop.f32.mrb[0].mxu0
      %6632 = vmatprep.mubr.bf16.mxu0 %v5170
      %6633 = vmatmul.mubr.bf16.gmra.mrb[0].mxu0 %v5161
      %v6634 = vpop.f32.mrb[0].mxu0
      %v6635 = vadd.f32 %v6438, %v6634
      %v6636 = vpop.f32.mrb[0].mxu0
      %v6637 = vpop.f32.mrb[0].mxu0
      %v6638 = vadd.f32 %v6441, %v6637
      %v6639 = vpop.f32.mrb[0].mxu0
      %6640 = vmatprep.mubr.bf16.mxu0 %v5246
      %6641 = vmatmul.mubr.bf16.gmra.mrb[0].mxu0 %v5237
      %v6642 = vpop.f32.mrb[0].mxu0
      %v6643 = vpop.f32.mrb[0].mxu0
      %v6644 = vpop.f32.mrb[0].mxu0
      %v6645 = vpop.f32.mrb[0].mxu0
      %6646 = vdwg.mxu0
      %6647 = vmatprep.subr.bf16.mxu0 0
      %6648 = vmatpush1.bf16.msra.mxu0 %v5779
      %6649 = vmatprep.subr.bf16.mxu0 0
      %6650 = vmatpush1.bf16.msra.mxu0 %v5780
      %6651 = vmatprep.subr.bf16.mxu0 0
      %6652 = vmatpush1.bf16.msra.mxu0 %v5781
      %6653 = vmatprep.subr.bf16.mxu0 0
      %6654 = vmatpush1.bf16.msra.mxu0 %v5782
      %6655 = vmatprep.subr.bf16.mxu0 0
      %6656 = vmatpush1.bf16.msra.mxu0 %v5783
      %6657 = vmatprep.subr.bf16.mxu0 0
      %6658 = vmatpush1.bf16.msra.mxu0 %v5784
      %6659 = vmatprep.subr.bf16.mxu0 0
      %6660 = vmatpush1.bf16.msra.mxu0 %v5785
      %6661 = vmatprep.subr.bf16.mxu0 0
      %6662 = vmatpush1.bf16.msra.mxu0 %v5786
      %6663 = vmatprep.subr.bf16.mxu0 0
      %6664 = vmatpush1.bf16.msra.mxu0 0
      %6665 = vmatprep.subr.bf16.mxu0 0
      %6666 = vmatpush1.bf16.msra.mxu0 0
      %6667 = vmatprep.subr.bf16.mxu0 0
      %6668 = vmatpush1.bf16.msra.mxu0 0
      %6669 = vmatprep.subr.bf16.mxu0 0
      %6670 = vmatpush1.bf16.msra.mxu0 0
      %6671 = vmatprep.subr.bf16.mxu0 0
      %6672 = vmatpush1.bf16.msra.mxu0 0
      %6673 = vmatprep.subr.bf16.mxu0 0
      %6674 = vmatpush1.bf16.msra.mxu0 0
      %6675 = vmatprep.subr.bf16.mxu0 0
      %6676 = vmatpush1.bf16.msra.mxu0 0
      %6677 = vmatprep.subr.bf16.mxu0 0
      %6678 = vmatpush1.bf16.msra.mxu0 0
      %6679 = vmatprep.mubr.bf16.mxu0 0
      %6680 = vmatmul.mubr.bf16.gmra.mrb[0].mxu0 %v3905
      %v6681 = vpop.f32.mrb[0].mxu0
      %v6682 = vpop.f32.mrb[0].mxu0
      %v6683 = vpop.f32.mrb[0].mxu0
      %v6684 = vpop.f32.mrb[0].mxu0
      %6685 = vmatprep.mubr.bf16.mxu0 0
      %6686 = vmatmul.mubr.bf16.gmra.mrb[0].mxu0 %v3973
      %v6687 = vpop.f32.mrb[0].mxu0
      %v6688 = vadd.f32 %v6491, %v6687
      %v6689 = vpop.f32.mrb[0].mxu0
      %v6690 = vpop.f32.mrb[0].mxu0
      %v6691 = vadd.f32 %v6494, %v6690
      %v6692 = vpop.f32.mrb[0].mxu0
      %6693 = vmatprep.mubr.bf16.mxu0 0
      %6694 = vmatmul.mubr.bf16.gmra.mrb[0].mxu0 %v4040
      %v6695 = vpop.f32.mrb[0].mxu0
      %v6696 = vadd.f32 %v6499, %v6695
      %v6697 = vpop.f32.mrb[0].mxu0
      %v6698 = vpop.f32.mrb[0].mxu0
      %v6699 = vadd.f32 %v6502, %v6698
      %v6700 = vpop.f32.mrb[0].mxu0
      %6701 = vmatprep.mubr.bf16.mxu0 0
      %6702 = vmatmul.mubr.bf16.gmra.mrb[0].mxu0 %v4107
      %v6703 = vpop.f32.mrb[0].mxu0
      %v6704 = vadd.f32 %v6507, %v6703
      %v6705 = vpop.f32.mrb[0].mxu0
      %v6706 = vpop.f32.mrb[0].mxu0
      %v6707 = vadd.f32 %v6510, %v6706
      %v6708 = vpop.f32.mrb[0].mxu0
      %6709 = vmatprep.mubr.bf16.mxu0 0
      %6710 = vmatmul.mubr.bf16.gmra.mrb[0].mxu0 %v4174
      %v6711 = vpop.f32.mrb[0].mxu0
      %v6712 = vadd.f32 %v6515, %v6711
      %v6713 = vpop.f32.mrb[0].mxu0
      %v6714 = vpop.f32.mrb[0].mxu0
      %v6715 = vadd.f32 %v6518, %v6714
      %v6716 = vpop.f32.mrb[0].mxu0
      %6717 = vmatprep.mubr.bf16.mxu0 0
      %6718 = vmatmul.mubr.bf16.gmra.mrb[0].mxu0 %v4241
      %v6719 = vpop.f32.mrb[0].mxu0
      %v6720 = vadd.f32 %v6523, %v6719
      %v6721 = vpop.f32.mrb[0].mxu0
      %v6722 = vpop.f32.mrb[0].mxu0
      %v6723 = vadd.f32 %v6526, %v6722
      %v6724 = vpop.f32.mrb[0].mxu0
      %6725 = vmatprep.mubr.bf16.mxu0 0
      %6726 = vmatmul.mubr.bf16.gmra.mrb[0].mxu0 %v4308
      %v6727 = vpop.f32.mrb[0].mxu0
      %v6728 = vadd.f32 %v6531, %v6727
      %v6729 = vpop.f32.mrb[0].mxu0
      %v6730 = vpop.f32.mrb[0].mxu0
      %v6731 = vadd.f32 %v6534, %v6730
      %v6732 = vpop.f32.mrb[0].mxu0
      %6733 = vmatprep.mubr.bf16.mxu0 0
      %6734 = vmatmul.mubr.bf16.gmra.mrb[0].mxu0 %v4375
      %v6735 = vpop.f32.mrb[0].mxu0
      %v6736 = vadd.f32 %v6539, %v6735
      %v6737 = vpop.f32.mrb[0].mxu0
      %v6738 = vpop.f32.mrb[0].mxu0
      %v6739 = vadd.f32 %v6542, %v6738
      %v6740 = vpop.f32.mrb[0].mxu0
      %6741 = vmatprep.mubr.bf16.mxu0 0
      %6742 = vmatmul.mubr.bf16.gmra.mrb[0].mxu0 %v4442
      %v6743 = vpop.f32.mrb[0].mxu0
      %v6744 = vadd.f32 %v6547, %v6743
      %v6745 = vpop.f32.mrb[0].mxu0
      %v6746 = vpop.f32.mrb[0].mxu0
      %v6747 = vadd.f32 %v6550, %v6746
      %v6748 = vpop.f32.mrb[0].mxu0
      %6749 = vmatprep.mubr.bf16.mxu0 0
      %6750 = vmatmul.mubr.bf16.gmra.mrb[0].mxu0 %v4509
      %v6751 = vpop.f32.mrb[0].mxu0
      %v6752 = vadd.f32 %v6555, %v6751
      %v6753 = vpop.f32.mrb[0].mxu0
      %v6754 = vpop.f32.mrb[0].mxu0
      %v6755 = vadd.f32 %v6558, %v6754
      %v6756 = vpop.f32.mrb[0].mxu0
      %6757 = vmatprep.mubr.bf16.mxu0 0
      %6758 = vmatmul.mubr.bf16.gmra.mrb[0].mxu0 %v4576
      %v6759 = vpop.f32.mrb[0].mxu0
      %v6760 = vadd.f32 %v6563, %v6759
      %v6761 = vpop.f32.mrb[0].mxu0
      %v6762 = vpop.f32.mrb[0].mxu0
      %v6763 = vadd.f32 %v6566, %v6762
      %v6764 = vpop.f32.mrb[0].mxu0
      %6765 = vmatprep.mubr.bf16.mxu0 0
      %6766 = vmatmul.mubr.bf16.gmra.mrb[0].mxu0 %v4643
      %v6767 = vpop.f32.mrb[0].mxu0
      %v6768 = vadd.f32 %v6571, %v6767
      %v6769 = vpop.f32.mrb[0].mxu0
      %v6770 = vpop.f32.mrb[0].mxu0
      %v6771 = vadd.f32 %v6574, %v6770
      %v6772 = vpop.f32.mrb[0].mxu0
      %6773 = vmatprep.mubr.bf16.mxu0 0
      %6774 = vmatmul.mubr.bf16.gmra.mrb[0].mxu0 %v4710
      %v6775 = vpop.f32.mrb[0].mxu0
      %v6776 = vadd.f32 %v6579, %v6775
      %v6777 = vpop.f32.mrb[0].mxu0
      %v6778 = vpop.f32.mrb[0].mxu0
      %v6779 = vadd.f32 %v6582, %v6778
      %v6780 = vpop.f32.mrb[0].mxu0
      %6781 = vmatprep.mubr.bf16.mxu0 0
      %6782 = vmatmul.mubr.bf16.gmra.mrb[0].mxu0 %v4777
      %v6783 = vpop.f32.mrb[0].mxu0
      %v6784 = vadd.f32 %v6587, %v6783
      %v6785 = vpop.f32.mrb[0].mxu0
      %v6786 = vpop.f32.mrb[0].mxu0
      %v6787 = vadd.f32 %v6590, %v6786
      %v6788 = vpop.f32.mrb[0].mxu0
      %6789 = vmatprep.mubr.bf16.mxu0 0
      %6790 = vmatmul.mubr.bf16.gmra.mrb[0].mxu0 %v4844
      %v6791 = vpop.f32.mrb[0].mxu0
      %v6792 = vadd.f32 %v6595, %v6791
      %v6793 = vpop.f32.mrb[0].mxu0
      %v6794 = vpop.f32.mrb[0].mxu0
      %v6795 = vadd.f32 %v6598, %v6794
      %v6796 = vpop.f32.mrb[0].mxu0
      %6797 = vmatprep.mubr.bf16.mxu0 0
      %6798 = vmatmul.mubr.bf16.gmra.mrb[0].mxu0 %v4911
      %v6799 = vpop.f32.mrb[0].mxu0
      %v6800 = vadd.f32 %v6603, %v6799
      %v6801 = vpop.f32.mrb[0].mxu0
      %v6802 = vpop.f32.mrb[0].mxu0
      %v6803 = vadd.f32 %v6606, %v6802
      %v6804 = vpop.f32.mrb[0].mxu0
      %6805 = vmatprep.mubr.bf16.mxu0 0
      %6806 = vmatmul.mubr.bf16.gmra.mrb[0].mxu0 %v4978
      %v6807 = vpop.f32.mrb[0].mxu0
      %v6808 = vadd.f32 %v6611, %v6807
      %v6809 = vpop.f32.mrb[0].mxu0
      %v6810 = vpop.f32.mrb[0].mxu0
      %v6811 = vadd.f32 %v6614, %v6810
      %v6812 = vpop.f32.mrb[0].mxu0
      %6813 = vmatprep.mubr.bf16.mxu0 0
      %6814 = vmatmul.mubr.bf16.gmra.mrb[0].mxu0 %v5045
      %v6815 = vpop.f32.mrb[0].mxu0
      %v6816 = vadd.f32 %v6619, %v6815
      %v6817 = vpop.f32.mrb[0].mxu0
      %v6818 = vpop.f32.mrb[0].mxu0
      %v6819 = vadd.f32 %v6622, %v6818
      %v6820 = vpop.f32.mrb[0].mxu0
      %6821 = vmatprep.mubr.bf16.mxu0 0
      %6822 = vmatmul.mubr.bf16.gmra.mrb[0].mxu0 %v5112
      %v6823 = vpop.f32.mrb[0].mxu0
      %v6824 = vadd.f32 %v6627, %v6823
      %v6825 = vpop.f32.mrb[0].mxu0
      %v6826 = vpop.f32.mrb[0].mxu0
      %v6827 = vadd.f32 %v6630, %v6826
      %v6828 = vpop.f32.mrb[0].mxu0
      %6829 = vmatprep.mubr.bf16.mxu0 0
      %6830 = vmatmul.mubr.bf16.gmra.mrb[0].mxu0 %v5179
      %v6831 = vpop.f32.mrb[0].mxu0
      %v6832 = vadd.f32 %v6635, %v6831
      %v6833 = vpop.f32.mrb[0].mxu0
      %v6834 = vpop.f32.mrb[0].mxu0
      %v6835 = vadd.f32 %v6638, %v6834
      %v6836 = vpop.f32.mrb[0].mxu0
      %6837 = vmatprep.mubr.bf16.mxu0 0
      %6838 = vmatmul.mubr.bf16.gmra.mrb[0].mxu0 %v5255
      %v6839 = vpop.f32.mrb[0].mxu0
      %v6840 = vpop.f32.mrb[0].mxu0
      %v6841 = vpop.f32.mrb[0].mxu0
      %v6842 = vpop.f32.mrb[0].mxu0
      %6843 = vdwg.mxu0
      %v6844 = vld [vmem:[%s3 + $0x2] sm:$0x1]
      %v6845 = vlaneseq
      %v6846 = vshrl.u32 %v6845, 7
      %v6847 = vsub.s32 0, %v6846
      %v6848 = vrot.slane %v6844, %v6847
      %v6849 = vmul.f32 %v6688, %v6848
      %v6850 = vmul.f32 %v6691, %v6848
      %v6851 = vmul.f32 %v6696, %v6848
      %v6852 = vmul.f32 %v6699, %v6848
      %v6853 = vmul.f32 %v6704, %v6848
      %v6854 = vmul.f32 %v6707, %v6848
      %v6855 = vmul.f32 %v6712, %v6848
      %v6856 = vmul.f32 %v6715, %v6848
      %v6857 = vmul.f32 %v6720, %v6848
      %v6858 = vmul.f32 %v6723, %v6848
      %v6859 = vmul.f32 %v6728, %v6848
      %v6860 = vmul.f32 %v6731, %v6848
      %v6861 = vmul.f32 %v6736, %v6848
      %v6862 = vmul.f32 %v6739, %v6848
      %v6863 = vmul.f32 %v6744, %v6848
      %v6864 = vmul.f32 %v6747, %v6848
      %v6865 = vmul.f32 %v6752, %v6848
      %v6866 = vmul.f32 %v6755, %v6848
      %v6867 = vmul.f32 %v6760, %v6848
      %v6868 = vmul.f32 %v6763, %v6848
      %v6869 = vmul.f32 %v6768, %v6848
      %v6870 = vmul.f32 %v6771, %v6848
      %v6871 = vmul.f32 %v6776, %v6848
      %v6872 = vmul.f32 %v6779, %v6848
      %v6873 = vmul.f32 %v6784, %v6848
      %v6874 = vmul.f32 %v6787, %v6848
      %v6875 = vmul.f32 %v6792, %v6848
      %v6876 = vmul.f32 %v6795, %v6848
      %v6877 = vmul.f32 %v6800, %v6848
      %v6878 = vmul.f32 %v6803, %v6848
      %v6879 = vmul.f32 %v6808, %v6848
      %v6880 = vmul.f32 %v6811, %v6848
      %v6881 = vmul.f32 %v6816, %v6848
      %v6882 = vmul.f32 %v6819, %v6848
      %v6883 = vmul.f32 %v6824, %v6848
      %v6884 = vmul.f32 %v6827, %v6848
      %v6885 = vmul.f32 %v6832, %v6848
      %v6886 = vmul.f32 %v6835, %v6848
      %v6887 = vld [vmem:[%s3 + $0x3] sm:$0x1]
      %v6888 = vlaneseq
      %v6889 = vshrl.u32 %v6888, 7
      %v6890 = vsub.s32 0, %v6889
      %v6891 = vrot.slane %v6887, %v6890
      %v6892 = vadd.f32 %v6849, %v6891
      %v6893 = vadd.f32 %v6850, %v6891
      %v6894 = vadd.f32 %v6851, %v6891
      %v6895 = vadd.f32 %v6852, %v6891
      %v6896 = vadd.f32 %v6853, %v6891
      %v6897 = vadd.f32 %v6854, %v6891
      %v6898 = vadd.f32 %v6855, %v6891
      %v6899 = vadd.f32 %v6856, %v6891
      %v6900 = vadd.f32 %v6857, %v6891
      %v6901 = vadd.f32 %v6858, %v6891
      %v6902 = vadd.f32 %v6859, %v6891
      %v6903 = vadd.f32 %v6860, %v6891
      %v6904 = vadd.f32 %v6861, %v6891
      %v6905 = vadd.f32 %v6862, %v6891
      %v6906 = vadd.f32 %v6863, %v6891
      %v6907 = vadd.f32 %v6864, %v6891
      %v6908 = vadd.f32 %v6865, %v6891
      %v6909 = vadd.f32 %v6866, %v6891
      %v6910 = vadd.f32 %v6867, %v6891
      %v6911 = vadd.f32 %v6868, %v6891
      %v6912 = vadd.f32 %v6869, %v6891
      %v6913 = vadd.f32 %v6870, %v6891
      %v6914 = vadd.f32 %v6871, %v6891
      %v6915 = vadd.f32 %v6872, %v6891
      %v6916 = vadd.f32 %v6873, %v6891
      %v6917 = vadd.f32 %v6874, %v6891
      %v6918 = vadd.f32 %v6875, %v6891
      %v6919 = vadd.f32 %v6876, %v6891
      %v6920 = vadd.f32 %v6877, %v6891
      %v6921 = vadd.f32 %v6878, %v6891
      %v6922 = vadd.f32 %v6879, %v6891
      %v6923 = vadd.f32 %v6880, %v6891
      %v6924 = vadd.f32 %v6881, %v6891
      %v6925 = vadd.f32 %v6882, %v6891
      %v6926 = vadd.f32 %v6883, %v6891
      %v6927 = vadd.f32 %v6884, %v6891
      %v6928 = vadd.f32 %v6885, %v6891
      %v6929 = vadd.f32 %v6886, %v6891
      %v6930 = vadd.f32 %v6892, %v2790
      %v6931 = vadd.f32 %v6893, %v2791
      %v6932 = vadd.f32 %v6894, %v2792
      %v6933 = vadd.f32 %v6895, %v2793
      %v6934 = vadd.f32 %v6896, %v2794
      %v6935 = vadd.f32 %v6897, %v2795
      %v6936 = vadd.f32 %v6898, %v2796
      %v6937 = vadd.f32 %v6899, %v2797
      %v6938 = vadd.f32 %v6900, %v2798
      %v6939 = vadd.f32 %v6901, %v2799
      %v6940 = vadd.f32 %v6902, %v2800
      %v6941 = vadd.f32 %v6903, %v2801
      %v6942 = vadd.f32 %v6904, %v2802
      %v6943 = vadd.f32 %v6905, %v2803
      %v6944 = vadd.f32 %v6906, %v2804
      %v6945 = vadd.f32 %v6907, %v2805
      %v6946 = vadd.f32 %v6908, %v2806
      %v6947 = vadd.f32 %v6909, %v2807
      %v6948 = vadd.f32 %v6910, %v2808
      %v6949 = vadd.f32 %v6911, %v2809
      %v6950 = vadd.f32 %v6912, %v2810
      %v6951 = vadd.f32 %v6913, %v2811
      %v6952 = vadd.f32 %v6914, %v2812
      %v6953 = vadd.f32 %v6915, %v2813
      %v6954 = vadd.f32 %v6916, %v2814
      %v6955 = vadd.f32 %v6917, %v2815
      %v6956 = vadd.f32 %v6918, %v2816
      %v6957 = vadd.f32 %v6919, %v2817
      %v6958 = vadd.f32 %v6920, %v2818
      %v6959 = vadd.f32 %v6921, %v2819
      %v6960 = vadd.f32 %v6922, %v2820
      %v6961 = vadd.f32 %v6923, %v2821
      %v6962 = vadd.f32 %v6924, %v2822
      %v6963 = vadd.f32 %v6925, %v2823
      %v6964 = vadd.f32 %v6926, %v2824
      %v6965 = vadd.f32 %v6927, %v2825
      %v6966 = vadd.f32 %v6928, %v2826
      %v6967 = vadd.f32 %v6929, %v2827
      %v6968 = vmax.f32 %v6930, 0.0
      %v6969 = vmax.f32 %v6931, 0.0
      %v6970 = vmax.f32 %v6932, 0.0
      %v6971 = vmax.f32 %v6933, 0.0
      %v6972 = vmax.f32 %v6934, 0.0
      %v6973 = vmax.f32 %v6935, 0.0
      %v6974 = vmax.f32 %v6936, 0.0
      %v6975 = vmax.f32 %v6937, 0.0
      %v6976 = vmax.f32 %v6938, 0.0
      %v6977 = vmax.f32 %v6939, 0.0
      %v6978 = vmax.f32 %v6940, 0.0
      %v6979 = vmax.f32 %v6941, 0.0
      %v6980 = vmax.f32 %v6942, 0.0
      %v6981 = vmax.f32 %v6943, 0.0
      %v6982 = vmax.f32 %v6944, 0.0
      %v6983 = vmax.f32 %v6945, 0.0
      %v6984 = vmax.f32 %v6946, 0.0
      %v6985 = vmax.f32 %v6947, 0.0
      %v6986 = vmax.f32 %v6948, 0.0
      %v6987 = vmax.f32 %v6949, 0.0
      %v6988 = vmax.f32 %v6950, 0.0
      %v6989 = vmax.f32 %v6951, 0.0
      %v6990 = vmax.f32 %v6952, 0.0
      %v6991 = vmax.f32 %v6953, 0.0
      %v6992 = vmax.f32 %v6954, 0.0
      %v6993 = vmax.f32 %v6955, 0.0
      %v6994 = vmax.f32 %v6956, 0.0
      %v6995 = vmax.f32 %v6957, 0.0
      %v6996 = vmax.f32 %v6958, 0.0
      %v6997 = vmax.f32 %v6959, 0.0
      %v6998 = vmax.f32 %v6960, 0.0
      %v6999 = vmax.f32 %v6961, 0.0
      %v7000 = vmax.f32 %v6962, 0.0
      %v7001 = vmax.f32 %v6963, 0.0
      %v7002 = vmax.f32 %v6964, 0.0
      %v7003 = vmax.f32 %v6965, 0.0
      %v7004 = vmax.f32 %v6966, 0.0
      %v7005 = vmax.f32 %v6967, 0.0
      %v7006 = vpack.c.bf16 %v6969, %v6968
      %v7007 = vpack.c.bf16 %v6971, %v6970
      %v7008 = vpack.c.bf16 %v6973, %v6972
      %v7009 = vpack.c.bf16 %v6975, %v6974
      %v7010 = vpack.c.bf16 %v6977, %v6976
      %v7011 = vpack.c.bf16 %v6979, %v6978
      %v7012 = vpack.c.bf16 %v6981, %v6980
      %v7013 = vpack.c.bf16 %v6983, %v6982
      %v7014 = vpack.c.bf16 %v6985, %v6984
      %v7015 = vpack.c.bf16 %v6987, %v6986
      %v7016 = vpack.c.bf16 %v6989, %v6988
      %v7017 = vpack.c.bf16 %v6991, %v6990
      %v7018 = vpack.c.bf16 %v6993, %v6992
      %v7019 = vpack.c.bf16 %v6995, %v6994
      %v7020 = vpack.c.bf16 %v6997, %v6996
      %v7021 = vpack.c.bf16 %v6999, %v6998
      %v7022 = vpack.c.bf16 %v7001, %v7000
      %v7023 = vpack.c.bf16 %v7003, %v7002
      %v7024 = vpack.c.bf16 %v7005, %v7004
      %v7027 = vunpack.c.l.b16 %v7006
      %v7028 = vunpack.c.h.b16 %v7006
      %v7029 = vunpack.c.l.b16 %v7007
      %v7030 = vpack.c.b16 %v7027, %v7027
      %v7031 = vpack.c.b16 %v7028, %v7028
      %v7032 = vpack.c.b16 %v7029, %v7029
      %vm7033 = vsmask.f32 6416
      %vm7034 = vmor %vm814, %vm7033
      %v7036 = vshrl.u32 %v7030, 16
      %v7038 = vrot.slane %v7036, 5
      %v7039 = vshll.u32 %v7030, 16
      %v7041 = vrot.slane %v7039, 6
      %v7042 = vor.u32 %v7038, %v7041
      %v7043 = vrot.slane %v7042, 4
      %v7045 = vshrl.u32 %v7031, 16
      %v7047 = vrot.slane %v7045, 5
      %v7048 = vshll.u32 %v7031, 16
      %v7050 = vrot.slane %v7048, 6
      %v7051 = vor.u32 %v7047, %v7050
      %v7052 = vsel %vm7034, %v7043, %v7051
      %v7053 = vrot.slane %v7051, 4
      %v7055 = vshrl.u32 %v7032, 16
      %v7057 = vrot.slane %v7055, 5
      %v7058 = vshll.u32 %v7032, 16
      %v7060 = vrot.slane %v7058, 6
      %v7061 = vor.u32 %v7057, %v7060
      %v7062 = vsel %vm7034, %v7053, %v7061
      %7065 = vst [vmem:[%s226] sm:$0xf] %v7052
      %7066 = vst [vmem:[%s226 + $0x4] sm:$0xf] %v7062
      %v7068 = vunpack.c.h.b16 %v7007
      %v7069 = vunpack.c.l.b16 %v7008
      %v7070 = vpack.c.b16 %v7068, %v7068
      %v7071 = vpack.c.b16 %v7069, %v7069
      %vm7072 = vsmask.f32 5392
      %vm7073 = vmor %vm1197, %vm7072
      %v7074 = vrot.slane %v7055, 6
      %v7075 = vrot.slane %v7058, 7
      %v7076 = vor.u32 %v7074, %v7075
      %v7077 = vrot.slane %v7076, 4
      %v7079 = vshrl.u32 %v7070, 16
      %v7081 = vrot.slane %v7079, 6
      %v7082 = vshll.u32 %v7070, 16
      %v7084 = vrot.slane %v7082, 7
      %v7085 = vor.u32 %v7081, %v7084
      %v7086 = vsel %vm7073, %v7077, %v7085
      %v7087 = vrot.slane %v7085, 4
      %v7089 = vshrl.u32 %v7071, 16
      %v7091 = vrot.slane %v7089, 6
      %v7092 = vshll.u32 %v7071, 16
      %v7094 = vrot.slane %v7092, 7
      %v7095 = vor.u32 %v7091, %v7094
      %v7096 = vsel %vm7073, %v7087, %v7095
      %7099 = vst [vmem:[%s226 + $0x8] sm:$0xf] %v7086
      %7100 = vst [vmem:[%s226 + $0xc] sm:$0xf] %v7096
      %v7102 = vunpack.c.h.b16 %v7008
      %v7103 = vunpack.c.l.b16 %v7009
      %v7104 = vpack.c.b16 %v7102, %v7102
      %v7105 = vpack.c.b16 %v7103, %v7103
      %vm7106 = vsmask.f32 256
      %vm7107 = vsmask.f32 4368
      %vm7108 = vmor %vm7106, %vm7107
      %v7109 = vrot.slane %v7089, 7
      %v7110 = vrot.slane %v7109, 4
      %v7112 = vshrl.u32 %v7104, 16
      %v7114 = vrot.slane %v7112, 7
      %v7115 = vshll.u32 %v7104, 16
      %v7117 = vor.u32 %v7114, %v7115
      %v7118 = vsel %vm7108, %v7110, %v7117
      %v7119 = vrot.slane %v7114, 4
      %v7121 = vshrl.u32 %v7105, 16
      %v7123 = vrot.slane %v7121, 7
      %v7124 = vshll.u32 %v7105, 16
      %v7126 = vor.u32 %v7123, %v7124
      %v7127 = vsel %vm7108, %v7119, %v7126
      %7130 = vst [vmem:[%s226 + $0x10] sm:$0xf] %v7118
      %7131 = vst [vmem:[%s226 + $0x14] sm:$0xf] %v7127
      %v7133 = vunpack.c.h.b16 %v7009
      %v7134 = vunpack.c.l.b16 %v7010
      %v7135 = vunpack.c.h.b16 %v7010
      %v7136 = vpack.c.b16 %v7133, %v7133
      %v7137 = vpack.c.b16 %v7134, %v7134
      %v7138 = vpack.c.b16 %v7135, %v7135
      %vm7139 = vsmask.f32 3328
      %vm7140 = vsmask.f32 7440
      %vm7141 = vmor %vm7139, %vm7140
      %v7143 = vshrl.u32 %v7136, 16
      %v7145 = vrot.slane %v7143, 4
      %v7146 = vshll.u32 %v7136, 16
      %v7148 = vrot.slane %v7146, 5
      %v7149 = vor.u32 %v7145, %v7148
      %v7150 = vrot.slane %v7149, 4
      %v7152 = vshll.u32 %v7137, 16
      %v7154 = vrot.slane %v7152, 5
      %v7155 = vsel %vm7141, %v7150, %v7154
      %v7156 = vshrl.u32 %v7137, 16
      %v7158 = vrot.slane %v7156, 4
      %v7159 = vor.u32 %v7158, %v7154
      %v7160 = vrot.slane %v7159, 4
      %v7162 = vshll.u32 %v7138, 16
      %v7164 = vrot.slane %v7162, 5
      %v7165 = vsel %vm7141, %v7160, %v7164
      %7168 = vst [vmem:[%s226 + $0x18] sm:$0xf] %v7155
      %7169 = vst [vmem:[%s226 + $0x1c] sm:$0xf] %v7165
      %v7171 = vunpack.c.l.b16 %v7011
      %v7172 = vunpack.c.h.b16 %v7011
      %v7173 = vpack.c.b16 %v7171, %v7171
      %v7174 = vpack.c.b16 %v7172, %v7172
      %v7175 = vshrl.u32 %v7138, 16
      %v7177 = vrot.slane %v7175, 5
      %v7178 = vrot.slane %v7162, 6
      %v7179 = vor.u32 %v7177, %v7178
      %v7180 = vrot.slane %v7179, 4
      %v7182 = vshrl.u32 %v7173, 16
      %v7184 = vrot.slane %v7182, 5
      %v7185 = vshll.u32 %v7173, 16
      %v7187 = vrot.slane %v7185, 6
      %v7188 = vor.u32 %v7184, %v7187
      %v7189 = vsel %vm7034, %v7180, %v7188
      %v7190 = vrot.slane %v7188, 4
      %v7192 = vshrl.u32 %v7174, 16
      %v7194 = vrot.slane %v7192, 5
      %v7195 = vshll.u32 %v7174, 16
      %v7197 = vrot.slane %v7195, 6
      %v7198 = vor.u32 %v7194, %v7197
      %v7199 = vsel %vm7034, %v7190, %v7198
      %7202 = vst [vmem:[%s226 + $0x20] sm:$0xf] %v7189
      %7203 = vst [vmem:[%s226 + $0x24] sm:$0xf] %v7199
      %v7205 = vunpack.c.l.b16 %v7012
      %v7206 = vunpack.c.h.b16 %v7012
      %v7207 = vpack.c.b16 %v7205, %v7205
      %v7208 = vpack.c.b16 %v7206, %v7206
      %v7209 = vrot.slane %v7192, 6
      %v7210 = vrot.slane %v7195, 7
      %v7211 = vor.u32 %v7209, %v7210
      %v7212 = vrot.slane %v7211, 4
      %v7214 = vshrl.u32 %v7207, 16
      %v7216 = vrot.slane %v7214, 6
      %v7217 = vshll.u32 %v7207, 16
      %v7219 = vrot.slane %v7217, 7
      %v7220 = vor.u32 %v7216, %v7219
      %v7221 = vsel %vm7073, %v7212, %v7220
      %v7222 = vrot.slane %v7220, 4
      %v7224 = vshrl.u32 %v7208, 16
      %v7226 = vrot.slane %v7224, 6
      %v7227 = vshll.u32 %v7208, 16
      %v7229 = vrot.slane %v7227, 7
      %v7230 = vor.u32 %v7226, %v7229
      %v7231 = vsel %vm7073, %v7222, %v7230
      %7234 = vst [vmem:[%s226 + $0x28] sm:$0xf] %v7221
      %7235 = vst [vmem:[%s226 + $0x2c] sm:$0xf] %v7231
      %v7237 = vunpack.c.l.b16 %v7013
      %v7238 = vunpack.c.h.b16 %v7013
      %v7239 = vpack.c.b16 %v7237, %v7237
      %v7240 = vpack.c.b16 %v7238, %v7238
      %v7241 = vrot.slane %v7224, 7
      %v7242 = vrot.slane %v7241, 4
      %v7244 = vshrl.u32 %v7239, 16
      %v7246 = vrot.slane %v7244, 7
      %v7247 = vshll.u32 %v7239, 16
      %v7249 = vor.u32 %v7246, %v7247
      %v7250 = vsel %vm7108, %v7242, %v7249
      %v7251 = vrot.slane %v7246, 4
      %v7253 = vshrl.u32 %v7240, 16
      %v7255 = vrot.slane %v7253, 7
      %v7256 = vshll.u32 %v7240, 16
      %v7258 = vor.u32 %v7255, %v7256
      %v7259 = vsel %vm7108, %v7251, %v7258
      %7262 = vst [vmem:[%s226 + $0x30] sm:$0xf] %v7250
      %7263 = vst [vmem:[%s226 + $0x34] sm:$0xf] %v7259
      %v7266 = vunpack.c.l.b16 %v7014
      %v7267 = vunpack.c.h.b16 %v7014
      %v7268 = vunpack.c.l.b16 %v7015
      %v7269 = vpack.c.b16 %v7266, %v7266
      %v7270 = vpack.c.b16 %v7267, %v7267
      %v7271 = vpack.c.b16 %v7268, %v7268
      %v7273 = vshrl.u32 %v7269, 16
      %v7275 = vrot.slane %v7273, 4
      %v7276 = vshll.u32 %v7269, 16
      %v7278 = vrot.slane %v7276, 5
      %v7279 = vor.u32 %v7275, %v7278
      %v7280 = vrot.slane %v7279, 4
      %v7282 = vshll.u32 %v7270, 16
      %v7284 = vrot.slane %v7282, 5
      %v7285 = vsel %vm7141, %v7280, %v7284
      %v7286 = vshrl.u32 %v7270, 16
      %v7288 = vrot.slane %v7286, 4
      %v7289 = vor.u32 %v7288, %v7284
      %v7290 = vrot.slane %v7289, 4
      %v7292 = vshll.u32 %v7271, 16
      %v7294 = vrot.slane %v7292, 5
      %v7295 = vsel %vm7141, %v7290, %v7294
      %7298 = vst [vmem:[%s226 + $0x38] sm:$0xf] %v7285
      %7299 = vst [vmem:[%s226 + $0x3c] sm:$0xf] %v7295
      %v7301 = vunpack.c.h.b16 %v7015
      %v7302 = vunpack.c.l.b16 %v7016
      %v7303 = vpack.c.b16 %v7301, %v7301
      %v7304 = vpack.c.b16 %v7302, %v7302
      %v7305 = vshrl.u32 %v7271, 16
      %v7307 = vrot.slane %v7305, 5
      %v7308 = vrot.slane %v7292, 6
      %v7309 = vor.u32 %v7307, %v7308
      %v7310 = vrot.slane %v7309, 4
      %v7312 = vshrl.u32 %v7303, 16
      %v7314 = vrot.slane %v7312, 5
      %v7315 = vshll.u32 %v7303, 16
      %v7317 = vrot.slane %v7315, 6
      %v7318 = vor.u32 %v7314, %v7317
      %v7319 = vsel %vm7034, %v7310, %v7318
      %v7320 = vrot.slane %v7318, 4
      %v7322 = vshrl.u32 %v7304, 16
      %v7324 = vrot.slane %v7322, 5
      %v7325 = vshll.u32 %v7304, 16
      %v7327 = vrot.slane %v7325, 6
      %v7328 = vor.u32 %v7324, %v7327
      %v7329 = vsel %vm7034, %v7320, %v7328
      %7332 = vst [vmem:[%s226 + $0x40] sm:$0xf] %v7319
      %7333 = vst [vmem:[%s226 + $0x44] sm:$0xf] %v7329
      %v7335 = vunpack.c.h.b16 %v7016
      %v7336 = vunpack.c.l.b16 %v7017
      %v7337 = vpack.c.b16 %v7335, %v7335
      %v7338 = vpack.c.b16 %v7336, %v7336
      %v7339 = vrot.slane %v7322, 6
      %v7340 = vrot.slane %v7325, 7
      %v7341 = vor.u32 %v7339, %v7340
      %v7342 = vrot.slane %v7341, 4
      %v7344 = vshrl.u32 %v7337, 16
      %v7346 = vrot.slane %v7344, 6
      %v7347 = vshll.u32 %v7337, 16
      %v7349 = vrot.slane %v7347, 7
      %v7350 = vor.u32 %v7346, %v7349
      %v7351 = vsel %vm7073, %v7342, %v7350
      %v7352 = vrot.slane %v7350, 4
      %v7354 = vshrl.u32 %v7338, 16
      %v7356 = vrot.slane %v7354, 6
      %v7357 = vshll.u32 %v7338, 16
      %v7359 = vrot.slane %v7357, 7
      %v7360 = vor.u32 %v7356, %v7359
      %v7361 = vsel %vm7073, %v7352, %v7360
      %7364 = vst [vmem:[%s226 + $0x48] sm:$0xf] %v7351
      %7365 = vst [vmem:[%s226 + $0x4c] sm:$0xf] %v7361
      %v7367 = vunpack.c.h.b16 %v7017
      %v7368 = vunpack.c.l.b16 %v7018
      %v7369 = vpack.c.b16 %v7367, %v7367
      %v7370 = vpack.c.b16 %v7368, %v7368
      %v7371 = vrot.slane %v7354, 7
      %v7372 = vrot.slane %v7371, 4
      %v7374 = vshrl.u32 %v7369, 16
      %v7376 = vrot.slane %v7374, 7
      %v7377 = vshll.u32 %v7369, 16
      %v7379 = vor.u32 %v7376, %v7377
      %v7380 = vsel %vm7108, %v7372, %v7379
      %v7381 = vrot.slane %v7376, 4
      %v7383 = vshrl.u32 %v7370, 16
      %v7385 = vrot.slane %v7383, 7
      %v7386 = vshll.u32 %v7370, 16
      %v7388 = vor.u32 %v7385, %v7386
      %v7389 = vsel %vm7108, %v7381, %v7388
      %7392 = vst [vmem:[%s226 + $0x50] sm:$0xf] %v7380
      %7393 = vst [vmem:[%s226 + $0x54] sm:$0xf] %v7389
      %v7395 = vunpack.c.h.b16 %v7018
      %v7396 = vunpack.c.l.b16 %v7019
      %v7397 = vunpack.c.h.b16 %v7019
      %v7398 = vpack.c.b16 %v7395, %v7395
      %v7399 = vpack.c.b16 %v7396, %v7396
      %v7400 = vpack.c.b16 %v7397, %v7397
      %v7402 = vshrl.u32 %v7398, 16
      %v7404 = vrot.slane %v7402, 4
      %v7405 = vshll.u32 %v7398, 16
      %v7407 = vrot.slane %v7405, 5
      %v7408 = vor.u32 %v7404, %v7407
      %v7409 = vrot.slane %v7408, 4
      %v7411 = vshll.u32 %v7399, 16
      %v7413 = vrot.slane %v7411, 5
      %v7414 = vsel %vm7141, %v7409, %v7413
      %v7415 = vshrl.u32 %v7399, 16
      %v7417 = vrot.slane %v7415, 4
      %v7418 = vor.u32 %v7417, %v7413
      %v7419 = vrot.slane %v7418, 4
      %v7421 = vshll.u32 %v7400, 16
      %v7423 = vrot.slane %v7421, 5
      %v7424 = vsel %vm7141, %v7419, %v7423
      %7427 = vst [vmem:[%s226 + $0x58] sm:$0xf] %v7414
      %7428 = vst [vmem:[%s226 + $0x5c] sm:$0xf] %v7424
      %v7430 = vunpack.c.l.b16 %v7020
      %v7431 = vunpack.c.h.b16 %v7020
      %v7432 = vpack.c.b16 %v7430, %v7430
      %v7433 = vpack.c.b16 %v7431, %v7431
      %v7434 = vshrl.u32 %v7400, 16
      %v7436 = vrot.slane %v7434, 5
      %v7437 = vrot.slane %v7421, 6
      %v7438 = vor.u32 %v7436, %v7437
      %v7439 = vrot.slane %v7438, 4
      %v7441 = vshrl.u32 %v7432, 16
      %v7443 = vrot.slane %v7441, 5
      %v7444 = vshll.u32 %v7432, 16
      %v7446 = vrot.slane %v7444, 6
      %v7447 = vor.u32 %v7443, %v7446
      %v7448 = vsel %vm7034, %v7439, %v7447
      %v7449 = vrot.slane %v7447, 4
      %v7451 = vshrl.u32 %v7433, 16
      %v7453 = vrot.slane %v7451, 5
      %v7454 = vshll.u32 %v7433, 16
      %v7456 = vrot.slane %v7454, 6
      %v7457 = vor.u32 %v7453, %v7456
      %v7458 = vsel %vm7034, %v7449, %v7457
      %7461 = vst [vmem:[%s226 + $0x60] sm:$0xf] %v7448
      %7462 = vst [vmem:[%s226 + $0x64] sm:$0xf] %v7458
      %v7464 = vunpack.c.l.b16 %v7021
      %v7465 = vunpack.c.h.b16 %v7021
      %v7466 = vpack.c.b16 %v7464, %v7464
      %v7467 = vpack.c.b16 %v7465, %v7465
      %v7468 = vrot.slane %v7451, 6
      %v7469 = vrot.slane %v7454, 7
      %v7470 = vor.u32 %v7468, %v7469
      %v7471 = vrot.slane %v7470, 4
      %v7473 = vshrl.u32 %v7466, 16
      %v7475 = vrot.slane %v7473, 6
      %v7476 = vshll.u32 %v7466, 16
      %v7478 = vrot.slane %v7476, 7
      %v7479 = vor.u32 %v7475, %v7478
      %v7480 = vsel %vm7073, %v7471, %v7479
      %v7481 = vrot.slane %v7479, 4
      %v7483 = vshrl.u32 %v7467, 16
      %v7485 = vrot.slane %v7483, 6
      %v7486 = vshll.u32 %v7467, 16
      %v7488 = vrot.slane %v7486, 7
      %v7489 = vor.u32 %v7485, %v7488
      %v7490 = vsel %vm7073, %v7481, %v7489
      %7493 = vst [vmem:[%s226 + $0x68] sm:$0xf] %v7480
      %7494 = vst [vmem:[%s226 + $0x6c] sm:$0xf] %v7490
      %v7496 = vunpack.c.l.b16 %v7022
      %v7497 = vunpack.c.h.b16 %v7022
      %v7498 = vpack.c.b16 %v7496, %v7496
      %v7499 = vpack.c.b16 %v7497, %v7497
      %v7500 = vrot.slane %v7483, 7
      %v7501 = vrot.slane %v7500, 4
      %v7503 = vshrl.u32 %v7498, 16
      %v7505 = vrot.slane %v7503, 7
      %v7506 = vshll.u32 %v7498, 16
      %v7508 = vor.u32 %v7505, %v7506
      %v7509 = vsel %vm7108, %v7501, %v7508
      %v7510 = vrot.slane %v7505, 4
      %v7512 = vshrl.u32 %v7499, 16
      %v7514 = vrot.slane %v7512, 7
      %v7515 = vshll.u32 %v7499, 16
      %v7517 = vor.u32 %v7514, %v7515
      %v7518 = vsel %vm7108, %v7510, %v7517
      %7521 = vst [vmem:[%s226 + $0x70] sm:$0xf] %v7509
      %7522 = vst [vmem:[%s226 + $0x74] sm:$0xf] %v7518
      %v7525 = vunpack.c.l.b16 %v7023
      %v7526 = vunpack.c.h.b16 %v7023
      %v7527 = vunpack.c.l.b16 %v7024
      %v7528 = vpack.c.b16 %v7525, %v7525
      %v7529 = vpack.c.b16 %v7526, %v7526
      %v7530 = vpack.c.b16 %v7527, %v7527
      %v7532 = vshrl.u32 %v7528, 16
      %v7534 = vrot.slane %v7532, 4
      %v7535 = vshll.u32 %v7528, 16
      %v7537 = vrot.slane %v7535, 5
      %v7538 = vor.u32 %v7534, %v7537
      %v7539 = vrot.slane %v7538, 4
      %v7541 = vshll.u32 %v7529, 16
      %v7543 = vrot.slane %v7541, 5
      %v7544 = vsel %vm7141, %v7539, %v7543
      %v7545 = vshrl.u32 %v7529, 16
      %v7547 = vrot.slane %v7545, 4
      %v7548 = vor.u32 %v7547, %v7543
      %v7549 = vrot.slane %v7548, 4
      %v7551 = vshll.u32 %v7530, 16
      %v7553 = vrot.slane %v7551, 5
      %v7554 = vsel %vm7141, %v7549, %v7553
      %7557 = vst [vmem:[%s226 + $0x78] sm:$0xf] %v7544
      %7558 = vst [vmem:[%s226 + $0x7c] sm:$0xf] %v7554
      %s7559 = smul.u32 32, %s16
      %p7560 = scmp.lt.s32.totalorder %s7559, 63
      %s7561 = scalar_select %p7560, %s7559, 63
      %s7562 = smul.addr %s7561, 4
      %s7563 = scalar_lea.vmem %s5, %s7562
      // Predicated region
      $region45: #{building_block_forward.1} parent=39 // pred_check
        %p7564 = pneg %p144
      $region46: #{building_block_forward.1} parent=39 // pred_check_branch
        %7566 = sbr.rel (%p7564) target = $region48
      $region47: #{building_block_forward.1} parent=39 // pred_region
        %s7567 = smul.u32 32, %s16
      $region48: #{building_block_forward.1} parent=39 // pred_fallthru
        _
    $region40: #{building_block_forward.1} parent=5 // pred_fallthru
      _
    %p7568 = scmp.le.s32.totalorder 2, %s11
    // Predicated region
    $region49: #{building_block_forward.1} parent=5 // pred_check
      %p7569 = pneg %p7568
    $region50: #{building_block_forward.1} parent=5 // pred_check_branch
      %7571 = sbr.rel (%p7569) target = $region52
    $region51: #{building_block_forward.1} parent=5 // pred_region
      %s7572 = ssub.s32 %s11, 2
      // Predicated region
      $region53: #{building_block_forward.1} parent=51 // pred_check
        %p7573 = pneg %p150
      $region54: #{building_block_forward.1} parent=51 // pred_check_branch
        %7575 = sbr.rel (%p7573) target = $region56
      $region55: #{building_block_forward.1} parent=51 // pred_region
        %s7576 = smul.u32 32, %s17
        %p7577 = scmp.lt.s32.totalorder %s7576, 63
        %s7578 = scalar_select %p7577, %s7576, 63
        %s7579 = smul.addr %s7578, 4
        %s7580 = scalar_lea.vmem %s5, %s7579
      $region56: #{building_block_forward.1} parent=51 // pred_fallthru
        _
    $region52: #{building_block_forward.1} parent=5 // pred_fallthru
      _
  $region6: #{building_block_forward.1} parent=0 // loop_footer
    %s15 = sadd.s32 1, %s11
  $region7: #{building_block_forward.1} parent=0 // loop_footer_branch
    %10 = sbr.rel target = $region3
  $region8: #{building_block_forward.1} parent=0 // loop_exit
    _

</llo_original>
